<compile_context>
chip_gen: v5e
topology: v5e:2x2
jax: 0.10.0
libtpu: 0.0.40
codegen_flags: <defaults>
</compile_context>

<pallas_src>
import functools

import jax
import jax.numpy as jnp
import numpy as np
from jax import lax
from jax.experimental import pallas as pl
from jax.experimental.pallas import tpu as pltpu

BN_EPS = 1e-5


def _round_up(x, m):
    return (x + m - 1) // m * m


def _vmem_limit_bytes(per_step_bytes):
    """Generation-aware VMEM limit: generous, but well under the per-core cap."""
    cap = 64 * 1024 * 1024
    try:
        cap = int(pltpu.get_tpu_info().vmem_capacity_bytes)
    except Exception:
        pass
    want = max(32 * 1024 * 1024, 4 * int(per_step_bytes))
    return int(min(want, (3 * cap) // 4))


# ----------------------------- Pallas kernels ------------------------------


def _conv_stats_kernel(x_ref, w_ref, o_ref, sum_ref, ssq_ref, *,
                       k, s, cin, ho, wo, wop):
    """Direct conv for one image (in-VMEM im2col) + fused batch-stat partials.

    x_ref  : (s*s*cin, (hs+1)*wop) bf16  phase-decomposed, flattened, chan-major
    w_ref  : (k*k, cout, cin)      bf16  w_ref[ky*k+kx] = conv_w[:, :, ky, kx]
    o_ref  : (cout, ho, wo)        bf16  NCHW conv output tile (pad cols dropped)
    sum_ref/ssq_ref : (cout, 1)    f32   per-image per-channel stat partials
    """
    cout = w_ref.shape[1]
    m = ho * wop  # GEMM columns per image, incl. wop-wo wrap/pad columns

    acc = jnp.zeros((cout, m), jnp.float32)
    # k*k small GEMMs.  Because the input is phase-decomposed and row-flattened
    # with row width == wop, every (ky, kx) term is a *contiguous* 2-D slice:
    # no strided loads, no HBM patch matrix.
    for ky in range(k):
        ay, by = ky // s, ky % s
        for kx in range(k):
            ax, bx = kx // s, kx % s
            ph = by * s + bx
            slab = x_ref[pl.ds(ph * cin, cin), pl.ds(ay * wop + ax, m)]
            acc = acc + jnp.dot(w_ref[ky * k + kx], slab,
                                preferred_element_type=jnp.float32)

    # Per-output-row epilogue: drop the wop-wo wrap/pad columns (they hold
    # garbage and are excluded from the stats), store the NCHW tile in bf16 and
    # accumulate the per-channel partial sums / sums-of-squares in f32.
    ssum = jnp.zeros((cout, 1), jnp.float32)
    ssq = jnp.zeros((cout, 1), jnp.float32)
    for r in range(ho):
        piece = acc[:, r * wop: r * wop + wo]          # (cout, wo) f32
        o_ref[:, r, :] = piece.astype(o_ref.dtype)
        ssum = ssum + jnp.sum(piece, axis=1, keepdims=True)
        ssq = ssq + jnp.sum(piece * piece, axis=1, keepdims=True)
    sum_ref[...] = ssum
    ssq_ref[...] = ssq


def _bn_relu_kernel(y_ref, scale_ref, shift_ref, o_ref):
    """Elementwise BN apply (precomputed scale/shift) + ReLU; layout is NCHW."""
    y = y_ref[...].astype(jnp.float32)                 # (cout, ho, wo)
    out = y * scale_ref[...] + shift_ref[...]          # scale/shift: (cout, 1, 1)
    o_ref[...] = jnp.maximum(out, 0.0).astype(o_ref.dtype)


# ------------------------------ host wrapper --------------------------------


@functools.partial(jax.jit, static_argnames=("kernel_size", "stride",
                                             "compute_dtype"))
def cnn_block_forward(x_nchw, conv_w, bn_gamma, bn_beta, *, kernel_size,
                      stride=1, compute_dtype=jnp.bfloat16):
    """Conv2d(padding=k//2, bias dropped) -> BatchNorm2d(training) -> ReLU.

    Returns (N, Cout, Ho, Wo) float32.  The conv bias is mathematically
    cancelled by BatchNorm's mean subtraction, so it is intentionally omitted.
    """
    n, cin, h, w = x_nchw.shape
    cout = conv_w.shape[0]
    k, s = kernel_size, stride
    p = k // 2
    ho = (h + 2 * p - k) // s + 1
    wo = (w + 2 * p - k) // s + 1
    amax = (k - 1) // s                       # max in-phase spatial offset
    wop = _round_up(wo + amax, 8)             # flattened row width (halo incl.)
    hs = ho + amax                            # phase-grid rows with real data
    m = ho * wop                              # GEMM columns per image
    itemsize = jnp.dtype(compute_dtype).itemsize

    # ---- XLA prep: pad, phase-decompose (folds the stride away), flatten ----
    xb = x_nchw.astype(compute_dtype)
    hp, wp = s * hs, s * wop
    h_keep, w_keep = min(h, hp - p), min(w, wp - p)
    x_pad = jnp.zeros((n, cin, hp, wp), compute_dtype)
    x_pad = x_pad.at[:, :, p:p + h_keep, p:p + w_keep].set(
        xb[:, :, :h_keep, :w_keep])
    if s == 1:
        xph = x_pad                                       # (n, cin, hs, wop)
    else:
        # xph[n, (by*s+bx)*cin + c, hh, ww] = x_pad[n, c, s*hh+by, s*ww+bx]
        xph = x_pad.reshape(n, cin, hs, s, wop, s)
        xph = xph.transpose(0, 3, 5, 1, 2, 4).reshape(n, s * s * cin, hs, wop)
    xph = jnp.pad(xph, ((0, 0), (0, 0), (0, 1), (0, 0)))  # wrap-guard zero row
    xflat = xph.reshape(n, s * s * cin, (hs + 1) * wop)

    # Weights as (k*k, cout, cin), bf16 (bias dropped -- BN cancels it).
    w_mat = jnp.transpose(conv_w, (2, 3, 0, 1)).reshape(k * k, cout, cin)
    w_mat = w_mat.astype(compute_dtype)

    # ---- kernel 1: conv (in-VMEM im2col) + fused per-image stat partials ----
    kernel1 = functools.partial(_conv_stats_kernel, k=k, s=s, cin=cin,
                                ho=ho, wo=wo, wop=wop)
    vmem1 = (2 * (s * s * cin) * (hs + 1) * wop * itemsize   # input (dbl-buffered)
             + 2 * k * k * cout * cin * itemsize             # weights
             + 2 * cout * ho * wo * itemsize                 # conv-out block
             + 2 * cout * m * 4)                             # f32 acc headroom
    conv_out, img_sum, img_ssq = pl.pallas_call(
        kernel1,
        out_shape=(
            jax.ShapeDtypeStruct((n, cout, ho, wo), compute_dtype),
            jax.ShapeDtypeStruct((n, cout, 1), jnp.float32),
            jax.ShapeDtypeStruct((n, cout, 1), jnp.float32),
        ),
        grid=(n,),
        in_specs=[
            pl.BlockSpec((None, s * s * cin, (hs + 1) * wop),
                         lambda i: (i, 0, 0)),
            pl.BlockSpec((k * k, cout, cin), lambda i: (0, 0, 0)),
        ],
        out_specs=(
            pl.BlockSpec((None, cout, ho, wo), lambda i: (i, 0, 0, 0)),
            pl.BlockSpec((None, cout, 1), lambda i: (i, 0, 0)),
            pl.BlockSpec((None, cout, 1), lambda i: (i, 0, 0)),
        ),
        compiler_params=pltpu.CompilerParams(
            dimension_semantics=("parallel",),
            vmem_limit_bytes=_vmem_limit_bytes(vmem1)),
        cost_estimate=pl.CostEstimate(
            flops=2 * n * k * k * cin * cout * m,
            transcendentals=0,
            bytes_accessed=(xflat.size * itemsize + w_mat.size * itemsize
                            + n * cout * ho * wo * itemsize
                            + 2 * n * cout * 4)),
    )(xflat, w_mat)

    # ---- tiny cross-image stats reduction + scale/shift (plain XLA, f32) ----
    count = float(n * ho * wo)                     # true element count / channel
    total_sum = jnp.sum(img_sum[:, :, 0], axis=0)  # (cout,)
    total_ssq = jnp.sum(img_ssq[:, :, 0], axis=0)
    mean = total_sum / count
    var = jnp.maximum(total_ssq / count - mean * mean, 0.0)  # biased (training)
    inv_std = lax.rsqrt(var + BN_EPS)
    gamma = bn_gamma.astype(jnp.float32)
    beta = bn_beta.astype(jnp.float32)
    scale = (gamma * inv_std).reshape(cout, 1, 1)
    shift = (beta - mean * gamma * inv_std).reshape(cout, 1, 1)

    # ---- kernel 2: elementwise normalize + ReLU, writes final NCHW f32 ----
    vmem2 = 2 * cout * ho * wo * (itemsize + 4) + 2 * cout * 4 * 2
    out = pl.pallas_call(
        _bn_relu_kernel,
        out_shape=jax.ShapeDtypeStruct((n, cout, ho, wo), jnp.float32),
        grid=(n,),
        in_specs=[
            pl.BlockSpec((None, cout, ho, wo), lambda i: (i, 0, 0, 0)),
            pl.BlockSpec((cout, 1, 1), lambda i: (0, 0, 0)),
            pl.BlockSpec((cout, 1, 1), lambda i: (0, 0, 0)),
        ],
        out_specs=pl.BlockSpec((None, cout, ho, wo), lambda i: (i, 0, 0, 0)),
        compiler_params=pltpu.CompilerParams(
            dimension_semantics=("parallel",),
            vmem_limit_bytes=_vmem_limit_bytes(vmem2)),
    )(conv_out, scale, shift)
    return out


# ------------------------------ reference -----------------------------------


def _reference(x_nchw, conv_w, conv_b, bn_gamma, bn_beta, kernel_size, stride):
    p = kernel_size // 2
    y = lax.conv_general_dilated(
        x_nchw, conv_w, window_strides=(stride, stride),
        padding=[(p, p), (p, p)],
        dimension_numbers=("NCHW", "OIHW", "NCHW"))
    y = y + conv_b.reshape(1, -1, 1, 1)   # bias present; BN cancels it exactly
    mean = jnp.mean(y, axis=(0, 2, 3), keepdims=True)
    var = jnp.mean((y - mean) ** 2, axis=(0, 2, 3), keepdims=True)
    y = (y - mean) * lax.rsqrt(var + BN_EPS)
    y = y * bn_gamma.reshape(1, -1, 1, 1) + bn_beta.reshape(1, -1, 1, 1)
    return jnp.maximum(y, 0.0)


# --------------------------------- main --------------------------------------


if __name__ == "__main__":
    cases = [
        dict(n=2, cin=4, h=16, w=16, cout=8, k=3, s=1),    # baseline
        dict(n=2, cin=3, h=32, w=32, cout=16, k=5, s=1),   # larger kernel
        dict(n=1, cin=4, h=30, w=30, cout=8, k=3, s=2),    # stride-2 (phase path)
    ]

    key = jax.random.PRNGKey(0)
    for idx, c in enumerate(cases):
        key, k1, k2, k3, k4, k5 = jax.random.split(key, 6)
        x = jax.random.normal(k1, (c["n"], c["cin"], c["h"], c["w"]), jnp.float32)
        fan_in = c["cin"] * c["k"] * c["k"]
        bound = 1.0 / np.sqrt(fan_in)
        conv_w = jax.random.uniform(k2, (c["cout"], c["cin"], c["k"], c["k"]),
                                    minval=-bound, maxval=bound, dtype=jnp.float32)
        conv_b = jax.random.uniform(k3, (c["cout"],), minval=-bound, maxval=bound,
                                    dtype=jnp.float32)
        if idx == 0:
            gamma = jnp.ones((c["cout"],), jnp.float32)   # PyTorch BatchNorm2d init
            beta = jnp.zeros((c["cout"],), jnp.float32)
        else:
            gamma = 1.0 + 0.1 * jax.random.normal(k4, (c["cout"],), jnp.float32)
            beta = 0.1 * jax.random.normal(k5, (c["cout"],), jnp.float32)

        out = cnn_block_forward(x, conv_w, gamma, beta,
                                kernel_size=c["k"], stride=c["s"])
        out = jax.block_until_ready(out)

        ref = _reference(x, conv_w, conv_b, gamma, beta, c["k"], c["s"])
        # bf16 MXU inputs + bf16 conv intermediate (stats / normalization in f32)
        # => compare at bf16-appropriate tolerances.
        np.testing.assert_allclose(np.asarray(out), np.asarray(ref),
                                   rtol=3e-2, atol=3e-2)

    print("KERNEL_OK")
</pallas_src>

<mosaic_0001>
module attributes {stable_mosaic.version = 11 : i64} {
  func.func @_conv_stats_kernel(%arg0: i32, %arg1: memref<1x4x456xbf16, #tpu.memory_space<vmem>>, %arg2: memref<9x8x4xbf16, #tpu.memory_space<vmem>>, %arg3: memref<1x8x16x16xbf16, #tpu.memory_space<vmem>>, %arg4: memref<1x8x1xf32, #tpu.memory_space<vmem>>, %arg5: memref<1x8x1xf32, #tpu.memory_space<vmem>>) attributes {dimension_semantics = [#tpu.dimension_semantics<parallel>], iteration_bounds = array<i64: 2>, scalar_prefetch = 0 : i64, scratch_operands = 0 : i64, tpu.core_type = #tpu.core_type<tc>, window_params = [{transform_indices = @transform_0, window_bounds = array<i64: 1, 4, 456>}, {pipeline_mode = #tpu.pipeline_mode<synchronous>, transform_indices = @transform_1, window_bounds = array<i64: 9, 8, 4>}, {transform_indices = @transform_2, window_bounds = array<i64: 1, 8, 16, 16>}, {transform_indices = @transform_3, window_bounds = array<i64: 1, 8, 1>}, {transform_indices = @transform_4, window_bounds = array<i64: 1, 8, 1>}]} {
    %cst = arith.constant 0.000000e+00 : f32
    %0 = vector.broadcast %cst : f32 to vector<8x384xf32>
    %c0 = arith.constant 0 : index
    %c0_0 = arith.constant 0 : index
    %c0_1 = arith.constant 0 : index
    %1 = vector.load %arg1[%c0, %c0_0, %c0_1] : memref<1x4x456xbf16, #tpu.memory_space<vmem>>, vector<1x4x384xbf16>
    %2 = vector.shape_cast %1 : vector<1x4x384xbf16> to vector<4x384xbf16>
    %c0_2 = arith.constant 0 : index
    %c0_3 = arith.constant 0 : index
    %c0_4 = arith.constant 0 : index
    %3 = vector.load %arg2[%c0_2, %c0_3, %c0_4] : memref<9x8x4xbf16, #tpu.memory_space<vmem>>, vector<1x8x4xbf16>
    %4 = vector.shape_cast %3 : vector<1x8x4xbf16> to vector<8x4xbf16>
    %cst_5 = arith.constant dense<0.000000e+00> : vector<8x384xf32>
    %5 = tpu.matmul %4, %2, %cst_5 {dimension_numbers = #tpu.dot_dimension_numbers<[1], [0], [0], [1], [0, 0, 1, 1], [], []>} : vector<8x4xbf16>, vector<4x384xbf16>, vector<8x384xf32> -> vector<8x384xf32>
    %6 = arith.addf %0, %5 : vector<8x384xf32>
    %c0_6 = arith.constant 0 : index
    %c0_7 = arith.constant 0 : index
    %c1 = arith.constant 1 : index
    %7 = vector.load %arg1[%c0_6, %c0_7, %c1] : memref<1x4x456xbf16, #tpu.memory_space<vmem>>, vector<1x4x384xbf16>
    %8 = vector.shape_cast %7 : vector<1x4x384xbf16> to vector<4x384xbf16>
    %c1_8 = arith.constant 1 : index
    %c0_9 = arith.constant 0 : index
    %c0_10 = arith.constant 0 : index
    %9 = vector.load %arg2[%c1_8, %c0_9, %c0_10] : memref<9x8x4xbf16, #tpu.memory_space<vmem>>, vector<1x8x4xbf16>
    %10 = vector.shape_cast %9 : vector<1x8x4xbf16> to vector<8x4xbf16>
    %cst_11 = arith.constant dense<0.000000e+00> : vector<8x384xf32>
    %11 = tpu.matmul %10, %8, %cst_11 {dimension_numbers = #tpu.dot_dimension_numbers<[1], [0], [0], [1], [0, 0, 1, 1], [], []>} : vector<8x4xbf16>, vector<4x384xbf16>, vector<8x384xf32> -> vector<8x384xf32>
    %12 = arith.addf %6, %11 : vector<8x384xf32>
    %c0_12 = arith.constant 0 : index
    %c0_13 = arith.constant 0 : index
    %c2 = arith.constant 2 : index
    %13 = vector.load %arg1[%c0_12, %c0_13, %c2] : memref<1x4x456xbf16, #tpu.memory_space<vmem>>, vector<1x4x384xbf16>
    %14 = vector.shape_cast %13 : vector<1x4x384xbf16> to vector<4x384xbf16>
    %c2_14 = arith.constant 2 : index
    %c0_15 = arith.constant 0 : index
    %c0_16 = arith.constant 0 : index
    %15 = vector.load %arg2[%c2_14, %c0_15, %c0_16] : memref<9x8x4xbf16, #tpu.memory_space<vmem>>, vector<1x8x4xbf16>
    %16 = vector.shape_cast %15 : vector<1x8x4xbf16> to vector<8x4xbf16>
    %cst_17 = arith.constant dense<0.000000e+00> : vector<8x384xf32>
    %17 = tpu.matmul %16, %14, %cst_17 {dimension_numbers = #tpu.dot_dimension_numbers<[1], [0], [0], [1], [0, 0, 1, 1], [], []>} : vector<8x4xbf16>, vector<4x384xbf16>, vector<8x384xf32> -> vector<8x384xf32>
    %18 = arith.addf %12, %17 : vector<8x384xf32>
    %c0_18 = arith.constant 0 : index
    %c0_19 = arith.constant 0 : index
    %c24 = arith.constant 24 : index
    %19 = vector.load %arg1[%c0_18, %c0_19, %c24] : memref<1x4x456xbf16, #tpu.memory_space<vmem>>, vector<1x4x384xbf16>
    %20 = vector.shape_cast %19 : vector<1x4x384xbf16> to vector<4x384xbf16>
    %c3 = arith.constant 3 : index
    %c0_20 = arith.constant 0 : index
    %c0_21 = arith.constant 0 : index
    %21 = vector.load %arg2[%c3, %c0_20, %c0_21] : memref<9x8x4xbf16, #tpu.memory_space<vmem>>, vector<1x8x4xbf16>
    %22 = vector.shape_cast %21 : vector<1x8x4xbf16> to vector<8x4xbf16>
    %cst_22 = arith.constant dense<0.000000e+00> : vector<8x384xf32>
    %23 = tpu.matmul %22, %20, %cst_22 {dimension_numbers = #tpu.dot_dimension_numbers<[1], [0], [0], [1], [0, 0, 1, 1], [], []>} : vector<8x4xbf16>, vector<4x384xbf16>, vector<8x384xf32> -> vector<8x384xf32>
    %24 = arith.addf %18, %23 : vector<8x384xf32>
    %c0_23 = arith.constant 0 : index
    %c0_24 = arith.constant 0 : index
    %c25 = arith.constant 25 : index
    %25 = vector.load %arg1[%c0_23, %c0_24, %c25] : memref<1x4x456xbf16, #tpu.memory_space<vmem>>, vector<1x4x384xbf16>
    %26 = vector.shape_cast %25 : vector<1x4x384xbf16> to vector<4x384xbf16>
    %c4 = arith.constant 4 : index
    %c0_25 = arith.constant 0 : index
    %c0_26 = arith.constant 0 : index
    %27 = vector.load %arg2[%c4, %c0_25, %c0_26] : memref<9x8x4xbf16, #tpu.memory_space<vmem>>, vector<1x8x4xbf16>
    %28 = vector.shape_cast %27 : vector<1x8x4xbf16> to vector<8x4xbf16>
    %cst_27 = arith.constant dense<0.000000e+00> : vector<8x384xf32>
    %29 = tpu.matmul %28, %26, %cst_27 {dimension_numbers = #tpu.dot_dimension_numbers<[1], [0], [0], [1], [0, 0, 1, 1], [], []>} : vector<8x4xbf16>, vector<4x384xbf16>, vector<8x384xf32> -> vector<8x384xf32>
    %30 = arith.addf %24, %29 : vector<8x384xf32>
    %c0_28 = arith.constant 0 : index
    %c0_29 = arith.constant 0 : index
    %c26 = arith.constant 26 : index
    %31 = vector.load %arg1[%c0_28, %c0_29, %c26] : memref<1x4x456xbf16, #tpu.memory_space<vmem>>, vector<1x4x384xbf16>
    %32 = vector.shape_cast %31 : vector<1x4x384xbf16> to vector<4x384xbf16>
    %c5 = arith.constant 5 : index
    %c0_30 = arith.constant 0 : index
    %c0_31 = arith.constant 0 : index
    %33 = vector.load %arg2[%c5, %c0_30, %c0_31] : memref<9x8x4xbf16, #tpu.memory_space<vmem>>, vector<1x8x4xbf16>
    %34 = vector.shape_cast %33 : vector<1x8x4xbf16> to vector<8x4xbf16>
    %cst_32 = arith.constant dense<0.000000e+00> : vector<8x384xf32>
    %35 = tpu.matmul %34, %32, %cst_32 {dimension_numbers = #tpu.dot_dimension_numbers<[1], [0], [0], [1], [0, 0, 1, 1], [], []>} : vector<8x4xbf16>, vector<4x384xbf16>, vector<8x384xf32> -> vector<8x384xf32>
    %36 = arith.addf %30, %35 : vector<8x384xf32>
    %c0_33 = arith.constant 0 : index
    %c0_34 = arith.constant 0 : index
    %c48 = arith.constant 48 : index
    %37 = vector.load %arg1[%c0_33, %c0_34, %c48] : memref<1x4x456xbf16, #tpu.memory_space<vmem>>, vector<1x4x384xbf16>
    %38 = vector.shape_cast %37 : vector<1x4x384xbf16> to vector<4x384xbf16>
    %c6 = arith.constant 6 : index
    %c0_35 = arith.constant 0 : index
    %c0_36 = arith.constant 0 : index
    %39 = vector.load %arg2[%c6, %c0_35, %c0_36] : memref<9x8x4xbf16, #tpu.memory_space<vmem>>, vector<1x8x4xbf16>
    %40 = vector.shape_cast %39 : vector<1x8x4xbf16> to vector<8x4xbf16>
    %cst_37 = arith.constant dense<0.000000e+00> : vector<8x384xf32>
    %41 = tpu.matmul %40, %38, %cst_37 {dimension_numbers = #tpu.dot_dimension_numbers<[1], [0], [0], [1], [0, 0, 1, 1], [], []>} : vector<8x4xbf16>, vector<4x384xbf16>, vector<8x384xf32> -> vector<8x384xf32>
    %42 = arith.addf %36, %41 : vector<8x384xf32>
    %c0_38 = arith.constant 0 : index
    %c0_39 = arith.constant 0 : index
    %c49 = arith.constant 49 : index
    %43 = vector.load %arg1[%c0_38, %c0_39, %c49] : memref<1x4x456xbf16, #tpu.memory_space<vmem>>, vector<1x4x384xbf16>
    %44 = vector.shape_cast %43 : vector<1x4x384xbf16> to vector<4x384xbf16>
    %c7 = arith.constant 7 : index
    %c0_40 = arith.constant 0 : index
    %c0_41 = arith.constant 0 : index
    %45 = vector.load %arg2[%c7, %c0_40, %c0_41] : memref<9x8x4xbf16, #tpu.memory_space<vmem>>, vector<1x8x4xbf16>
    %46 = vector.shape_cast %45 : vector<1x8x4xbf16> to vector<8x4xbf16>
    %cst_42 = arith.constant dense<0.000000e+00> : vector<8x384xf32>
    %47 = tpu.matmul %46, %44, %cst_42 {dimension_numbers = #tpu.dot_dimension_numbers<[1], [0], [0], [1], [0, 0, 1, 1], [], []>} : vector<8x4xbf16>, vector<4x384xbf16>, vector<8x384xf32> -> vector<8x384xf32>
    %48 = arith.addf %42, %47 : vector<8x384xf32>
    %c0_43 = arith.constant 0 : index
    %c0_44 = arith.constant 0 : index
    %c50 = arith.constant 50 : index
    %49 = vector.load %arg1[%c0_43, %c0_44, %c50] : memref<1x4x456xbf16, #tpu.memory_space<vmem>>, vector<1x4x384xbf16>
    %50 = vector.shape_cast %49 : vector<1x4x384xbf16> to vector<4x384xbf16>
    %c8 = arith.constant 8 : index
    %c0_45 = arith.constant 0 : index
    %c0_46 = arith.constant 0 : index
    %51 = vector.load %arg2[%c8, %c0_45, %c0_46] : memref<9x8x4xbf16, #tpu.memory_space<vmem>>, vector<1x8x4xbf16>
    %52 = vector.shape_cast %51 : vector<1x8x4xbf16> to vector<8x4xbf16>
    %cst_47 = arith.constant dense<0.000000e+00> : vector<8x384xf32>
    %53 = tpu.matmul %52, %50, %cst_47 {dimension_numbers = #tpu.dot_dimension_numbers<[1], [0], [0], [1], [0, 0, 1, 1], [], []>} : vector<8x4xbf16>, vector<4x384xbf16>, vector<8x384xf32> -> vector<8x384xf32>
    %54 = arith.addf %48, %53 : vector<8x384xf32>
    %cst_48 = arith.constant 0.000000e+00 : f32
    %55 = vector.broadcast %cst_48 : f32 to vector<8x1xf32>
    %cst_49 = arith.constant 0.000000e+00 : f32
    %56 = vector.broadcast %cst_49 : f32 to vector<8x1xf32>
    %57 = vector.extract_strided_slice %54 {offsets = [0, 0], sizes = [8, 16], strides = [1, 1]} : vector<8x384xf32> to vector<8x16xf32>
    %58 = arith.truncf %57 : vector<8x16xf32> to vector<8x16xbf16>
    %c0_50 = arith.constant 0 : index
    %c0_51 = arith.constant 0 : index
    %c0_52 = arith.constant 0 : index
    %c0_53 = arith.constant 0 : index
    %59 = vector.load %arg3[%c0_50, %c0_51, %c0_52, %c0_53] : memref<1x8x16x16xbf16, #tpu.memory_space<vmem>>, vector<1x8x1x16xbf16>
    %60 = vector.shape_cast %59 : vector<1x8x1x16xbf16> to vector<8x16xbf16>
    %61 = vector.shape_cast %58 : vector<8x16xbf16> to vector<1x8x1x16xbf16>
    tpu.vector_store %arg3[%c0_50, %c0_51, %c0_52, %c0_53], %61 {strides = array<i32>} : memref<1x8x16x16xbf16, #tpu.memory_space<vmem>>, vector<1x8x1x16xbf16>,
    %cst_54 = arith.constant dense<0.000000e+00> : vector<8xf32>
    %62 = vector.multi_reduction <add>, %57, %cst_54 [1] : vector<8x16xf32> to vector<8xf32>
    %63 = vector.shape_cast %62 : vector<8xf32> to vector<8x1xf32>
    %64 = arith.addf %55, %63 : vector<8x1xf32>
    %65 = arith.mulf %57, %57 : vector<8x16xf32>
    %cst_55 = arith.constant dense<0.000000e+00> : vector<8xf32>
    %66 = vector.multi_reduction <add>, %65, %cst_55 [1] : vector<8x16xf32> to vector<8xf32>
    %67 = vector.shape_cast %66 : vector<8xf32> to vector<8x1xf32>
    %68 = arith.addf %56, %67 : vector<8x1xf32>
    %69 = vector.extract_strided_slice %54 {offsets = [0, 24], sizes = [8, 16], strides = [1, 1]} : vector<8x384xf32> to vector<8x16xf32>
    %70 = arith.truncf %69 : vector<8x16xf32> to vector<8x16xbf16>
    %c0_56 = arith.constant 0 : index
    %c0_57 = arith.constant 0 : index
    %c1_58 = arith.constant 1 : index
    %c0_59 = arith.constant 0 : index
    %71 = vector.load %arg3[%c0_56, %c0_57, %c1_58, %c0_59] : memref<1x8x16x16xbf16, #tpu.memory_space<vmem>>, vector<1x8x1x16xbf16>
    %72 = vector.shape_cast %71 : vector<1x8x1x16xbf16> to vector<8x16xbf16>
    %73 = vector.shape_cast %70 : vector<8x16xbf16> to vector<1x8x1x16xbf16>
    tpu.vector_store %arg3[%c0_56, %c0_57, %c1_58, %c0_59], %73 {strides = array<i32>} : memref<1x8x16x16xbf16, #tpu.memory_space<vmem>>, vector<1x8x1x16xbf16>,
    %cst_60 = arith.constant dense<0.000000e+00> : vector<8xf32>
    %74 = vector.multi_reduction <add>, %69, %cst_60 [1] : vector<8x16xf32> to vector<8xf32>
    %75 = vector.shape_cast %74 : vector<8xf32> to vector<8x1xf32>
    %76 = arith.addf %64, %75 : vector<8x1xf32>
    %77 = arith.mulf %69, %69 : vector<8x16xf32>
    %cst_61 = arith.constant dense<0.000000e+00> : vector<8xf32>
    %78 = vector.multi_reduction <add>, %77, %cst_61 [1] : vector<8x16xf32> to vector<8xf32>
    %79 = vector.shape_cast %78 : vector<8xf32> to vector<8x1xf32>
    %80 = arith.addf %68, %79 : vector<8x1xf32>
    %81 = vector.extract_strided_slice %54 {offsets = [0, 48], sizes = [8, 16], strides = [1, 1]} : vector<8x384xf32> to vector<8x16xf32>
    %82 = arith.truncf %81 : vector<8x16xf32> to vector<8x16xbf16>
    %c0_62 = arith.constant 0 : index
    %c0_63 = arith.constant 0 : index
    %c2_64 = arith.constant 2 : index
    %c0_65 = arith.constant 0 : index
    %83 = vector.load %arg3[%c0_62, %c0_63, %c2_64, %c0_65] : memref<1x8x16x16xbf16, #tpu.memory_space<vmem>>, vector<1x8x1x16xbf16>
    %84 = vector.shape_cast %83 : vector<1x8x1x16xbf16> to vector<8x16xbf16>
    %85 = vector.shape_cast %82 : vector<8x16xbf16> to vector<1x8x1x16xbf16>
    tpu.vector_store %arg3[%c0_62, %c0_63, %c2_64, %c0_65], %85 {strides = array<i32>} : memref<1x8x16x16xbf16, #tpu.memory_space<vmem>>, vector<1x8x1x16xbf16>,
    %cst_66 = arith.constant dense<0.000000e+00> : vector<8xf32>
    %86 = vector.multi_reduction <add>, %81, %cst_66 [1] : vector<8x16xf32> to vector<8xf32>
    %87 = vector.shape_cast %86 : vector<8xf32> to vector<8x1xf32>
    %88 = arith.addf %76, %87 : vector<8x1xf32>
    %89 = arith.mulf %81, %81 : vector<8x16xf32>
    %cst_67 = arith.constant dense<0.000000e+00> : vector<8xf32>
    %90 = vector.multi_reduction <add>, %89, %cst_67 [1] : vector<8x16xf32> to vector<8xf32>
    %91 = vector.shape_cast %90 : vector<8xf32> to vector<8x1xf32>
    %92 = arith.addf %80, %91 : vector<8x1xf32>
    %93 = vector.extract_strided_slice %54 {offsets = [0, 72], sizes = [8, 16], strides = [1, 1]} : vector<8x384xf32> to vector<8x16xf32>
    %94 = arith.truncf %93 : vector<8x16xf32> to vector<8x16xbf16>
    %c0_68 = arith.constant 0 : index
    %c0_69 = arith.constant 0 : index
    %c3_70 = arith.constant 3 : index
    %c0_71 = arith.constant 0 : index
    %95 = vector.load %arg3[%c0_68, %c0_69, %c3_70, %c0_71] : memref<1x8x16x16xbf16, #tpu.memory_space<vmem>>, vector<1x8x1x16xbf16>
    %96 = vector.shape_cast %95 : vector<1x8x1x16xbf16> to vector<8x16xbf16>
    %97 = vector.shape_cast %94 : vector<8x16xbf16> to vector<1x8x1x16xbf16>
    tpu.vector_store %arg3[%c0_68, %c0_69, %c3_70, %c0_71], %97 {strides = array<i32>} : memref<1x8x16x16xbf16, #tpu.memory_space<vmem>>, vector<1x8x1x16xbf16>,
    %cst_72 = arith.constant dense<0.000000e+00> : vector<8xf32>
    %98 = vector.multi_reduction <add>, %93, %cst_72 [1] : vector<8x16xf32> to vector<8xf32>
    %99 = vector.shape_cast %98 : vector<8xf32> to vector<8x1xf32>
    %100 = arith.addf %88, %99 : vector<8x1xf32>
    %101 = arith.mulf %93, %93 : vector<8x16xf32>
    %cst_73 = arith.constant dense<0.000000e+00> : vector<8xf32>
    %102 = vector.multi_reduction <add>, %101, %cst_73 [1] : vector<8x16xf32> to vector<8xf32>
    %103 = vector.shape_cast %102 : vector<8xf32> to vector<8x1xf32>
    %104 = arith.addf %92, %103 : vector<8x1xf32>
    %105 = vector.extract_strided_slice %54 {offsets = [0, 96], sizes = [8, 16], strides = [1, 1]} : vector<8x384xf32> to vector<8x16xf32>
    %106 = arith.truncf %105 : vector<8x16xf32> to vector<8x16xbf16>
    %c0_74 = arith.constant 0 : index
    %c0_75 = arith.constant 0 : index
    %c4_76 = arith.constant 4 : index
    %c0_77 = arith.constant 0 : index
    %107 = vector.load %arg3[%c0_74, %c0_75, %c4_76, %c0_77] : memref<1x8x16x16xbf16, #tpu.memory_space<vmem>>, vector<1x8x1x16xbf16>
    %108 = vector.shape_cast %107 : vector<1x8x1x16xbf16> to vector<8x16xbf16>
    %109 = vector.shape_cast %106 : vector<8x16xbf16> to vector<1x8x1x16xbf16>
    tpu.vector_store %arg3[%c0_74, %c0_75, %c4_76, %c0_77], %109 {strides = array<i32>} : memref<1x8x16x16xbf16, #tpu.memory_space<vmem>>, vector<1x8x1x16xbf16>,
    %cst_78 = arith.constant dense<0.000000e+00> : vector<8xf32>
    %110 = vector.multi_reduction <add>, %105, %cst_78 [1] : vector<8x16xf32> to vector<8xf32>
    %111 = vector.shape_cast %110 : vector<8xf32> to vector<8x1xf32>
    %112 = arith.addf %100, %111 : vector<8x1xf32>
    %113 = arith.mulf %105, %105 : vector<8x16xf32>
    %cst_79 = arith.constant dense<0.000000e+00> : vector<8xf32>
    %114 = vector.multi_reduction <add>, %113, %cst_79 [1] : vector<8x16xf32> to vector<8xf32>
    %115 = vector.shape_cast %114 : vector<8xf32> to vector<8x1xf32>
    %116 = arith.addf %104, %115 : vector<8x1xf32>
    %117 = vector.extract_strided_slice %54 {offsets = [0, 120], sizes = [8, 16], strides = [1, 1]} : vector<8x384xf32> to vector<8x16xf32>
    %118 = arith.truncf %117 : vector<8x16xf32> to vector<8x16xbf16>
    %c0_80 = arith.constant 0 : index
    %c0_81 = arith.constant 0 : index
    %c5_82 = arith.constant 5 : index
    %c0_83 = arith.constant 0 : index
    %119 = vector.load %arg3[%c0_80, %c0_81, %c5_82, %c0_83] : memref<1x8x16x16xbf16, #tpu.memory_space<vmem>>, vector<1x8x1x16xbf16>
    %120 = vector.shape_cast %119 : vector<1x8x1x16xbf16> to vector<8x16xbf16>
    %121 = vector.shape_cast %118 : vector<8x16xbf16> to vector<1x8x1x16xbf16>
    tpu.vector_store %arg3[%c0_80, %c0_81, %c5_82, %c0_83], %121 {strides = array<i32>} : memref<1x8x16x16xbf16, #tpu.memory_space<vmem>>, vector<1x8x1x16xbf16>,
    %cst_84 = arith.constant dense<0.000000e+00> : vector<8xf32>
    %122 = vector.multi_reduction <add>, %117, %cst_84 [1] : vector<8x16xf32> to vector<8xf32>
    %123 = vector.shape_cast %122 : vector<8xf32> to vector<8x1xf32>
    %124 = arith.addf %112, %123 : vector<8x1xf32>
    %125 = arith.mulf %117, %117 : vector<8x16xf32>
    %cst_85 = arith.constant dense<0.000000e+00> : vector<8xf32>
    %126 = vector.multi_reduction <add>, %125, %cst_85 [1] : vector<8x16xf32> to vector<8xf32>
    %127 = vector.shape_cast %126 : vector<8xf32> to vector<8x1xf32>
    %128 = arith.addf %116, %127 : vector<8x1xf32>
    %129 = vector.extract_strided_slice %54 {offsets = [0, 144], sizes = [8, 16], strides = [1, 1]} : vector<8x384xf32> to vector<8x16xf32>
    %130 = arith.truncf %129 : vector<8x16xf32> to vector<8x16xbf16>
    %c0_86 = arith.constant 0 : index
    %c0_87 = arith.constant 0 : index
    %c6_88 = arith.constant 6 : index
    %c0_89 = arith.constant 0 : index
    %131 = vector.load %arg3[%c0_86, %c0_87, %c6_88, %c0_89] : memref<1x8x16x16xbf16, #tpu.memory_space<vmem>>, vector<1x8x1x16xbf16>
    %132 = vector.shape_cast %131 : vector<1x8x1x16xbf16> to vector<8x16xbf16>
    %133 = vector.shape_cast %130 : vector<8x16xbf16> to vector<1x8x1x16xbf16>
    tpu.vector_store %arg3[%c0_86, %c0_87, %c6_88, %c0_89], %133 {strides = array<i32>} : memref<1x8x16x16xbf16, #tpu.memory_space<vmem>>, vector<1x8x1x16xbf16>,
    %cst_90 = arith.constant dense<0.000000e+00> : vector<8xf32>
    %134 = vector.multi_reduction <add>, %129, %cst_90 [1] : vector<8x16xf32> to vector<8xf32>
    %135 = vector.shape_cast %134 : vector<8xf32> to vector<8x1xf32>
    %136 = arith.addf %124, %135 : vector<8x1xf32>
    %137 = arith.mulf %129, %129 : vector<8x16xf32>
    %cst_91 = arith.constant dense<0.000000e+00> : vector<8xf32>
    %138 = vector.multi_reduction <add>, %137, %cst_91 [1] : vector<8x16xf32> to vector<8xf32>
    %139 = vector.shape_cast %138 : vector<8xf32> to vector<8x1xf32>
    %140 = arith.addf %128, %139 : vector<8x1xf32>
    %141 = vector.extract_strided_slice %54 {offsets = [0, 168], sizes = [8, 16], strides = [1, 1]} : vector<8x384xf32> to vector<8x16xf32>
    %142 = arith.truncf %141 : vector<8x16xf32> to vector<8x16xbf16>
    %c0_92 = arith.constant 0 : index
    %c0_93 = arith.constant 0 : index
    %c7_94 = arith.constant 7 : index
    %c0_95 = arith.constant 0 : index
    %143 = vector.load %arg3[%c0_92, %c0_93, %c7_94, %c0_95] : memref<1x8x16x16xbf16, #tpu.memory_space<vmem>>, vector<1x8x1x16xbf16>
    %144 = vector.shape_cast %143 : vector<1x8x1x16xbf16> to vector<8x16xbf16>
    %145 = vector.shape_cast %142 : vector<8x16xbf16> to vector<1x8x1x16xbf16>
    tpu.vector_store %arg3[%c0_92, %c0_93, %c7_94, %c0_95], %145 {strides = array<i32>} : memref<1x8x16x16xbf16, #tpu.memory_space<vmem>>, vector<1x8x1x16xbf16>,
    %cst_96 = arith.constant dense<0.000000e+00> : vector<8xf32>
    %146 = vector.multi_reduction <add>, %141, %cst_96 [1] : vector<8x16xf32> to vector<8xf32>
    %147 = vector.shape_cast %146 : vector<8xf32> to vector<8x1xf32>
    %148 = arith.addf %136, %147 : vector<8x1xf32>
    %149 = arith.mulf %141, %141 : vector<8x16xf32>
    %cst_97 = arith.constant dense<0.000000e+00> : vector<8xf32>
    %150 = vector.multi_reduction <add>, %149, %cst_97 [1] : vector<8x16xf32> to vector<8xf32>
    %151 = vector.shape_cast %150 : vector<8xf32> to vector<8x1xf32>
    %152 = arith.addf %140, %151 : vector<8x1xf32>
    %153 = vector.extract_strided_slice %54 {offsets = [0, 192], sizes = [8, 16], strides = [1, 1]} : vector<8x384xf32> to vector<8x16xf32>
    %154 = arith.truncf %153 : vector<8x16xf32> to vector<8x16xbf16>
    %c0_98 = arith.constant 0 : index
    %c0_99 = arith.constant 0 : index
    %c8_100 = arith.constant 8 : index
    %c0_101 = arith.constant 0 : index
    %155 = vector.load %arg3[%c0_98, %c0_99, %c8_100, %c0_101] : memref<1x8x16x16xbf16, #tpu.memory_space<vmem>>, vector<1x8x1x16xbf16>
    %156 = vector.shape_cast %155 : vector<1x8x1x16xbf16> to vector<8x16xbf16>
    %157 = vector.shape_cast %154 : vector<8x16xbf16> to vector<1x8x1x16xbf16>
    tpu.vector_store %arg3[%c0_98, %c0_99, %c8_100, %c0_101], %157 {strides = array<i32>} : memref<1x8x16x16xbf16, #tpu.memory_space<vmem>>, vector<1x8x1x16xbf16>,
    %cst_102 = arith.constant dense<0.000000e+00> : vector<8xf32>
    %158 = vector.multi_reduction <add>, %153, %cst_102 [1] : vector<8x16xf32> to vector<8xf32>
    %159 = vector.shape_cast %158 : vector<8xf32> to vector<8x1xf32>
    %160 = arith.addf %148, %159 : vector<8x1xf32>
    %161 = arith.mulf %153, %153 : vector<8x16xf32>
    %cst_103 = arith.constant dense<0.000000e+00> : vector<8xf32>
    %162 = vector.multi_reduction <add>, %161, %cst_103 [1] : vector<8x16xf32> to vector<8xf32>
    %163 = vector.shape_cast %162 : vector<8xf32> to vector<8x1xf32>
    %164 = arith.addf %152, %163 : vector<8x1xf32>
    %165 = vector.extract_strided_slice %54 {offsets = [0, 216], sizes = [8, 16], strides = [1, 1]} : vector<8x384xf32> to vector<8x16xf32>
    %166 = arith.truncf %165 : vector<8x16xf32> to vector<8x16xbf16>
    %c0_104 = arith.constant 0 : index
    %c0_105 = arith.constant 0 : index
    %c9 = arith.constant 9 : index
    %c0_106 = arith.constant 0 : index
    %167 = vector.load %arg3[%c0_104, %c0_105, %c9, %c0_106] : memref<1x8x16x16xbf16, #tpu.memory_space<vmem>>, vector<1x8x1x16xbf16>
    %168 = vector.shape_cast %167 : vector<1x8x1x16xbf16> to vector<8x16xbf16>
    %169 = vector.shape_cast %166 : vector<8x16xbf16> to vector<1x8x1x16xbf16>
    tpu.vector_store %arg3[%c0_104, %c0_105, %c9, %c0_106], %169 {strides = array<i32>} : memref<1x8x16x16xbf16, #tpu.memory_space<vmem>>, vector<1x8x1x16xbf16>,
    %cst_107 = arith.constant dense<0.000000e+00> : vector<8xf32>
    %170 = vector.multi_reduction <add>, %165, %cst_107 [1] : vector<8x16xf32> to vector<8xf32>
    %171 = vector.shape_cast %170 : vector<8xf32> to vector<8x1xf32>
    %172 = arith.addf %160, %171 : vector<8x1xf32>
    %173 = arith.mulf %165, %165 : vector<8x16xf32>
    %cst_108 = arith.constant dense<0.000000e+00> : vector<8xf32>
    %174 = vector.multi_reduction <add>, %173, %cst_108 [1] : vector<8x16xf32> to vector<8xf32>
    %175 = vector.shape_cast %174 : vector<8xf32> to vector<8x1xf32>
    %176 = arith.addf %164, %175 : vector<8x1xf32>
    %177 = vector.extract_strided_slice %54 {offsets = [0, 240], sizes = [8, 16], strides = [1, 1]} : vector<8x384xf32> to vector<8x16xf32>
    %178 = arith.truncf %177 : vector<8x16xf32> to vector<8x16xbf16>
    %c0_109 = arith.constant 0 : index
    %c0_110 = arith.constant 0 : index
    %c10 = arith.constant 10 : index
    %c0_111 = arith.constant 0 : index
    %179 = vector.load %arg3[%c0_109, %c0_110, %c10, %c0_111] : memref<1x8x16x16xbf16, #tpu.memory_space<vmem>>, vector<1x8x1x16xbf16>
    %180 = vector.shape_cast %179 : vector<1x8x1x16xbf16> to vector<8x16xbf16>
    %181 = vector.shape_cast %178 : vector<8x16xbf16> to vector<1x8x1x16xbf16>
    tpu.vector_store %arg3[%c0_109, %c0_110, %c10, %c0_111], %181 {strides = array<i32>} : memref<1x8x16x16xbf16, #tpu.memory_space<vmem>>, vector<1x8x1x16xbf16>,
    %cst_112 = arith.constant dense<0.000000e+00> : vector<8xf32>
    %182 = vector.multi_reduction <add>, %177, %cst_112 [1] : vector<8x16xf32> to vector<8xf32>
    %183 = vector.shape_cast %182 : vector<8xf32> to vector<8x1xf32>
    %184 = arith.addf %172, %183 : vector<8x1xf32>
    %185 = arith.mulf %177, %177 : vector<8x16xf32>
    %cst_113 = arith.constant dense<0.000000e+00> : vector<8xf32>
    %186 = vector.multi_reduction <add>, %185, %cst_113 [1] : vector<8x16xf32> to vector<8xf32>
    %187 = vector.shape_cast %186 : vector<8xf32> to vector<8x1xf32>
    %188 = arith.addf %176, %187 : vector<8x1xf32>
    %189 = vector.extract_strided_slice %54 {offsets = [0, 264], sizes = [8, 16], strides = [1, 1]} : vector<8x384xf32> to vector<8x16xf32>
    %190 = arith.truncf %189 : vector<8x16xf32> to vector<8x16xbf16>
    %c0_114 = arith.constant 0 : index
    %c0_115 = arith.constant 0 : index
    %c11 = arith.constant 11 : index
    %c0_116 = arith.constant 0 : index
    %191 = vector.load %arg3[%c0_114, %c0_115, %c11, %c0_116] : memref<1x8x16x16xbf16, #tpu.memory_space<vmem>>, vector<1x8x1x16xbf16>
    %192 = vector.shape_cast %191 : vector<1x8x1x16xbf16> to vector<8x16xbf16>
    %193 = vector.shape_cast %190 : vector<8x16xbf16> to vector<1x8x1x16xbf16>
    tpu.vector_store %arg3[%c0_114, %c0_115, %c11, %c0_116], %193 {strides = array<i32>} : memref<1x8x16x16xbf16, #tpu.memory_space<vmem>>, vector<1x8x1x16xbf16>,
    %cst_117 = arith.constant dense<0.000000e+00> : vector<8xf32>
    %194 = vector.multi_reduction <add>, %189, %cst_117 [1] : vector<8x16xf32> to vector<8xf32>
    %195 = vector.shape_cast %194 : vector<8xf32> to vector<8x1xf32>
    %196 = arith.addf %184, %195 : vector<8x1xf32>
    %197 = arith.mulf %189, %189 : vector<8x16xf32>
    %cst_118 = arith.constant dense<0.000000e+00> : vector<8xf32>
    %198 = vector.multi_reduction <add>, %197, %cst_118 [1] : vector<8x16xf32> to vector<8xf32>
    %199 = vector.shape_cast %198 : vector<8xf32> to vector<8x1xf32>
    %200 = arith.addf %188, %199 : vector<8x1xf32>
    %201 = vector.extract_strided_slice %54 {offsets = [0, 288], sizes = [8, 16], strides = [1, 1]} : vector<8x384xf32> to vector<8x16xf32>
    %202 = arith.truncf %201 : vector<8x16xf32> to vector<8x16xbf16>
    %c0_119 = arith.constant 0 : index
    %c0_120 = arith.constant 0 : index
    %c12 = arith.constant 12 : index
    %c0_121 = arith.constant 0 : index
    %203 = vector.load %arg3[%c0_119, %c0_120, %c12, %c0_121] : memref<1x8x16x16xbf16, #tpu.memory_space<vmem>>, vector<1x8x1x16xbf16>
    %204 = vector.shape_cast %203 : vector<1x8x1x16xbf16> to vector<8x16xbf16>
    %205 = vector.shape_cast %202 : vector<8x16xbf16> to vector<1x8x1x16xbf16>
    tpu.vector_store %arg3[%c0_119, %c0_120, %c12, %c0_121], %205 {strides = array<i32>} : memref<1x8x16x16xbf16, #tpu.memory_space<vmem>>, vector<1x8x1x16xbf16>,
    %cst_122 = arith.constant dense<0.000000e+00> : vector<8xf32>
    %206 = vector.multi_reduction <add>, %201, %cst_122 [1] : vector<8x16xf32> to vector<8xf32>
    %207 = vector.shape_cast %206 : vector<8xf32> to vector<8x1xf32>
    %208 = arith.addf %196, %207 : vector<8x1xf32>
    %209 = arith.mulf %201, %201 : vector<8x16xf32>
    %cst_123 = arith.constant dense<0.000000e+00> : vector<8xf32>
    %210 = vector.multi_reduction <add>, %209, %cst_123 [1] : vector<8x16xf32> to vector<8xf32>
    %211 = vector.shape_cast %210 : vector<8xf32> to vector<8x1xf32>
    %212 = arith.addf %200, %211 : vector<8x1xf32>
    %213 = vector.extract_strided_slice %54 {offsets = [0, 312], sizes = [8, 16], strides = [1, 1]} : vector<8x384xf32> to vector<8x16xf32>
    %214 = arith.truncf %213 : vector<8x16xf32> to vector<8x16xbf16>
    %c0_124 = arith.constant 0 : index
    %c0_125 = arith.constant 0 : index
    %c13 = arith.constant 13 : index
    %c0_126 = arith.constant 0 : index
    %215 = vector.load %arg3[%c0_124, %c0_125, %c13, %c0_126] : memref<1x8x16x16xbf16, #tpu.memory_space<vmem>>, vector<1x8x1x16xbf16>
    %216 = vector.shape_cast %215 : vector<1x8x1x16xbf16> to vector<8x16xbf16>
    %217 = vector.shape_cast %214 : vector<8x16xbf16> to vector<1x8x1x16xbf16>
    tpu.vector_store %arg3[%c0_124, %c0_125, %c13, %c0_126], %217 {strides = array<i32>} : memref<1x8x16x16xbf16, #tpu.memory_space<vmem>>, vector<1x8x1x16xbf16>,
    %cst_127 = arith.constant dense<0.000000e+00> : vector<8xf32>
    %218 = vector.multi_reduction <add>, %213, %cst_127 [1] : vector<8x16xf32> to vector<8xf32>
    %219 = vector.shape_cast %218 : vector<8xf32> to vector<8x1xf32>
    %220 = arith.addf %208, %219 : vector<8x1xf32>
    %221 = arith.mulf %213, %213 : vector<8x16xf32>
    %cst_128 = arith.constant dense<0.000000e+00> : vector<8xf32>
    %222 = vector.multi_reduction <add>, %221, %cst_128 [1] : vector<8x16xf32> to vector<8xf32>
    %223 = vector.shape_cast %222 : vector<8xf32> to vector<8x1xf32>
    %224 = arith.addf %212, %223 : vector<8x1xf32>
    %225 = vector.extract_strided_slice %54 {offsets = [0, 336], sizes = [8, 16], strides = [1, 1]} : vector<8x384xf32> to vector<8x16xf32>
    %226 = arith.truncf %225 : vector<8x16xf32> to vector<8x16xbf16>
    %c0_129 = arith.constant 0 : index
    %c0_130 = arith.constant 0 : index
    %c14 = arith.constant 14 : index
    %c0_131 = arith.constant 0 : index
    %227 = vector.load %arg3[%c0_129, %c0_130, %c14, %c0_131] : memref<1x8x16x16xbf16, #tpu.memory_space<vmem>>, vector<1x8x1x16xbf16>
    %228 = vector.shape_cast %227 : vector<1x8x1x16xbf16> to vector<8x16xbf16>
    %229 = vector.shape_cast %226 : vector<8x16xbf16> to vector<1x8x1x16xbf16>
    tpu.vector_store %arg3[%c0_129, %c0_130, %c14, %c0_131], %229 {strides = array<i32>} : memref<1x8x16x16xbf16, #tpu.memory_space<vmem>>, vector<1x8x1x16xbf16>,
    %cst_132 = arith.constant dense<0.000000e+00> : vector<8xf32>
    %230 = vector.multi_reduction <add>, %225, %cst_132 [1] : vector<8x16xf32> to vector<8xf32>
    %231 = vector.shape_cast %230 : vector<8xf32> to vector<8x1xf32>
    %232 = arith.addf %220, %231 : vector<8x1xf32>
    %233 = arith.mulf %225, %225 : vector<8x16xf32>
    %cst_133 = arith.constant dense<0.000000e+00> : vector<8xf32>
    %234 = vector.multi_reduction <add>, %233, %cst_133 [1] : vector<8x16xf32> to vector<8xf32>
    %235 = vector.shape_cast %234 : vector<8xf32> to vector<8x1xf32>
    %236 = arith.addf %224, %235 : vector<8x1xf32>
    %237 = vector.extract_strided_slice %54 {offsets = [0, 360], sizes = [8, 16], strides = [1, 1]} : vector<8x384xf32> to vector<8x16xf32>
    %238 = arith.truncf %237 : vector<8x16xf32> to vector<8x16xbf16>
    %c0_134 = arith.constant 0 : index
    %c0_135 = arith.constant 0 : index
    %c15 = arith.constant 15 : index
    %c0_136 = arith.constant 0 : index
    %239 = vector.load %arg3[%c0_134, %c0_135, %c15, %c0_136] : memref<1x8x16x16xbf16, #tpu.memory_space<vmem>>, vector<1x8x1x16xbf16>
    %240 = vector.shape_cast %239 : vector<1x8x1x16xbf16> to vector<8x16xbf16>
    %241 = vector.shape_cast %238 : vector<8x16xbf16> to vector<1x8x1x16xbf16>
    tpu.vector_store %arg3[%c0_134, %c0_135, %c15, %c0_136], %241 {strides = array<i32>} : memref<1x8x16x16xbf16, #tpu.memory_space<vmem>>, vector<1x8x1x16xbf16>,
    %cst_137 = arith.constant dense<0.000000e+00> : vector<8xf32>
    %242 = vector.multi_reduction <add>, %237, %cst_137 [1] : vector<8x16xf32> to vector<8xf32>
    %243 = vector.shape_cast %242 : vector<8xf32> to vector<8x1xf32>
    %244 = arith.addf %232, %243 : vector<8x1xf32>
    %245 = arith.mulf %237, %237 : vector<8x16xf32>
    %cst_138 = arith.constant dense<0.000000e+00> : vector<8xf32>
    %246 = vector.multi_reduction <add>, %245, %cst_138 [1] : vector<8x16xf32> to vector<8xf32>
    %247 = vector.shape_cast %246 : vector<8xf32> to vector<8x1xf32>
    %248 = arith.addf %236, %247 : vector<8x1xf32>
    %c0_139 = arith.constant 0 : index
    %c0_140 = arith.constant 0 : index
    %c0_141 = arith.constant 0 : index
    %249 = vector.load %arg4[%c0_139, %c0_140, %c0_141] : memref<1x8x1xf32, #tpu.memory_space<vmem>>, vector<1x8x1xf32>
    %250 = vector.shape_cast %249 : vector<1x8x1xf32> to vector<8x1xf32>
    %251 = vector.shape_cast %244 : vector<8x1xf32> to vector<1x8x1xf32>
    tpu.vector_store %arg4[%c0_139, %c0_140, %c0_141], %251 {strides = array<i32>} : memref<1x8x1xf32, #tpu.memory_space<vmem>>, vector<1x8x1xf32>,
    %c0_142 = arith.constant 0 : index
    %c0_143 = arith.constant 0 : index
    %c0_144 = arith.constant 0 : index
    %252 = vector.load %arg5[%c0_142, %c0_143, %c0_144] : memref<1x8x1xf32, #tpu.memory_space<vmem>>, vector<1x8x1xf32>
    %253 = vector.shape_cast %252 : vector<1x8x1xf32> to vector<8x1xf32>
    %254 = vector.shape_cast %248 : vector<8x1xf32> to vector<1x8x1xf32>
    tpu.vector_store %arg5[%c0_142, %c0_143, %c0_144], %254 {strides = array<i32>} : memref<1x8x1xf32, #tpu.memory_space<vmem>>, vector<1x8x1xf32>,
    return
  }
  func.func @transform_0(%arg0: i32) -> (i32, i32, i32) {
    %c0_i32 = arith.constant 0 : i32
    %c0_i32_0 = arith.constant 0 : i32
    %c0_i32_1 = arith.constant 0 : i32
    return %arg0, %c0_i32, %c0_i32_0 : i32, i32, i32
  }
  func.func @transform_1(%arg0: i32) -> (i32, i32, i32) {
    %c0_i32 = arith.constant 0 : i32
    %c0_i32_0 = arith.constant 0 : i32
    %c0_i32_1 = arith.constant 0 : i32
    %c0_i32_2 = arith.constant 0 : i32
    return %c0_i32, %c0_i32_0, %c0_i32_1 : i32, i32, i32
  }
  func.func @transform_2(%arg0: i32) -> (i32, i32, i32, i32) {
    %c0_i32 = arith.constant 0 : i32
    %c0_i32_0 = arith.constant 0 : i32
    %c0_i32_1 = arith.constant 0 : i32
    %c0_i32_2 = arith.constant 0 : i32
    return %arg0, %c0_i32, %c0_i32_0, %c0_i32_1 : i32, i32, i32, i32
  }
  func.func @transform_3(%arg0: i32) -> (i32, i32, i32) {
    %c0_i32 = arith.constant 0 : i32
    %c0_i32_0 = arith.constant 0 : i32
    %c0_i32_1 = arith.constant 0 : i32
    return %arg0, %c0_i32, %c0_i32_0 : i32, i32, i32
  }
  func.func @transform_4(%arg0: i32) -> (i32, i32, i32) {
    %c0_i32 = arith.constant 0 : i32
    %c0_i32_0 = arith.constant 0 : i32
    %c0_i32_1 = arith.constant 0 : i32
    return %arg0, %c0_i32, %c0_i32_0 : i32, i32, i32
  }
}

module attributes {stable_mosaic.version = 11 : i64} {
  func.func @_bn_relu_kernel(%arg0: i32, %arg1: memref<1x8x16x16xbf16, #tpu.memory_space<vmem>>, %arg2: memref<8x1x1xf32, #tpu.memory_space<vmem>>, %arg3: memref<8x1x1xf32, #tpu.memory_space<vmem>>, %arg4: memref<1x8x16x16xf32, #tpu.memory_space<vmem>>) attributes {dimension_semantics = [#tpu.dimension_semantics<parallel>], iteration_bounds = array<i64: 2>, scalar_prefetch = 0 : i64, scratch_operands = 0 : i64, tpu.core_type = #tpu.core_type<tc>, window_params = [{transform_indices = @transform_0, window_bounds = array<i64: 1, 8, 16, 16>}, {pipeline_mode = #tpu.pipeline_mode<synchronous>, transform_indices = @transform_1, window_bounds = array<i64: 8, 1, 1>}, {pipeline_mode = #tpu.pipeline_mode<synchronous>, transform_indices = @transform_2, window_bounds = array<i64: 8, 1, 1>}, {transform_indices = @transform_3, window_bounds = array<i64: 1, 8, 16, 16>}]} {
    %c0 = arith.constant 0 : index
    %c0_0 = arith.constant 0 : index
    %c0_1 = arith.constant 0 : index
    %c0_2 = arith.constant 0 : index
    %0 = vector.load %arg1[%c0, %c0_0, %c0_1, %c0_2] : memref<1x8x16x16xbf16, #tpu.memory_space<vmem>>, vector<1x8x16x16xbf16>
    %1 = vector.shape_cast %0 : vector<1x8x16x16xbf16> to vector<8x16x16xbf16>
    %2 = arith.extf %1 : vector<8x16x16xbf16> to vector<8x16x16xf32>
    %c0_3 = arith.constant 0 : index
    %c0_4 = arith.constant 0 : index
    %c0_5 = arith.constant 0 : index
    %3 = vector.load %arg2[%c0_3, %c0_4, %c0_5] : memref<8x1x1xf32, #tpu.memory_space<vmem>>, vector<8x1x1xf32>
    %4 = vector.broadcast %3 : vector<8x1x1xf32> to vector<8x16x16xf32>
    %5 = arith.mulf %2, %4 : vector<8x16x16xf32>
    %c0_6 = arith.constant 0 : index
    %c0_7 = arith.constant 0 : index
    %c0_8 = arith.constant 0 : index
    %6 = vector.load %arg3[%c0_6, %c0_7, %c0_8] : memref<8x1x1xf32, #tpu.memory_space<vmem>>, vector<8x1x1xf32>
    %7 = vector.broadcast %6 : vector<8x1x1xf32> to vector<8x16x16xf32>
    %8 = arith.addf %5, %7 : vector<8x16x16xf32>
    %cst = arith.constant 0.000000e+00 : f32
    %9 = vector.broadcast %cst : f32 to vector<8x16x16xf32>
    %10 = arith.maximumf %8, %9 : vector<8x16x16xf32>
    %c0_9 = arith.constant 0 : index
    %c0_10 = arith.constant 0 : index
    %c0_11 = arith.constant 0 : index
    %c0_12 = arith.constant 0 : index
    %11 = vector.load %arg4[%c0_9, %c0_10, %c0_11, %c0_12] : memref<1x8x16x16xf32, #tpu.memory_space<vmem>>, vector<1x8x16x16xf32>
    %12 = vector.shape_cast %11 : vector<1x8x16x16xf32> to vector<8x16x16xf32>
    %13 = vector.shape_cast %10 : vector<8x16x16xf32> to vector<1x8x16x16xf32>
    tpu.vector_store %arg4[%c0_9, %c0_10, %c0_11, %c0_12], %13 {strides = array<i32>} : memref<1x8x16x16xf32, #tpu.memory_space<vmem>>, vector<1x8x16x16xf32>,
    return
  }
  func.func @transform_0(%arg0: i32) -> (i32, i32, i32, i32) {
    %c0_i32 = arith.constant 0 : i32
    %c0_i32_0 = arith.constant 0 : i32
    %c0_i32_1 = arith.constant 0 : i32
    %c0_i32_2 = arith.constant 0 : i32
    return %arg0, %c0_i32, %c0_i32_0, %c0_i32_1 : i32, i32, i32, i32
  }
  func.func @transform_1(%arg0: i32) -> (i32, i32, i32) {
    %c0_i32 = arith.constant 0 : i32
    %c0_i32_0 = arith.constant 0 : i32
    %c0_i32_1 = arith.constant 0 : i32
    %c0_i32_2 = arith.constant 0 : i32
    return %c0_i32, %c0_i32_0, %c0_i32_1 : i32, i32, i32
  }
  func.func @transform_2(%arg0: i32) -> (i32, i32, i32) {
    %c0_i32 = arith.constant 0 : i32
    %c0_i32_0 = arith.constant 0 : i32
    %c0_i32_1 = arith.constant 0 : i32
    %c0_i32_2 = arith.constant 0 : i32
    return %c0_i32, %c0_i32_0, %c0_i32_1 : i32, i32, i32
  }
  func.func @transform_3(%arg0: i32) -> (i32, i32, i32, i32) {
    %c0_i32 = arith.constant 0 : i32
    %c0_i32_0 = arith.constant 0 : i32
    %c0_i32_1 = arith.constant 0 : i32
    %c0_i32_2 = arith.constant 0 : i32
    return %arg0, %c0_i32, %c0_i32_0, %c0_i32_1 : i32, i32, i32, i32
  }
}

</mosaic_0001>

<llo_original>
// kernel: cnn_block_forward.3
$region0: #{cnn_block_forward.3}
  #allocation0 [shape = 'u32[]', space=smem, size = 0x4, offset = 0x4, fixed_abs, tag = 'smem constant byte address 0x4 - core index']
  #allocation1 [shape = 'u32[72,128]{1,0:T(1,128)}', space=vmem, size = 0x9000, scoped, tag = 'internal scratch']
  %s0 = inlined_call_operand.vmem [shape: bf16[2,8,16,16], index: 0, kind: input, shape index: {}]
  %s1 = inlined_call_operand.vmem [shape: f32[8,1,1], index: 1, kind: input, shape index: {}]
  %s2 = inlined_call_operand.vmem [shape: f32[8,1,1], index: 2, kind: input, shape index: {}]
  %s3 = inlined_call_operand.hbm [shape: f32[2,8,16,16], index: 3, kind: output, shape index: {}]
  %s4 = sld [smem:[#allocation0]]
  $region45: #{cnn_block_forward.3} parent=0
    _
  %s6 = ssub.s32 1, %s4
  %s7 = scalar_select 0, %s6, %s4
  $region1: #{cnn_block_forward.3} parent=0
    #allocation2 [shape = 'u8[131072]{0}', space=vmem, size = 0x20000, scoped, tag = 'output window, operand 0']
    #allocation3 [shape = 's32[2]{0}', space=sflag, size = 0x8, scoped, tag = 'scoped memory for cnn_block_forward.3']
    %8 = vsyncpa [#allocation3], 0
    %s9 = scalar_lea.sflag [#allocation3], 1
    %10 = vsyncpa %s9, 0
    loop: start=0, step=1, limit=4
    $region2: #{cnn_block_forward.3} parent=1 // loop_pre_header
      _
    $region3: #{cnn_block_forward.3} parent=1 // loop_header
      %s12 = sphi 0, %s16
      %p13 = scmp.ge.s32.totalorder %s12, 4
      %s22 = sphi 0, %s24
      %s25 = sphi 0, %s22
      %s26 = sphi 0, %s25
      %s42 = sphi 0, %s26
      %s46 = sphi 0, %s46
      %s48 = sphi 0, %s46
      %s49 = sphi 0, %s48
      %s63 = sphi 0, %s49
      %s67 = sphi 0, %s67
      %s69 = sphi 0, %s67
      %s70 = sphi 0, %s69
      %s84 = sphi 0, %s70
      %s90 = sphi 0, %s92
      %s93 = sphi 0, %s90
      %s94 = sphi 0, %s93
      %s110 = sphi 0, %s94
    $region4: #{cnn_block_forward.3} parent=1 // loop_header_branch
      %15 = sbr.rel (%p13) target = $region8
    $region5: #{cnn_block_forward.3} parent=1 // loop_body
      %s17 = ssub.s32 %s12, 1
      %s18 = ssub.s32 %s12, 2
      %s19 = sadd.s32 %s12, 1
      %s20 = ssub.s32 %s12, %s19
      %p21 = scmp.eq.s32.totalorder %s20, 0
      %s23 = sadd.s32 %s22, 1
      %s24 = scalar_select %p21, %s22, %s23
      %p27 = pneg %p21
      %p28 = scmp.eq.s32.totalorder %s12, 1
      %p29 = por %p27, %p28
      %p30 = scmp.ne.s32.totalorder %s22, %s25
      %p31 = scmp.eq.s32.totalorder %s12, 0
      %p32 = por %p30, %p31
      %p33 = scmp.ne.s32.totalorder %s22, %s25
      %p34 = scmp.eq.s32.totalorder %s17, 1
      %p35 = por %p33, %p34
      %p36 = scmp.ne.s32.totalorder %s25, %s26
      %p37 = scmp.eq.s32.totalorder %s17, 0
      %p38 = por %p36, %p37
      %p39 = scmp.ne.s32.totalorder %s25, %s26
      %p40 = scmp.eq.s32.totalorder %s18, 1
      %p41 = por %p39, %p40
      %p43 = scmp.ne.s32.totalorder %s26, %s42
      %p44 = scmp.eq.s32.totalorder %s18, 0
      %p45 = por %p43, %p44
      %s47 = sadd.s32 %s46, 1
      %p50 = scmp.eq.s32.totalorder %s12, 1
      %p51 = scmp.ne.s32.totalorder %s46, %s48
      %p52 = scmp.eq.s32.totalorder %s12, 0
      %p53 = por %p51, %p52
      %p54 = scmp.ne.s32.totalorder %s46, %s48
      %p55 = scmp.eq.s32.totalorder %s17, 1
      %p56 = por %p54, %p55
      %p57 = scmp.ne.s32.totalorder %s48, %s49
      %p58 = scmp.eq.s32.totalorder %s17, 0
      %p59 = por %p57, %p58
      %p60 = scmp.ne.s32.totalorder %s48, %s49
      %p61 = scmp.eq.s32.totalorder %s18, 1
      %p62 = por %p60, %p61
      %p64 = scmp.ne.s32.totalorder %s49, %s63
      %p65 = scmp.eq.s32.totalorder %s18, 0
      %p66 = por %p64, %p65
      %s68 = sadd.s32 %s67, 1
      %p71 = scmp.eq.s32.totalorder %s12, 1
      %p72 = scmp.ne.s32.totalorder %s67, %s69
      %p73 = scmp.eq.s32.totalorder %s12, 0
      %p74 = por %p72, %p73
      %p75 = scmp.ne.s32.totalorder %s67, %s69
      %p76 = scmp.eq.s32.totalorder %s17, 1
      %p77 = por %p75, %p76
      %p78 = scmp.ne.s32.totalorder %s69, %s70
      %p79 = scmp.eq.s32.totalorder %s17, 0
      %p80 = por %p78, %p79
      %p81 = scmp.ne.s32.totalorder %s69, %s70
      %p82 = scmp.eq.s32.totalorder %s18, 1
      %p83 = por %p81, %p82
      %p85 = scmp.ne.s32.totalorder %s70, %s84
      %p86 = scmp.eq.s32.totalorder %s18, 0
      %p87 = por %p85, %p86
      %s88 = ssub.s32 %s12, %s19
      %p89 = scmp.eq.s32.totalorder %s88, 0
      %s91 = sadd.s32 %s90, 1
      %s92 = scalar_select %p89, %s90, %s91
      %p95 = pneg %p89
      %p96 = scmp.eq.s32.totalorder %s12, 1
      %p97 = por %p95, %p96
      %p98 = scmp.ne.s32.totalorder %s90, %s93
      %p99 = scmp.eq.s32.totalorder %s12, 0
      %p100 = por %p98, %p99
      %p101 = scmp.ne.s32.totalorder %s90, %s93
      %p102 = scmp.eq.s32.totalorder %s17, 1
      %p103 = por %p101, %p102
      %p104 = scmp.ne.s32.totalorder %s93, %s94
      %p105 = scmp.eq.s32.totalorder %s17, 0
      %p106 = por %p104, %p105
      %p107 = scmp.ne.s32.totalorder %s93, %s94
      %p108 = scmp.eq.s32.totalorder %s18, 1
      %p109 = por %p107, %p108
      %p111 = scmp.ne.s32.totalorder %s94, %s110
      %p112 = scmp.eq.s32.totalorder %s18, 0
      %p113 = por %p111, %p112
      %p114 = scmp.le.s32.totalorder 1, %s12
      %p115 = scmp.lt.s32.totalorder %s12, 3
      %p116 = pnand %p114, %p115
      %p117 = pneg %p116
      // Predicated region
      $region9: #{cnn_block_forward.3} parent=5 // pred_check
        _
      $region10: #{cnn_block_forward.3} parent=5 // pred_check_branch
        %119 = sbr.rel (%p116) target = $region12
      $region11: #{cnn_block_forward.3} parent=5 // pred_region
        %s120 = ssub.s32 %s12, 1
        // Predicated region
        $region13: #{cnn_block_forward.3} parent=11 // pred_check
          %p121 = pneg %p59
        $region14: #{cnn_block_forward.3} parent=11 // pred_check_branch
          %123 = sbr.rel (%p121) target = $region16
        $region15: #{cnn_block_forward.3} parent=11 // pred_region
          _
        $region16: #{cnn_block_forward.3} parent=11 // pred_fallthru
          _
        // Predicated region
        $region17: #{cnn_block_forward.3} parent=11 // pred_check
          %p124 = pneg %p80
        $region18: #{cnn_block_forward.3} parent=11 // pred_check_branch
          %126 = sbr.rel (%p124) target = $region20
        $region19: #{cnn_block_forward.3} parent=11 // pred_region
          _
        $region20: #{cnn_block_forward.3} parent=11 // pred_fallthru
          _
      $region12: #{cnn_block_forward.3} parent=5 // pred_fallthru
        _
      %p127 = scmp.lt.s32.totalorder %s12, 2
      // Predicated region
      $region21: #{cnn_block_forward.3} parent=5 // pred_check
        %p128 = pneg %p127
      $region22: #{cnn_block_forward.3} parent=5 // pred_check_branch
        %130 = sbr.rel (%p128) target = $region24
      $region23: #{cnn_block_forward.3} parent=5 // pred_region
        // Predicated region
        $region25: #{cnn_block_forward.3} parent=23 // pred_check
          %p131 = pneg %p32
        $region26: #{cnn_block_forward.3} parent=23 // pred_check_branch
          %133 = sbr.rel (%p131) target = $region28
        $region27: #{cnn_block_forward.3} parent=23 // pred_region
          %p134 = scmp.lt.s32.totalorder %s12, 1
          %s135 = scalar_select %p134, %s12, 1
          %s136 = smul.addr %s135, 16
          %s137 = smul.addr %s136, 4
          %s138 = scalar_lea.vmem %s0, %s137
        $region28: #{cnn_block_forward.3} parent=23 // pred_fallthru
          _
      $region24: #{cnn_block_forward.3} parent=5 // pred_fallthru
        _
      %p139 = scmp.le.s32.totalorder 1, %s12
      %p140 = scmp.lt.s32.totalorder %s12, 3
      %p141 = pnand %p139, %p140
      %p142 = pneg %p141
      // Predicated region
      $region29: #{cnn_block_forward.3} parent=5 // pred_check
        _
      $region30: #{cnn_block_forward.3} parent=5 // pred_check_branch
        %144 = sbr.rel (%p141) target = $region32
      $region31: #{cnn_block_forward.3} parent=5 // pred_region
        %s145 = ssub.s32 %s12, 1
        %p146 = scmp.lt.s32.totalorder %s17, 1
        %s147 = scalar_select %p146, %s17, 1
        %s148 = smul.addr %s147, 16
        %s149 = smul.addr %s148, 4
        %s150 = scalar_lea.vmem %s0, %s149
        %p151 = pneg %p38
        %p152 = pneg %p35
        %p153 = pneg %p59
        %p154 = pneg %p56
        %p155 = pneg %p80
        %p156 = pneg %p77
        %p157 = pneg %p106
        %p158 = pneg %p103
        %s159 = sand.u32 %s93, 1
        %s160 = scalar_lea.sflag [#allocation3], %s159
        %s161 = sand.u32 %s93, 1
        %s162 = smul.addr %s161, 128
        %s163 = scalar_lea.vmem [#allocation2], %s162
        %p164 = scmp.lt.s32.totalorder %s17, 1
        %s165 = scalar_select %p164, %s17, 1
        %s166 = smul.addr %s165, 16
        %s167 = smul.addr %s166, 4
        %s168 = scalar_lea.vmem %s0, %s167
        %v169 = vld [vmem:[%s168] sm:$0xf]
        %v170 = vld [vmem:[%s168 + $0x4] sm:$0xf]
        %v171 = vld [vmem:[%s168 + $0x8] sm:$0xf]
        %v172 = vld [vmem:[%s168 + $0xc] sm:$0xf]
        %v173 = vld [vmem:[%s168 + $0x10] sm:$0xf]
        %v174 = vld [vmem:[%s168 + $0x14] sm:$0xf]
        %v175 = vld [vmem:[%s168 + $0x18] sm:$0xf]
        %v176 = vld [vmem:[%s168 + $0x1c] sm:$0xf]
        %v177 = vld [vmem:[%s168 + $0x20] sm:$0xf]
        %v178 = vld [vmem:[%s168 + $0x24] sm:$0xf]
        %v179 = vld [vmem:[%s168 + $0x28] sm:$0xf]
        %v180 = vld [vmem:[%s168 + $0x2c] sm:$0xf]
        %v181 = vld [vmem:[%s168 + $0x30] sm:$0xf]
        %v182 = vld [vmem:[%s168 + $0x34] sm:$0xf]
        %v183 = vld [vmem:[%s168 + $0x38] sm:$0xf]
        %v184 = vld [vmem:[%s168 + $0x3c] sm:$0xf]
        %v185 = vunpack.c.l.bf16 %v169
        %v186 = vunpack.c.l.bf16 %v170
        %v187 = vunpack.c.l.bf16 %v171
        %v188 = vunpack.c.l.bf16 %v172
        %v189 = vunpack.c.l.bf16 %v173
        %v190 = vunpack.c.l.bf16 %v174
        %v191 = vunpack.c.l.bf16 %v175
        %v192 = vunpack.c.l.bf16 %v176
        %v193 = vunpack.c.l.bf16 %v177
        %v194 = vunpack.c.l.bf16 %v178
        %v195 = vunpack.c.l.bf16 %v179
        %v196 = vunpack.c.l.bf16 %v180
        %v197 = vunpack.c.l.bf16 %v181
        %v198 = vunpack.c.l.bf16 %v182
        %v199 = vunpack.c.l.bf16 %v183
        %v200 = vunpack.c.l.bf16 %v184
        %v201 = vld [vmem:[%s1] sm:$0x1]
        %v202 = vld [vmem:[%s1 + $0x1] sm:$0x1]
        %v203 = vld [vmem:[%s1 + $0x2] sm:$0x1]
        %v204 = vld [vmem:[%s1 + $0x3] sm:$0x1]
        %v205 = vld [vmem:[%s1 + $0x4] sm:$0x1]
        %v206 = vld [vmem:[%s1 + $0x5] sm:$0x1]
        %v207 = vld [vmem:[%s1 + $0x6] sm:$0x1]
        %v208 = vld [vmem:[%s1 + $0x7] sm:$0x1]
        %v217 = vperm.slane %v201, 0
        %v218 = vperm.slane %v202, 0
        %v219 = vperm.slane %v203, 0
        %v220 = vperm.slane %v204, 0
        %v221 = vperm.slane %v205, 0
        %v222 = vperm.slane %v206, 0
        %v223 = vperm.slane %v207, 0
        %v224 = vperm.slane %v208, 0
        %225 = vset.pattern.permute.xlu0 0
        %226 = vperm.xlu0 %225, %v217
        %v227 = vpop.permute.xlu0 %226
        %229 = vset.pattern.permute.xlu0 0
        %230 = vperm.xlu0 %229, %v218
        %v231 = vpop.permute.xlu0 %230
        %233 = vset.pattern.permute.xlu0 0
        %234 = vperm.xlu0 %233, %v219
        %v235 = vpop.permute.xlu0 %234
        %237 = vset.pattern.permute.xlu0 0
        %238 = vperm.xlu0 %237, %v220
        %v239 = vpop.permute.xlu0 %238
        %241 = vset.pattern.permute.xlu0 0
        %242 = vperm.xlu0 %241, %v221
        %v243 = vpop.permute.xlu0 %242
        %245 = vset.pattern.permute.xlu0 0
        %246 = vperm.xlu0 %245, %v222
        %v247 = vpop.permute.xlu0 %246
        %249 = vset.pattern.permute.xlu0 0
        %250 = vperm.xlu0 %249, %v223
        %v251 = vpop.permute.xlu0 %250
        %253 = vset.pattern.permute.xlu0 0
        %254 = vperm.xlu0 %253, %v224
        %v255 = vpop.permute.xlu0 %254
        %v257 = vmul.f32 %v185, %v227
        %v258 = vmul.f32 %v186, %v227
        %v259 = vmul.f32 %v187, %v231
        %v260 = vmul.f32 %v188, %v231
        %v261 = vmul.f32 %v189, %v235
        %v262 = vmul.f32 %v190, %v235
        %v263 = vmul.f32 %v191, %v239
        %v264 = vmul.f32 %v192, %v239
        %v265 = vmul.f32 %v193, %v243
        %v266 = vmul.f32 %v194, %v243
        %v267 = vmul.f32 %v195, %v247
        %v268 = vmul.f32 %v196, %v247
        %v269 = vmul.f32 %v197, %v251
        %v270 = vmul.f32 %v198, %v251
        %v271 = vmul.f32 %v199, %v255
        %v272 = vmul.f32 %v200, %v255
        %v273 = vld [vmem:[%s2] sm:$0x1]
        %v274 = vld [vmem:[%s2 + $0x1] sm:$0x1]
        %v275 = vld [vmem:[%s2 + $0x2] sm:$0x1]
        %v276 = vld [vmem:[%s2 + $0x3] sm:$0x1]
        %v277 = vld [vmem:[%s2 + $0x4] sm:$0x1]
        %v278 = vld [vmem:[%s2 + $0x5] sm:$0x1]
        %v279 = vld [vmem:[%s2 + $0x6] sm:$0x1]
        %v280 = vld [vmem:[%s2 + $0x7] sm:$0x1]
        %v289 = vperm.slane %v273, 0
        %v290 = vperm.slane %v274, 0
        %v291 = vperm.slane %v275, 0
        %v292 = vperm.slane %v276, 0
        %v293 = vperm.slane %v277, 0
        %v294 = vperm.slane %v278, 0
        %v295 = vperm.slane %v279, 0
        %v296 = vperm.slane %v280, 0
        %297 = vset.pattern.permute.xlu0 0
        %298 = vperm.xlu0 %297, %v289
        %v299 = vpop.permute.xlu0 %298
        %301 = vset.pattern.permute.xlu0 0
        %302 = vperm.xlu0 %301, %v290
        %v303 = vpop.permute.xlu0 %302
        %305 = vset.pattern.permute.xlu0 0
        %306 = vperm.xlu0 %305, %v291
        %v307 = vpop.permute.xlu0 %306
        %309 = vset.pattern.permute.xlu0 0
        %310 = vperm.xlu0 %309, %v292
        %v311 = vpop.permute.xlu0 %310
        %313 = vset.pattern.permute.xlu0 0
        %314 = vperm.xlu0 %313, %v293
        %v315 = vpop.permute.xlu0 %314
        %317 = vset.pattern.permute.xlu0 0
        %318 = vperm.xlu0 %317, %v294
        %v319 = vpop.permute.xlu0 %318
        %321 = vset.pattern.permute.xlu0 0
        %322 = vperm.xlu0 %321, %v295
        %v323 = vpop.permute.xlu0 %322
        %325 = vset.pattern.permute.xlu0 0
        %326 = vperm.xlu0 %325, %v296
        %v327 = vpop.permute.xlu0 %326
        %v329 = vadd.f32 %v257, %v299
        %v330 = vadd.f32 %v258, %v299
        %v331 = vadd.f32 %v259, %v303
        %v332 = vadd.f32 %v260, %v303
        %v333 = vadd.f32 %v261, %v307
        %v334 = vadd.f32 %v262, %v307
        %v335 = vadd.f32 %v263, %v311
        %v336 = vadd.f32 %v264, %v311
        %v337 = vadd.f32 %v265, %v315
        %v338 = vadd.f32 %v266, %v315
        %v339 = vadd.f32 %v267, %v319
        %v340 = vadd.f32 %v268, %v319
        %v341 = vadd.f32 %v269, %v323
        %v342 = vadd.f32 %v270, %v323
        %v343 = vadd.f32 %v271, %v327
        %v344 = vadd.f32 %v272, %v327
        %v345 = vmax.f32 %v329, 0.0
        %v346 = vmax.f32 %v330, 0.0
        %v347 = vmax.f32 %v331, 0.0
        %v348 = vmax.f32 %v332, 0.0
        %v349 = vmax.f32 %v333, 0.0
        %v350 = vmax.f32 %v334, 0.0
        %v351 = vmax.f32 %v335, 0.0
        %v352 = vmax.f32 %v336, 0.0
        %v353 = vmax.f32 %v337, 0.0
        %v354 = vmax.f32 %v338, 0.0
        %v355 = vmax.f32 %v339, 0.0
        %v356 = vmax.f32 %v340, 0.0
        %v357 = vmax.f32 %v341, 0.0
        %v358 = vmax.f32 %v342, 0.0
        %v359 = vmax.f32 %v343, 0.0
        %v360 = vmax.f32 %v344, 0.0
        %vm361 = vcmask 130048
        %362 = vst.msk [vmem:[%s163] sm:$0xff] %vm361, %v345
        %363 = vst.msk [vmem:[%s163 + $0x8] sm:$0xff] %vm361, %v346
        %364 = vst.msk [vmem:[%s163 + $0x10] sm:$0xff] %vm361, %v347
        %365 = vst.msk [vmem:[%s163 + $0x18] sm:$0xff] %vm361, %v348
        %366 = vst.msk [vmem:[%s163 + $0x20] sm:$0xff] %vm361, %v349
        %367 = vst.msk [vmem:[%s163 + $0x28] sm:$0xff] %vm361, %v350
        %368 = vst.msk [vmem:[%s163 + $0x30] sm:$0xff] %vm361, %v351
        %369 = vst.msk [vmem:[%s163 + $0x38] sm:$0xff] %vm361, %v352
        %370 = vst.msk [vmem:[%s163 + $0x40] sm:$0xff] %vm361, %v353
        %371 = vst.msk [vmem:[%s163 + $0x48] sm:$0xff] %vm361, %v354
        %372 = vst.msk [vmem:[%s163 + $0x50] sm:$0xff] %vm361, %v355
        %373 = vst.msk [vmem:[%s163 + $0x58] sm:$0xff] %vm361, %v356
        %374 = vst.msk [vmem:[%s163 + $0x60] sm:$0xff] %vm361, %v357
        %375 = vst.msk [vmem:[%s163 + $0x68] sm:$0xff] %vm361, %v358
        %376 = vst.msk [vmem:[%s163 + $0x70] sm:$0xff] %vm361, %v359
        %377 = vst.msk [vmem:[%s163 + $0x78] sm:$0xff] %vm361, %v360
        %s378 = sand.u32 %s93, 1
        %s379 = scalar_lea.sflag [#allocation3], %s378
        %s380 = sand.u32 %s93, 1
        %s381 = smul.addr %s380, 128
        %s382 = scalar_lea.vmem [#allocation2], %s381
        // Predicated region
        $region33: #{cnn_block_forward.3} parent=31 // pred_check
          %p383 = pneg %p103
        $region34: #{cnn_block_forward.3} parent=31 // pred_check_branch
          %385 = sbr.rel (%p383) target = $region36
        $region35: #{cnn_block_forward.3} parent=31 // pred_region
          %387 = vsyncadd %s379, 0
          %s388 = smul.addr %s17, 16
          %s389 = smul.addr %s388, 8
          %s390 = scalar_lea.hbm %s3, %s389
          %s391 = sshll.u32 %s382, 4
          %s392 = int_to_ptr.vmem [resolvable:$true] %s391
          %s393 = sshll.u32 %s390, 4
          %s394 = int_to_ptr.hbm [resolvable:$true] %s393
          %399 = dma.vmem_to_hbm [thread:$0]  %s392, 2048, %s394, %s379, 128, 128, 8
        $region36: #{cnn_block_forward.3} parent=31 // pred_fallthru
          _
      $region32: #{cnn_block_forward.3} parent=5 // pred_fallthru
        _
      %p400 = scmp.le.s32.totalorder 2, %s12
      // Predicated region
      $region37: #{cnn_block_forward.3} parent=5 // pred_check
        %p401 = pneg %p400
      $region38: #{cnn_block_forward.3} parent=5 // pred_check_branch
        %403 = sbr.rel (%p401) target = $region40
      $region39: #{cnn_block_forward.3} parent=5 // pred_region
        %s404 = ssub.s32 %s12, 2
        // Predicated region
        $region41: #{cnn_block_forward.3} parent=39 // pred_check
          %p405 = pneg %p109
        $region42: #{cnn_block_forward.3} parent=39 // pred_check_branch
          %407 = sbr.rel (%p405) target = $region44
        $region43: #{cnn_block_forward.3} parent=39 // pred_region
          %s408 = sand.u32 %s94, 1
          %s409 = scalar_lea.sflag [#allocation3], %s408
          %s410 = sand.u32 %s94, 1
          %s411 = smul.addr %s410, 128
          %s412 = scalar_lea.vmem [#allocation2], %s411
          %414 = dma.done %s409, 2048
        $region44: #{cnn_block_forward.3} parent=39 // pred_fallthru
          _
      $region40: #{cnn_block_forward.3} parent=5 // pred_fallthru
        _
    $region6: #{cnn_block_forward.3} parent=1 // loop_footer
      %s16 = sadd.s32 1, %s12
    $region7: #{cnn_block_forward.3} parent=1 // loop_footer_branch
      %11 = sbr.rel target = $region3
    $region8: #{cnn_block_forward.3} parent=1 // loop_exit
      _
    %415 = vsyncpa [#allocation3], 1
    %s416 = scalar_lea.sflag [#allocation3], 1
    %417 = vsyncpa %s416, 1

// kernel: cnn_block_forward.2
$region0: #{cnn_block_forward.2}
  #allocation0 [shape = 'u32[]', space=smem, size = 0x4, offset = 0x4, fixed_abs, tag = 'smem constant byte address 0x4 - core index']
  #allocation1 [shape = 'u32[72,128]{1,0:T(1,128)}', space=vmem, size = 0x9000, scoped, tag = 'internal scratch']
  %s0 = inlined_call_operand.vmem [shape: bf16[2,4,456], index: 0, kind: input, shape index: {}]
  %s1 = inlined_call_operand.vmem [shape: bf16[9,8,4], index: 1, kind: input, shape index: {}]
  %s2 = inlined_call_operand.vmem [shape: bf16[2,8,16,16], index: 2, kind: output, shape index: {0}]
  %s3 = inlined_call_operand.vmem [shape: f32[2,8,1], index: 3, kind: output, shape index: {1}]
  %s4 = inlined_call_operand.vmem [shape: f32[2,8,1], index: 4, kind: output, shape index: {2}]
  %5 = xla_tuple %s2, %s3, %s4
  %s6 = sld [smem:[#allocation0]]
  $region57: #{cnn_block_forward.2} parent=0
    _
  %s8 = ssub.s32 1, %s6
  %s9 = scalar_select 0, %s8, %s6
  loop: start=0, step=1, limit=4
  $region2: #{cnn_block_forward.2} parent=0 // loop_pre_header
    _
  $region3: #{cnn_block_forward.2} parent=0 // loop_header
    %s11 = sphi 0, %s15
    %p12 = scmp.ge.s32.totalorder %s11, 4
    %s21 = sphi 0, %s23
    %s24 = sphi 0, %s21
    %s25 = sphi 0, %s24
    %s41 = sphi 0, %s25
    %s45 = sphi 0, %s45
    %s47 = sphi 0, %s45
    %s48 = sphi 0, %s47
    %s62 = sphi 0, %s48
    %s68 = sphi 0, %s70
    %s71 = sphi 0, %s68
    %s72 = sphi 0, %s71
    %s88 = sphi 0, %s72
    %s94 = sphi 0, %s96
    %s97 = sphi 0, %s94
    %s98 = sphi 0, %s97
    %s114 = sphi 0, %s98
    %s120 = sphi 0, %s122
    %s123 = sphi 0, %s120
    %s124 = sphi 0, %s123
    %s140 = sphi 0, %s124
  $region4: #{cnn_block_forward.2} parent=0 // loop_header_branch
    %14 = sbr.rel (%p12) target = $region8
  $region5: #{cnn_block_forward.2} parent=0 // loop_body
    %s16 = ssub.s32 %s11, 1
    %s17 = ssub.s32 %s11, 2
    %s18 = sadd.s32 %s11, 1
    %s19 = ssub.s32 %s11, %s18
    %p20 = scmp.eq.s32.totalorder %s19, 0
    %s22 = sadd.s32 %s21, 1
    %s23 = scalar_select %p20, %s21, %s22
    %p26 = pneg %p20
    %p27 = scmp.eq.s32.totalorder %s11, 1
    %p28 = por %p26, %p27
    %p29 = scmp.ne.s32.totalorder %s21, %s24
    %p30 = scmp.eq.s32.totalorder %s11, 0
    %p31 = por %p29, %p30
    %p32 = scmp.ne.s32.totalorder %s21, %s24
    %p33 = scmp.eq.s32.totalorder %s16, 1
    %p34 = por %p32, %p33
    %p35 = scmp.ne.s32.totalorder %s24, %s25
    %p36 = scmp.eq.s32.totalorder %s16, 0
    %p37 = por %p35, %p36
    %p38 = scmp.ne.s32.totalorder %s24, %s25
    %p39 = scmp.eq.s32.totalorder %s17, 1
    %p40 = por %p38, %p39
    %p42 = scmp.ne.s32.totalorder %s25, %s41
    %p43 = scmp.eq.s32.totalorder %s17, 0
    %p44 = por %p42, %p43
    %s46 = sadd.s32 %s45, 1
    %p49 = scmp.eq.s32.totalorder %s11, 1
    %p50 = scmp.ne.s32.totalorder %s45, %s47
    %p51 = scmp.eq.s32.totalorder %s11, 0
    %p52 = por %p50, %p51
    %p53 = scmp.ne.s32.totalorder %s45, %s47
    %p54 = scmp.eq.s32.totalorder %s16, 1
    %p55 = por %p53, %p54
    %p56 = scmp.ne.s32.totalorder %s47, %s48
    %p57 = scmp.eq.s32.totalorder %s16, 0
    %p58 = por %p56, %p57
    %p59 = scmp.ne.s32.totalorder %s47, %s48
    %p60 = scmp.eq.s32.totalorder %s17, 1
    %p61 = por %p59, %p60
    %p63 = scmp.ne.s32.totalorder %s48, %s62
    %p64 = scmp.eq.s32.totalorder %s17, 0
    %p65 = por %p63, %p64
    %s66 = ssub.s32 %s11, %s18
    %p67 = scmp.eq.s32.totalorder %s66, 0
    %s69 = sadd.s32 %s68, 1
    %s70 = scalar_select %p67, %s68, %s69
    %p73 = pneg %p67
    %p74 = scmp.eq.s32.totalorder %s11, 1
    %p75 = por %p73, %p74
    %p76 = scmp.ne.s32.totalorder %s68, %s71
    %p77 = scmp.eq.s32.totalorder %s11, 0
    %p78 = por %p76, %p77
    %p79 = scmp.ne.s32.totalorder %s68, %s71
    %p80 = scmp.eq.s32.totalorder %s16, 1
    %p81 = por %p79, %p80
    %p82 = scmp.ne.s32.totalorder %s71, %s72
    %p83 = scmp.eq.s32.totalorder %s16, 0
    %p84 = por %p82, %p83
    %p85 = scmp.ne.s32.totalorder %s71, %s72
    %p86 = scmp.eq.s32.totalorder %s17, 1
    %p87 = por %p85, %p86
    %p89 = scmp.ne.s32.totalorder %s72, %s88
    %p90 = scmp.eq.s32.totalorder %s17, 0
    %p91 = por %p89, %p90
    %s92 = ssub.s32 %s11, %s18
    %p93 = scmp.eq.s32.totalorder %s92, 0
    %s95 = sadd.s32 %s94, 1
    %s96 = scalar_select %p93, %s94, %s95
    %p99 = pneg %p93
    %p100 = scmp.eq.s32.totalorder %s11, 1
    %p101 = por %p99, %p100
    %p102 = scmp.ne.s32.totalorder %s94, %s97
    %p103 = scmp.eq.s32.totalorder %s11, 0
    %p104 = por %p102, %p103
    %p105 = scmp.ne.s32.totalorder %s94, %s97
    %p106 = scmp.eq.s32.totalorder %s16, 1
    %p107 = por %p105, %p106
    %p108 = scmp.ne.s32.totalorder %s97, %s98
    %p109 = scmp.eq.s32.totalorder %s16, 0
    %p110 = por %p108, %p109
    %p111 = scmp.ne.s32.totalorder %s97, %s98
    %p112 = scmp.eq.s32.totalorder %s17, 1
    %p113 = por %p111, %p112
    %p115 = scmp.ne.s32.totalorder %s98, %s114
    %p116 = scmp.eq.s32.totalorder %s17, 0
    %p117 = por %p115, %p116
    %s118 = ssub.s32 %s11, %s18
    %p119 = scmp.eq.s32.totalorder %s118, 0
    %s121 = sadd.s32 %s120, 1
    %s122 = scalar_select %p119, %s120, %s121
    %p125 = pneg %p119
    %p126 = scmp.eq.s32.totalorder %s11, 1
    %p127 = por %p125, %p126
    %p128 = scmp.ne.s32.totalorder %s120, %s123
    %p129 = scmp.eq.s32.totalorder %s11, 0
    %p130 = por %p128, %p129
    %p131 = scmp.ne.s32.totalorder %s120, %s123
    %p132 = scmp.eq.s32.totalorder %s16, 1
    %p133 = por %p131, %p132
    %p134 = scmp.ne.s32.totalorder %s123, %s124
    %p135 = scmp.eq.s32.totalorder %s16, 0
    %p136 = por %p134, %p135
    %p137 = scmp.ne.s32.totalorder %s123, %s124
    %p138 = scmp.eq.s32.totalorder %s17, 1
    %p139 = por %p137, %p138
    %p141 = scmp.ne.s32.totalorder %s124, %s140
    %p142 = scmp.eq.s32.totalorder %s17, 0
    %p143 = por %p141, %p142
    %p144 = scmp.le.s32.totalorder 1, %s11
    %p145 = scmp.lt.s32.totalorder %s11, 3
    %p146 = pnand %p144, %p145
    %p147 = pneg %p146
    // Predicated region
    $region9: #{cnn_block_forward.2} parent=5 // pred_check
      _
    $region10: #{cnn_block_forward.2} parent=5 // pred_check_branch
      %149 = sbr.rel (%p146) target = $region12
    $region11: #{cnn_block_forward.2} parent=5 // pred_region
      %s150 = ssub.s32 %s11, 1
      // Predicated region
      $region13: #{cnn_block_forward.2} parent=11 // pred_check
        %p151 = pneg %p58
      $region14: #{cnn_block_forward.2} parent=11 // pred_check_branch
        %153 = sbr.rel (%p151) target = $region16
      $region15: #{cnn_block_forward.2} parent=11 // pred_region
        _
      $region16: #{cnn_block_forward.2} parent=11 // pred_fallthru
        _
    $region12: #{cnn_block_forward.2} parent=5 // pred_fallthru
      _
    %p154 = scmp.lt.s32.totalorder %s11, 2
    // Predicated region
    $region17: #{cnn_block_forward.2} parent=5 // pred_check
      %p155 = pneg %p154
    $region18: #{cnn_block_forward.2} parent=5 // pred_check_branch
      %157 = sbr.rel (%p155) target = $region20
    $region19: #{cnn_block_forward.2} parent=5 // pred_region
      // Predicated region
      $region21: #{cnn_block_forward.2} parent=19 // pred_check
        %p158 = pneg %p31
      $region22: #{cnn_block_forward.2} parent=19 // pred_check_branch
        %160 = sbr.rel (%p158) target = $region24
      $region23: #{cnn_block_forward.2} parent=19 // pred_region
        %p161 = scmp.lt.s32.totalorder %s11, 1
        %s162 = scalar_select %p161, %s11, 1
        %s163 = smul.addr %s162, 4
        %s164 = smul.addr %s163, 2
        %s165 = scalar_lea.vmem %s0, %s164
      $region24: #{cnn_block_forward.2} parent=19 // pred_fallthru
        _
    $region20: #{cnn_block_forward.2} parent=5 // pred_fallthru
      _
    %p166 = scmp.le.s32.totalorder 1, %s11
    %p167 = scmp.lt.s32.totalorder %s11, 3
    %p168 = pnand %p166, %p167
    %p169 = pneg %p168
    // Predicated region
    $region25: #{cnn_block_forward.2} parent=5 // pred_check
      _
    $region26: #{cnn_block_forward.2} parent=5 // pred_check_branch
      %171 = sbr.rel (%p168) target = $region28
    $region27: #{cnn_block_forward.2} parent=5 // pred_region
      %s172 = ssub.s32 %s11, 1
      %p173 = scmp.lt.s32.totalorder %s16, 1
      %s174 = scalar_select %p173, %s16, 1
      %s175 = smul.addr %s174, 4
      %s176 = smul.addr %s175, 2
      %s177 = scalar_lea.vmem %s0, %s176
      %p178 = pneg %p37
      %p179 = pneg %p34
      %p180 = pneg %p58
      %p181 = pneg %p55
      %p182 = pneg %p84
      %p183 = pneg %p81
      %p184 = scmp.lt.s32.totalorder %s16, 1
      %s185 = scalar_select %p184, %s16, 1
      %s186 = smul.addr %s185, 16
      %s187 = smul.addr %s186, 4
      %s188 = scalar_lea.vmem %s2, %s187
      %p189 = pneg %p110
      %p190 = pneg %p107
      %p191 = scmp.lt.s32.totalorder %s16, 1
      %s192 = scalar_select %p191, %s16, 1
      %s193 = smul.addr %s192, 8
      %s194 = scalar_lea.vmem %s3, %s193
      %p195 = pneg %p136
      %p196 = pneg %p133
      %p197 = scmp.lt.s32.totalorder %s16, 1
      %s198 = scalar_select %p197, %s16, 1
      %s199 = smul.addr %s198, 8
      %s200 = scalar_lea.vmem %s4, %s199
      %p201 = scmp.lt.s32.totalorder %s16, 1
      %s202 = scalar_select %p201, %s16, 1
      %s203 = smul.addr %s202, 4
      %s204 = smul.addr %s203, 2
      %s205 = scalar_lea.vmem %s0, %s204
      %p206 = scmp.lt.s32.totalorder %s16, 1
      %s207 = scalar_select %p206, %s16, 1
      %s208 = smul.addr %s207, 16
      %s209 = smul.addr %s208, 4
      %s210 = scalar_lea.vmem %s2, %s209
      %p211 = scmp.lt.s32.totalorder %s16, 1
      %s212 = scalar_select %p211, %s16, 1
      %s213 = smul.addr %s212, 8
      %s214 = scalar_lea.vmem %s3, %s213
      %p215 = scmp.lt.s32.totalorder %s16, 1
      %s216 = scalar_select %p215, %s16, 1
      %s217 = smul.addr %s216, 8
      %s218 = scalar_lea.vmem %s4, %s217
      %v220 = vld [vmem:[%s205] sm:$0x3f]
      %v221 = vld [vmem:[%s1] sm:$0xf]
      %v222 = vld [vmem:[%s205] sm:$0xff]
      %s223 = scalar_lea.vmem %s1, 4
      %v224 = vld [vmem:[%s223] sm:$0xf]
      %226 = vst [vmem:[#allocation1] ss:$4 sm:$0xff] %v222
      %v227 = vld.sshfl [vmem:[#allocation1] sm:$0xff pattern:$0x73625140]
      %v229 = vld.sshfl [vmem:[#allocation1 + $0x8] sm:$0xff pattern:$0x73625140]
      %v231 = vld.sshfl [vmem:[#allocation1 + $0x10] sm:$0xff pattern:$0x73625140]
      %v233 = vld.sshfl [vmem:[#allocation1 + $0x18] sm:$0xff pattern:$0x73625140]
      %235 = vrot.lane.b32.xlu0 %v227, 127
      %v236 = vpop.permute.xlu0 %235
      %237 = vrot.lane.b32.xlu0 %v229, 127
      %v238 = vpop.permute.xlu0 %237
      %239 = vrot.lane.b32.xlu0 %v231, 127
      %v240 = vpop.permute.xlu0 %239
      %241 = vrot.lane.b32.xlu0 %v233, 127
      %v242 = vpop.permute.xlu0 %241
      %vm243 = vcmask 1039360
      %v244 = vsel %vm243, %v236, %v238
      %v245 = vsel %vm243, %v238, %v240
      %v246 = vsel %vm243, %v240, %v242
      %vm247 = vcmask 31744
      %v249 = vsel %vm247, %v224, 0
      %vm251 = vcmask 1041408
      %v253 = vsel %vm251, %v244, 0
      %v256 = vsel %vm251, %v245, 0
      %v259 = vsel %vm251, %v246, 0
      %261 = vmatpush.bf16.msra.mxu0 0
      %262 = vmatpush.bf16.msra.mxu0 0
      %263 = vmatpush.bf16.msra.mxu0 0
      %264 = vmatpush.bf16.msra.mxu0 0
      %265 = vmatpush.bf16.msra.mxu0 0
      %266 = vmatpush.bf16.msra.mxu0 0
      %267 = vmatpush.bf16.msra.mxu0 0
      %268 = vmatpush.bf16.msra.mxu0 %v253
      %269 = vmatmul.bf16.gmra.mxu0 %v249
      %v270 = vpop.f32.mrf.mxu0
      %v271 = vadd.f32 0.0, %v270
      %v272 = vpop.f32.mrf.mxu0
      %273 = vdwg.mxu0
      %274 = vmatpush.bf16.msra.mxu0 0
      %275 = vmatpush.bf16.msra.mxu0 0
      %276 = vmatpush.bf16.msra.mxu0 0
      %277 = vmatpush.bf16.msra.mxu0 0
      %278 = vmatpush.bf16.msra.mxu0 0
      %279 = vmatpush.bf16.msra.mxu0 0
      %280 = vmatpush.bf16.msra.mxu0 0
      %281 = vmatpush.bf16.msra.mxu0 %v256
      %282 = vmatmul.bf16.gmra.mxu0 %v249
      %v283 = vpop.f32.mrf.mxu0
      %v284 = vadd.f32 0.0, %v283
      %v285 = vpop.f32.mrf.mxu0
      %286 = vdwg.mxu0
      %287 = vmatpush.bf16.msra.mxu0 0
      %288 = vmatpush.bf16.msra.mxu0 0
      %289 = vmatpush.bf16.msra.mxu0 0
      %290 = vmatpush.bf16.msra.mxu0 0
      %291 = vmatpush.bf16.msra.mxu0 0
      %292 = vmatpush.bf16.msra.mxu0 0
      %293 = vmatpush.bf16.msra.mxu0 0
      %294 = vmatpush.bf16.msra.mxu0 %v259
      %295 = vmatmul.bf16.gmra.mxu0 %v249
      %v296 = vpop.f32.mrf.mxu0
      %v297 = vadd.f32 0.0, %v296
      %v298 = vpop.f32.mrf.mxu0
      %299 = vdwg.mxu0
      %301 = vst [vmem:[#allocation1] ss:$4 sm:$0xff] %v220
      %v302 = vld.sshfl [vmem:[#allocation1] sm:$0xff pattern:$0x73625140]
      %v303 = vld.sshfl [vmem:[#allocation1 + $0x8] sm:$0xff pattern:$0x73625140]
      %v304 = vld.sshfl [vmem:[#allocation1 + $0x10] sm:$0xff pattern:$0x73625140]
      %v306 = vsel %vm247, %v221, 0
      %v308 = vsel %vm251, %v302, 0
      %v310 = vsel %vm251, %v303, 0
      %v312 = vsel %vm251, %v304, 0
      %314 = vmatpush.bf16.msra.mxu0 0
      %315 = vmatpush.bf16.msra.mxu0 0
      %316 = vmatpush.bf16.msra.mxu0 0
      %317 = vmatpush.bf16.msra.mxu0 0
      %318 = vmatpush.bf16.msra.mxu0 0
      %319 = vmatpush.bf16.msra.mxu0 0
      %320 = vmatpush.bf16.msra.mxu0 0
      %321 = vmatpush.bf16.msra.mxu0 %v308
      %322 = vmatmul.bf16.gmra.mxu0 %v306
      %v323 = vpop.f32.mrf.mxu0
      %v324 = vadd.f32 %v271, %v323
      %v325 = vpop.f32.mrf.mxu0
      %326 = vdwg.mxu0
      %327 = vmatpush.bf16.msra.mxu0 0
      %328 = vmatpush.bf16.msra.mxu0 0
      %329 = vmatpush.bf16.msra.mxu0 0
      %330 = vmatpush.bf16.msra.mxu0 0
      %331 = vmatpush.bf16.msra.mxu0 0
      %332 = vmatpush.bf16.msra.mxu0 0
      %333 = vmatpush.bf16.msra.mxu0 0
      %334 = vmatpush.bf16.msra.mxu0 %v310
      %335 = vmatmul.bf16.gmra.mxu0 %v306
      %v336 = vpop.f32.mrf.mxu0
      %v337 = vadd.f32 %v284, %v336
      %v338 = vpop.f32.mrf.mxu0
      %339 = vdwg.mxu0
      %340 = vmatpush.bf16.msra.mxu0 0
      %341 = vmatpush.bf16.msra.mxu0 0
      %342 = vmatpush.bf16.msra.mxu0 0
      %343 = vmatpush.bf16.msra.mxu0 0
      %344 = vmatpush.bf16.msra.mxu0 0
      %345 = vmatpush.bf16.msra.mxu0 0
      %346 = vmatpush.bf16.msra.mxu0 0
      %347 = vmatpush.bf16.msra.mxu0 %v312
      %348 = vmatmul.bf16.gmra.mxu0 %v306
      %v349 = vpop.f32.mrf.mxu0
      %v350 = vadd.f32 %v297, %v349
      %v351 = vpop.f32.mrf.mxu0
      %352 = vdwg.mxu0
      %v353 = vld [vmem:[%s205] sm:$0xff]
      %s354 = scalar_lea.vmem %s1, 8
      %v355 = vld [vmem:[%s354] sm:$0xf]
      %357 = vst [vmem:[#allocation1] ss:$4 sm:$0xff] %v353
      %v358 = vld.sshfl [vmem:[#allocation1] sm:$0xff pattern:$0x73625140]
      %v360 = vld.sshfl [vmem:[#allocation1 + $0x8] sm:$0xff pattern:$0x73625140]
      %v362 = vld.sshfl [vmem:[#allocation1 + $0x10] sm:$0xff pattern:$0x73625140]
      %v364 = vld.sshfl [vmem:[#allocation1 + $0x18] sm:$0xff pattern:$0x73625140]
      %366 = vrot.lane.b32.xlu0 %v358, 126
      %v367 = vpop.permute.xlu0 %366
      %368 = vrot.lane.b32.xlu0 %v360, 126
      %v369 = vpop.permute.xlu0 %368
      %370 = vrot.lane.b32.xlu0 %v362, 126
      %v371 = vpop.permute.xlu0 %370
      %372 = vrot.lane.b32.xlu0 %v364, 126
      %v373 = vpop.permute.xlu0 %372
      %vm374 = vcmask 1031168
      %v375 = vsel %vm374, %v367, %v369
      %v376 = vsel %vm374, %v369, %v371
      %v377 = vsel %vm374, %v371, %v373
      %v379 = vsel %vm247, %v355, 0
      %v382 = vsel %vm251, %v375, 0
      %v385 = vsel %vm251, %v376, 0
      %v388 = vsel %vm251, %v377, 0
      %390 = vmatpush.bf16.msra.mxu0 0
      %391 = vmatpush.bf16.msra.mxu0 0
      %392 = vmatpush.bf16.msra.mxu0 0
      %393 = vmatpush.bf16.msra.mxu0 0
      %394 = vmatpush.bf16.msra.mxu0 0
      %395 = vmatpush.bf16.msra.mxu0 0
      %396 = vmatpush.bf16.msra.mxu0 0
      %397 = vmatpush.bf16.msra.mxu0 %v382
      %398 = vmatmul.bf16.gmra.mxu0 %v379
      %v399 = vpop.f32.mrf.mxu0
      %v400 = vadd.f32 0.0, %v399
      %v401 = vpop.f32.mrf.mxu0
      %402 = vdwg.mxu0
      %403 = vmatpush.bf16.msra.mxu0 0
      %404 = vmatpush.bf16.msra.mxu0 0
      %405 = vmatpush.bf16.msra.mxu0 0
      %406 = vmatpush.bf16.msra.mxu0 0
      %407 = vmatpush.bf16.msra.mxu0 0
      %408 = vmatpush.bf16.msra.mxu0 0
      %409 = vmatpush.bf16.msra.mxu0 0
      %410 = vmatpush.bf16.msra.mxu0 %v385
      %411 = vmatmul.bf16.gmra.mxu0 %v379
      %v412 = vpop.f32.mrf.mxu0
      %v413 = vadd.f32 0.0, %v412
      %v414 = vpop.f32.mrf.mxu0
      %415 = vdwg.mxu0
      %416 = vmatpush.bf16.msra.mxu0 0
      %417 = vmatpush.bf16.msra.mxu0 0
      %418 = vmatpush.bf16.msra.mxu0 0
      %419 = vmatpush.bf16.msra.mxu0 0
      %420 = vmatpush.bf16.msra.mxu0 0
      %421 = vmatpush.bf16.msra.mxu0 0
      %422 = vmatpush.bf16.msra.mxu0 0
      %423 = vmatpush.bf16.msra.mxu0 %v388
      %424 = vmatmul.bf16.gmra.mxu0 %v379
      %v425 = vpop.f32.mrf.mxu0
      %v426 = vadd.f32 0.0, %v425
      %v427 = vpop.f32.mrf.mxu0
      %428 = vdwg.mxu0
      %v429 = vadd.f32 %v324, %v400
      %v430 = vadd.f32 %v337, %v413
      %v431 = vadd.f32 %v350, %v426
      %v432 = vld [vmem:[%s205] sm:$0xff]
      %s433 = scalar_lea.vmem %s1, 12
      %v434 = vld [vmem:[%s433] sm:$0xf]
      %436 = vst [vmem:[#allocation1] ss:$4 sm:$0xff] %v432
      %v437 = vld.sshfl [vmem:[#allocation1] sm:$0xff pattern:$0x73625140]
      %v439 = vld.sshfl [vmem:[#allocation1 + $0x8] sm:$0xff pattern:$0x73625140]
      %v441 = vld.sshfl [vmem:[#allocation1 + $0x10] sm:$0xff pattern:$0x73625140]
      %v443 = vld.sshfl [vmem:[#allocation1 + $0x18] sm:$0xff pattern:$0x73625140]
      %445 = vrot.lane.b32.xlu0 %v437, 104
      %v446 = vpop.permute.xlu0 %445
      %447 = vrot.lane.b32.xlu0 %v439, 104
      %v448 = vpop.permute.xlu0 %447
      %449 = vrot.lane.b32.xlu0 %v441, 104
      %v450 = vpop.permute.xlu0 %449
      %451 = vrot.lane.b32.xlu0 %v443, 104
      %v452 = vpop.permute.xlu0 %451
      %vm453 = vcmask 850944
      %v454 = vsel %vm453, %v446, %v448
      %v455 = vsel %vm453, %v448, %v450
      %v456 = vsel %vm453, %v450, %v452
      %v458 = vsel %vm247, %v434, 0
      %v461 = vsel %vm251, %v454, 0
      %v464 = vsel %vm251, %v455, 0
      %v467 = vsel %vm251, %v456, 0
      %469 = vmatpush.bf16.msra.mxu0 0
      %470 = vmatpush.bf16.msra.mxu0 0
      %471 = vmatpush.bf16.msra.mxu0 0
      %472 = vmatpush.bf16.msra.mxu0 0
      %473 = vmatpush.bf16.msra.mxu0 0
      %474 = vmatpush.bf16.msra.mxu0 0
      %475 = vmatpush.bf16.msra.mxu0 0
      %476 = vmatpush.bf16.msra.mxu0 %v461
      %477 = vmatmul.bf16.gmra.mxu0 %v458
      %v478 = vpop.f32.mrf.mxu0
      %v479 = vadd.f32 0.0, %v478
      %v480 = vpop.f32.mrf.mxu0
      %481 = vdwg.mxu0
      %482 = vmatpush.bf16.msra.mxu0 0
      %483 = vmatpush.bf16.msra.mxu0 0
      %484 = vmatpush.bf16.msra.mxu0 0
      %485 = vmatpush.bf16.msra.mxu0 0
      %486 = vmatpush.bf16.msra.mxu0 0
      %487 = vmatpush.bf16.msra.mxu0 0
      %488 = vmatpush.bf16.msra.mxu0 0
      %489 = vmatpush.bf16.msra.mxu0 %v464
      %490 = vmatmul.bf16.gmra.mxu0 %v458
      %v491 = vpop.f32.mrf.mxu0
      %v492 = vadd.f32 0.0, %v491
      %v493 = vpop.f32.mrf.mxu0
      %494 = vdwg.mxu0
      %495 = vmatpush.bf16.msra.mxu0 0
      %496 = vmatpush.bf16.msra.mxu0 0
      %497 = vmatpush.bf16.msra.mxu0 0
      %498 = vmatpush.bf16.msra.mxu0 0
      %499 = vmatpush.bf16.msra.mxu0 0
      %500 = vmatpush.bf16.msra.mxu0 0
      %501 = vmatpush.bf16.msra.mxu0 0
      %502 = vmatpush.bf16.msra.mxu0 %v467
      %503 = vmatmul.bf16.gmra.mxu0 %v458
      %v504 = vpop.f32.mrf.mxu0
      %v505 = vadd.f32 0.0, %v504
      %v506 = vpop.f32.mrf.mxu0
      %507 = vdwg.mxu0
      %v508 = vadd.f32 %v429, %v479
      %v509 = vadd.f32 %v430, %v492
      %v510 = vadd.f32 %v431, %v505
      %v511 = vld [vmem:[%s205] sm:$0xff]
      %s512 = scalar_lea.vmem %s1, 16
      %v513 = vld [vmem:[%s512] sm:$0xf]
      %515 = vst [vmem:[#allocation1] ss:$4 sm:$0xff] %v511
      %v516 = vld.sshfl [vmem:[#allocation1] sm:$0xff pattern:$0x73625140]
      %v518 = vld.sshfl [vmem:[#allocation1 + $0x8] sm:$0xff pattern:$0x73625140]
      %v520 = vld.sshfl [vmem:[#allocation1 + $0x10] sm:$0xff pattern:$0x73625140]
      %v522 = vld.sshfl [vmem:[#allocation1 + $0x18] sm:$0xff pattern:$0x73625140]
      %524 = vrot.lane.b32.xlu0 %v516, 103
      %v525 = vpop.permute.xlu0 %524
      %526 = vrot.lane.b32.xlu0 %v518, 103
      %v527 = vpop.permute.xlu0 %526
      %528 = vrot.lane.b32.xlu0 %v520, 103
      %v529 = vpop.permute.xlu0 %528
      %530 = vrot.lane.b32.xlu0 %v522, 103
      %v531 = vpop.permute.xlu0 %530
      %vm532 = vcmask 842752
      %v533 = vsel %vm532, %v525, %v527
      %v534 = vsel %vm532, %v527, %v529
      %v535 = vsel %vm532, %v529, %v531
      %v537 = vsel %vm247, %v513, 0
      %v540 = vsel %vm251, %v533, 0
      %v543 = vsel %vm251, %v534, 0
      %v546 = vsel %vm251, %v535, 0
      %548 = vmatpush.bf16.msra.mxu0 0
      %549 = vmatpush.bf16.msra.mxu0 0
      %550 = vmatpush.bf16.msra.mxu0 0
      %551 = vmatpush.bf16.msra.mxu0 0
      %552 = vmatpush.bf16.msra.mxu0 0
      %553 = vmatpush.bf16.msra.mxu0 0
      %554 = vmatpush.bf16.msra.mxu0 0
      %555 = vmatpush.bf16.msra.mxu0 %v540
      %556 = vmatmul.bf16.gmra.mxu0 %v537
      %v557 = vpop.f32.mrf.mxu0
      %v558 = vadd.f32 0.0, %v557
      %v559 = vpop.f32.mrf.mxu0
      %560 = vdwg.mxu0
      %561 = vmatpush.bf16.msra.mxu0 0
      %562 = vmatpush.bf16.msra.mxu0 0
      %563 = vmatpush.bf16.msra.mxu0 0
      %564 = vmatpush.bf16.msra.mxu0 0
      %565 = vmatpush.bf16.msra.mxu0 0
      %566 = vmatpush.bf16.msra.mxu0 0
      %567 = vmatpush.bf16.msra.mxu0 0
      %568 = vmatpush.bf16.msra.mxu0 %v543
      %569 = vmatmul.bf16.gmra.mxu0 %v537
      %v570 = vpop.f32.mrf.mxu0
      %v571 = vadd.f32 0.0, %v570
      %v572 = vpop.f32.mrf.mxu0
      %573 = vdwg.mxu0
      %574 = vmatpush.bf16.msra.mxu0 0
      %575 = vmatpush.bf16.msra.mxu0 0
      %576 = vmatpush.bf16.msra.mxu0 0
      %577 = vmatpush.bf16.msra.mxu0 0
      %578 = vmatpush.bf16.msra.mxu0 0
      %579 = vmatpush.bf16.msra.mxu0 0
      %580 = vmatpush.bf16.msra.mxu0 0
      %581 = vmatpush.bf16.msra.mxu0 %v546
      %582 = vmatmul.bf16.gmra.mxu0 %v537
      %v583 = vpop.f32.mrf.mxu0
      %v584 = vadd.f32 0.0, %v583
      %v585 = vpop.f32.mrf.mxu0
      %586 = vdwg.mxu0
      %v587 = vadd.f32 %v508, %v558
      %v588 = vadd.f32 %v509, %v571
      %v589 = vadd.f32 %v510, %v584
      %v590 = vld [vmem:[%s205] sm:$0xff]
      %s591 = scalar_lea.vmem %s1, 20
      %v592 = vld [vmem:[%s591] sm:$0xf]
      %594 = vst [vmem:[#allocation1] ss:$4 sm:$0xff] %v590
      %v595 = vld.sshfl [vmem:[#allocation1] sm:$0xff pattern:$0x73625140]
      %v597 = vld.sshfl [vmem:[#allocation1 + $0x8] sm:$0xff pattern:$0x73625140]
      %v599 = vld.sshfl [vmem:[#allocation1 + $0x10] sm:$0xff pattern:$0x73625140]
      %v601 = vld.sshfl [vmem:[#allocation1 + $0x18] sm:$0xff pattern:$0x73625140]
      %603 = vrot.lane.b32.xlu0 %v595, 102
      %v604 = vpop.permute.xlu0 %603
      %605 = vrot.lane.b32.xlu0 %v597, 102
      %v606 = vpop.permute.xlu0 %605
      %607 = vrot.lane.b32.xlu0 %v599, 102
      %v608 = vpop.permute.xlu0 %607
      %609 = vrot.lane.b32.xlu0 %v601, 102
      %v610 = vpop.permute.xlu0 %609
      %vm611 = vcmask 834560
      %v612 = vsel %vm611, %v604, %v606
      %v613 = vsel %vm611, %v606, %v608
      %v614 = vsel %vm611, %v608, %v610
      %v616 = vsel %vm247, %v592, 0
      %v619 = vsel %vm251, %v612, 0
      %v622 = vsel %vm251, %v613, 0
      %v625 = vsel %vm251, %v614, 0
      %627 = vmatpush.bf16.msra.mxu0 0
      %628 = vmatpush.bf16.msra.mxu0 0
      %629 = vmatpush.bf16.msra.mxu0 0
      %630 = vmatpush.bf16.msra.mxu0 0
      %631 = vmatpush.bf16.msra.mxu0 0
      %632 = vmatpush.bf16.msra.mxu0 0
      %633 = vmatpush.bf16.msra.mxu0 0
      %634 = vmatpush.bf16.msra.mxu0 %v619
      %635 = vmatmul.bf16.gmra.mxu0 %v616
      %v636 = vpop.f32.mrf.mxu0
      %v637 = vadd.f32 0.0, %v636
      %v638 = vpop.f32.mrf.mxu0
      %639 = vdwg.mxu0
      %640 = vmatpush.bf16.msra.mxu0 0
      %641 = vmatpush.bf16.msra.mxu0 0
      %642 = vmatpush.bf16.msra.mxu0 0
      %643 = vmatpush.bf16.msra.mxu0 0
      %644 = vmatpush.bf16.msra.mxu0 0
      %645 = vmatpush.bf16.msra.mxu0 0
      %646 = vmatpush.bf16.msra.mxu0 0
      %647 = vmatpush.bf16.msra.mxu0 %v622
      %648 = vmatmul.bf16.gmra.mxu0 %v616
      %v649 = vpop.f32.mrf.mxu0
      %v650 = vadd.f32 0.0, %v649
      %v651 = vpop.f32.mrf.mxu0
      %652 = vdwg.mxu0
      %653 = vmatpush.bf16.msra.mxu0 0
      %654 = vmatpush.bf16.msra.mxu0 0
      %655 = vmatpush.bf16.msra.mxu0 0
      %656 = vmatpush.bf16.msra.mxu0 0
      %657 = vmatpush.bf16.msra.mxu0 0
      %658 = vmatpush.bf16.msra.mxu0 0
      %659 = vmatpush.bf16.msra.mxu0 0
      %660 = vmatpush.bf16.msra.mxu0 %v625
      %661 = vmatmul.bf16.gmra.mxu0 %v616
      %v662 = vpop.f32.mrf.mxu0
      %v663 = vadd.f32 0.0, %v662
      %v664 = vpop.f32.mrf.mxu0
      %665 = vdwg.mxu0
      %v666 = vadd.f32 %v587, %v637
      %v667 = vadd.f32 %v588, %v650
      %v668 = vadd.f32 %v589, %v663
      %v669 = vld [vmem:[%s205] sm:$0xff]
      %s670 = scalar_lea.vmem %s1, 24
      %v671 = vld [vmem:[%s670] sm:$0xf]
      %673 = vst [vmem:[#allocation1] ss:$4 sm:$0xff] %v669
      %v674 = vld.sshfl [vmem:[#allocation1] sm:$0xff pattern:$0x73625140]
      %v676 = vld.sshfl [vmem:[#allocation1 + $0x8] sm:$0xff pattern:$0x73625140]
      %v678 = vld.sshfl [vmem:[#allocation1 + $0x10] sm:$0xff pattern:$0x73625140]
      %v680 = vld.sshfl [vmem:[#allocation1 + $0x18] sm:$0xff pattern:$0x73625140]
      %682 = vrot.lane.b32.xlu0 %v674, 80
      %v683 = vpop.permute.xlu0 %682
      %684 = vrot.lane.b32.xlu0 %v676, 80
      %v685 = vpop.permute.xlu0 %684
      %686 = vrot.lane.b32.xlu0 %v678, 80
      %v687 = vpop.permute.xlu0 %686
      %688 = vrot.lane.b32.xlu0 %v680, 80
      %v689 = vpop.permute.xlu0 %688
      %vm690 = vcmask 654336
      %v691 = vsel %vm690, %v683, %v685
      %v692 = vsel %vm690, %v685, %v687
      %v693 = vsel %vm690, %v687, %v689
      %v695 = vsel %vm247, %v671, 0
      %v698 = vsel %vm251, %v691, 0
      %v701 = vsel %vm251, %v692, 0
      %v704 = vsel %vm251, %v693, 0
      %706 = vmatpush.bf16.msra.mxu0 0
      %707 = vmatpush.bf16.msra.mxu0 0
      %708 = vmatpush.bf16.msra.mxu0 0
      %709 = vmatpush.bf16.msra.mxu0 0
      %710 = vmatpush.bf16.msra.mxu0 0
      %711 = vmatpush.bf16.msra.mxu0 0
      %712 = vmatpush.bf16.msra.mxu0 0
      %713 = vmatpush.bf16.msra.mxu0 %v698
      %714 = vmatmul.bf16.gmra.mxu0 %v695
      %v715 = vpop.f32.mrf.mxu0
      %v716 = vadd.f32 0.0, %v715
      %v717 = vpop.f32.mrf.mxu0
      %718 = vdwg.mxu0
      %719 = vmatpush.bf16.msra.mxu0 0
      %720 = vmatpush.bf16.msra.mxu0 0
      %721 = vmatpush.bf16.msra.mxu0 0
      %722 = vmatpush.bf16.msra.mxu0 0
      %723 = vmatpush.bf16.msra.mxu0 0
      %724 = vmatpush.bf16.msra.mxu0 0
      %725 = vmatpush.bf16.msra.mxu0 0
      %726 = vmatpush.bf16.msra.mxu0 %v701
      %727 = vmatmul.bf16.gmra.mxu0 %v695
      %v728 = vpop.f32.mrf.mxu0
      %v729 = vadd.f32 0.0, %v728
      %v730 = vpop.f32.mrf.mxu0
      %731 = vdwg.mxu0
      %732 = vmatpush.bf16.msra.mxu0 0
      %733 = vmatpush.bf16.msra.mxu0 0
      %734 = vmatpush.bf16.msra.mxu0 0
      %735 = vmatpush.bf16.msra.mxu0 0
      %736 = vmatpush.bf16.msra.mxu0 0
      %737 = vmatpush.bf16.msra.mxu0 0
      %738 = vmatpush.bf16.msra.mxu0 0
      %739 = vmatpush.bf16.msra.mxu0 %v704
      %740 = vmatmul.bf16.gmra.mxu0 %v695
      %v741 = vpop.f32.mrf.mxu0
      %v742 = vadd.f32 0.0, %v741
      %v743 = vpop.f32.mrf.mxu0
      %744 = vdwg.mxu0
      %v745 = vadd.f32 %v666, %v716
      %v746 = vadd.f32 %v667, %v729
      %v747 = vadd.f32 %v668, %v742
      %v748 = vld [vmem:[%s205] sm:$0xff]
      %s749 = scalar_lea.vmem %s1, 28
      %v750 = vld [vmem:[%s749] sm:$0xf]
      %752 = vst [vmem:[#allocation1] ss:$4 sm:$0xff] %v748
      %v753 = vld.sshfl [vmem:[#allocation1] sm:$0xff pattern:$0x73625140]
      %v755 = vld.sshfl [vmem:[#allocation1 + $0x8] sm:$0xff pattern:$0x73625140]
      %v757 = vld.sshfl [vmem:[#allocation1 + $0x10] sm:$0xff pattern:$0x73625140]
      %v759 = vld.sshfl [vmem:[#allocation1 + $0x18] sm:$0xff pattern:$0x73625140]
      %761 = vrot.lane.b32.xlu0 %v753, 79
      %v762 = vpop.permute.xlu0 %761
      %763 = vrot.lane.b32.xlu0 %v755, 79
      %v764 = vpop.permute.xlu0 %763
      %765 = vrot.lane.b32.xlu0 %v757, 79
      %v766 = vpop.permute.xlu0 %765
      %767 = vrot.lane.b32.xlu0 %v759, 79
      %v768 = vpop.permute.xlu0 %767
      %vm769 = vcmask 646144
      %v770 = vsel %vm769, %v762, %v764
      %v771 = vsel %vm769, %v764, %v766
      %v772 = vsel %vm769, %v766, %v768
      %v774 = vsel %vm247, %v750, 0
      %v777 = vsel %vm251, %v770, 0
      %v780 = vsel %vm251, %v771, 0
      %v783 = vsel %vm251, %v772, 0
      %785 = vmatpush.bf16.msra.mxu0 0
      %786 = vmatpush.bf16.msra.mxu0 0
      %787 = vmatpush.bf16.msra.mxu0 0
      %788 = vmatpush.bf16.msra.mxu0 0
      %789 = vmatpush.bf16.msra.mxu0 0
      %790 = vmatpush.bf16.msra.mxu0 0
      %791 = vmatpush.bf16.msra.mxu0 0
      %792 = vmatpush.bf16.msra.mxu0 %v777
      %793 = vmatmul.bf16.gmra.mxu0 %v774
      %v794 = vpop.f32.mrf.mxu0
      %v795 = vadd.f32 0.0, %v794
      %v796 = vpop.f32.mrf.mxu0
      %797 = vdwg.mxu0
      %798 = vmatpush.bf16.msra.mxu0 0
      %799 = vmatpush.bf16.msra.mxu0 0
      %800 = vmatpush.bf16.msra.mxu0 0
      %801 = vmatpush.bf16.msra.mxu0 0
      %802 = vmatpush.bf16.msra.mxu0 0
      %803 = vmatpush.bf16.msra.mxu0 0
      %804 = vmatpush.bf16.msra.mxu0 0
      %805 = vmatpush.bf16.msra.mxu0 %v780
      %806 = vmatmul.bf16.gmra.mxu0 %v774
      %v807 = vpop.f32.mrf.mxu0
      %v808 = vadd.f32 0.0, %v807
      %v809 = vpop.f32.mrf.mxu0
      %810 = vdwg.mxu0
      %811 = vmatpush.bf16.msra.mxu0 0
      %812 = vmatpush.bf16.msra.mxu0 0
      %813 = vmatpush.bf16.msra.mxu0 0
      %814 = vmatpush.bf16.msra.mxu0 0
      %815 = vmatpush.bf16.msra.mxu0 0
      %816 = vmatpush.bf16.msra.mxu0 0
      %817 = vmatpush.bf16.msra.mxu0 0
      %818 = vmatpush.bf16.msra.mxu0 %v783
      %819 = vmatmul.bf16.gmra.mxu0 %v774
      %v820 = vpop.f32.mrf.mxu0
      %v821 = vadd.f32 0.0, %v820
      %v822 = vpop.f32.mrf.mxu0
      %823 = vdwg.mxu0
      %v824 = vadd.f32 %v745, %v795
      %v825 = vadd.f32 %v746, %v808
      %v826 = vadd.f32 %v747, %v821
      %v827 = vld [vmem:[%s205] sm:$0xff]
      %s828 = scalar_lea.vmem %s1, 32
      %v829 = vld [vmem:[%s828] sm:$0xf]
      %831 = vst [vmem:[#allocation1] ss:$4 sm:$0xff] %v827
      %v832 = vld.sshfl [vmem:[#allocation1] sm:$0xff pattern:$0x73625140]
      %v834 = vld.sshfl [vmem:[#allocation1 + $0x8] sm:$0xff pattern:$0x73625140]
      %v836 = vld.sshfl [vmem:[#allocation1 + $0x10] sm:$0xff pattern:$0x73625140]
      %v838 = vld.sshfl [vmem:[#allocation1 + $0x18] sm:$0xff pattern:$0x73625140]
      %840 = vrot.lane.b32.xlu0 %v832, 78
      %v841 = vpop.permute.xlu0 %840
      %842 = vrot.lane.b32.xlu0 %v834, 78
      %v843 = vpop.permute.xlu0 %842
      %844 = vrot.lane.b32.xlu0 %v836, 78
      %v845 = vpop.permute.xlu0 %844
      %846 = vrot.lane.b32.xlu0 %v838, 78
      %v847 = vpop.permute.xlu0 %846
      %vm848 = vcmask 637952
      %v849 = vsel %vm848, %v841, %v843
      %v850 = vsel %vm848, %v843, %v845
      %v851 = vsel %vm848, %v845, %v847
      %v853 = vsel %vm247, %v829, 0
      %v856 = vsel %vm251, %v849, 0
      %v859 = vsel %vm251, %v850, 0
      %v862 = vsel %vm251, %v851, 0
      %864 = vmatpush.bf16.msra.mxu0 0
      %865 = vmatpush.bf16.msra.mxu0 0
      %866 = vmatpush.bf16.msra.mxu0 0
      %867 = vmatpush.bf16.msra.mxu0 0
      %868 = vmatpush.bf16.msra.mxu0 0
      %869 = vmatpush.bf16.msra.mxu0 0
      %870 = vmatpush.bf16.msra.mxu0 0
      %871 = vmatpush.bf16.msra.mxu0 %v856
      %872 = vmatmul.bf16.gmra.mxu0 %v853
      %v873 = vpop.f32.mrf.mxu0
      %v874 = vadd.f32 0.0, %v873
      %v875 = vpop.f32.mrf.mxu0
      %876 = vdwg.mxu0
      %877 = vmatpush.bf16.msra.mxu0 0
      %878 = vmatpush.bf16.msra.mxu0 0
      %879 = vmatpush.bf16.msra.mxu0 0
      %880 = vmatpush.bf16.msra.mxu0 0
      %881 = vmatpush.bf16.msra.mxu0 0
      %882 = vmatpush.bf16.msra.mxu0 0
      %883 = vmatpush.bf16.msra.mxu0 0
      %884 = vmatpush.bf16.msra.mxu0 %v859
      %885 = vmatmul.bf16.gmra.mxu0 %v853
      %v886 = vpop.f32.mrf.mxu0
      %v887 = vadd.f32 0.0, %v886
      %v888 = vpop.f32.mrf.mxu0
      %889 = vdwg.mxu0
      %890 = vmatpush.bf16.msra.mxu0 0
      %891 = vmatpush.bf16.msra.mxu0 0
      %892 = vmatpush.bf16.msra.mxu0 0
      %893 = vmatpush.bf16.msra.mxu0 0
      %894 = vmatpush.bf16.msra.mxu0 0
      %895 = vmatpush.bf16.msra.mxu0 0
      %896 = vmatpush.bf16.msra.mxu0 0
      %897 = vmatpush.bf16.msra.mxu0 %v862
      %898 = vmatmul.bf16.gmra.mxu0 %v853
      %v899 = vpop.f32.mrf.mxu0
      %v900 = vadd.f32 0.0, %v899
      %v901 = vpop.f32.mrf.mxu0
      %902 = vdwg.mxu0
      %v903 = vadd.f32 %v824, %v874
      %v904 = vadd.f32 %v825, %v887
      %v905 = vadd.f32 %v826, %v900
      %v906 = vpack.c.bf16 %v903, %v903
      %v908 = vrot.slane %v906, 3
      %vm909 = vcmask 1040384
      %v912 = vsel %vm909, %v906, %v908
      %vm914 = vcmask 1041409
      %v915 = vsel %vm914, %v906, %v908
      %v917 = vrot.slane %v915, 1
      %vm918 = vcmask 1042434
      %v919 = vsel %vm918, %v906, %v908
      %v921 = vrot.slane %v919, 2
      %vm922 = vcmask 1043459
      %v923 = vsel %vm922, %v906, %v908
      %v925 = vrot.slane %v923, 3
      %v926 = vunpack.i.l.s16 %v912
      %v927 = vunpack.i.h.s16 %v912
      %v928 = vunpack.i.l.s16 %v917
      %v929 = vunpack.i.h.s16 %v917
      %v930 = vunpack.i.l.s16 %v921
      %v931 = vunpack.i.h.s16 %v921
      %v932 = vunpack.i.l.s16 %v925
      %v933 = vunpack.i.h.s16 %v925
      %v934 = vpack.i.b16 %v926, %v926
      %v935 = vpack.i.b16 %v927, %v927
      %v936 = vpack.i.b16 %v928, %v928
      %v937 = vpack.i.b16 %v929, %v929
      %v938 = vpack.i.b16 %v930, %v930
      %v939 = vpack.i.b16 %v931, %v931
      %v940 = vpack.i.b16 %v932, %v932
      %v941 = vpack.i.b16 %v933, %v933
      %v943 = vunpack.c.l.s4 286326784
      %v944 = vunpack.c.0.s8 %v943
      %v945 = vperm.slane %v934, %v944
      %v947 = vunpack.c.l.s4 286326784
      %v948 = vunpack.c.0.s8 %v947
      %v949 = vperm.slane %v935, %v948
      %v951 = vunpack.c.l.s4 286326784
      %v952 = vunpack.c.0.s8 %v951
      %v953 = vperm.slane %v936, %v952
      %v955 = vunpack.c.l.s4 286326784
      %v956 = vunpack.c.0.s8 %v955
      %v957 = vperm.slane %v937, %v956
      %v959 = vunpack.c.l.s4 286326784
      %v960 = vunpack.c.0.s8 %v959
      %v961 = vperm.slane %v938, %v960
      %v963 = vunpack.c.l.s4 286326784
      %v964 = vunpack.c.0.s8 %v963
      %v965 = vperm.slane %v939, %v964
      %v967 = vunpack.c.l.s4 286326784
      %v968 = vunpack.c.0.s8 %v967
      %v969 = vperm.slane %v940, %v968
      %v971 = vunpack.c.l.s4 286326784
      %v972 = vunpack.c.0.s8 %v971
      %v973 = vperm.slane %v941, %v972
      %vm982 = vcmask 122880
      %vm983 = vsmask.f32 256
      %vm984 = vmand %vm982, %vm983
      %v985 = vld [vmem:[%s210] sm:$0x1]
      %v986 = vsel %vm984, %v945, %v985
      %987 = vst [vmem:[%s210] sm:$0x1] %v986
      %v988 = vld [vmem:[%s210 + $0x8] sm:$0x1]
      %v989 = vsel %vm984, %v949, %v988
      %990 = vst [vmem:[%s210 + $0x8] sm:$0x1] %v989
      %v991 = vld [vmem:[%s210 + $0x10] sm:$0x1]
      %v992 = vsel %vm984, %v953, %v991
      %993 = vst [vmem:[%s210 + $0x10] sm:$0x1] %v992
      %v994 = vld [vmem:[%s210 + $0x18] sm:$0x1]
      %v995 = vsel %vm984, %v957, %v994
      %996 = vst [vmem:[%s210 + $0x18] sm:$0x1] %v995
      %v997 = vld [vmem:[%s210 + $0x20] sm:$0x1]
      %v998 = vsel %vm984, %v961, %v997
      %999 = vst [vmem:[%s210 + $0x20] sm:$0x1] %v998
      %v1000 = vld [vmem:[%s210 + $0x28] sm:$0x1]
      %v1001 = vsel %vm984, %v965, %v1000
      %1002 = vst [vmem:[%s210 + $0x28] sm:$0x1] %v1001
      %v1003 = vld [vmem:[%s210 + $0x30] sm:$0x1]
      %v1004 = vsel %vm984, %v969, %v1003
      %1005 = vst [vmem:[%s210 + $0x30] sm:$0x1] %v1004
      %v1006 = vld [vmem:[%s210 + $0x38] sm:$0x1]
      %v1007 = vsel %vm984, %v973, %v1006
      %1008 = vst [vmem:[%s210 + $0x38] sm:$0x1] %v1007
      %vm1009 = vcmask 130048
      %v1010 = vsel %vm1009, %v903, 0.0
      %1011 = vadd.xlane.f32.xlu0 %v1010
      %v1012 = vpop.xlane.xlu0 %1011
      %v1013 = vadd.f32 %v1012, 0.0
      %v1014 = vmul.f32 %v903, %v903
      %v1015 = vsel %vm1009, %v1014, 0.0
      %1016 = vadd.xlane.f32.xlu0 %v1015
      %v1017 = vpop.xlane.xlu0 %1016
      %v1018 = vadd.f32 %v1017, 0.0
      %1019 = vrot.lane.b32.xlu0 %v945, 104
      %v1020 = vpop.permute.xlu0 %1019
      %1021 = vrot.lane.b32.xlu0 %v949, 104
      %v1022 = vpop.permute.xlu0 %1021
      %1023 = vrot.lane.b32.xlu0 %v953, 104
      %v1024 = vpop.permute.xlu0 %1023
      %1025 = vrot.lane.b32.xlu0 %v957, 104
      %v1026 = vpop.permute.xlu0 %1025
      %1027 = vrot.lane.b32.xlu0 %v961, 104
      %v1028 = vpop.permute.xlu0 %1027
      %1029 = vrot.lane.b32.xlu0 %v965, 104
      %v1030 = vpop.permute.xlu0 %1029
      %1031 = vrot.lane.b32.xlu0 %v969, 104
      %v1032 = vpop.permute.xlu0 %1031
      %1033 = vrot.lane.b32.xlu0 %v973, 104
      %v1034 = vpop.permute.xlu0 %1033
      %vm1043 = vsmask.f32 7938
      %vm1044 = vmand %vm982, %vm1043
      %v1045 = vld [vmem:[%s210] sm:$0x1]
      %v1046 = vsel %vm1044, %v1020, %v1045
      %1047 = vst [vmem:[%s210] sm:$0x1] %v1046
      %v1048 = vld [vmem:[%s210 + $0x8] sm:$0x1]
      %v1049 = vsel %vm1044, %v1022, %v1048
      %1050 = vst [vmem:[%s210 + $0x8] sm:$0x1] %v1049
      %v1051 = vld [vmem:[%s210 + $0x10] sm:$0x1]
      %v1052 = vsel %vm1044, %v1024, %v1051
      %1053 = vst [vmem:[%s210 + $0x10] sm:$0x1] %v1052
      %v1054 = vld [vmem:[%s210 + $0x18] sm:$0x1]
      %v1055 = vsel %vm1044, %v1026, %v1054
      %1056 = vst [vmem:[%s210 + $0x18] sm:$0x1] %v1055
      %v1057 = vld [vmem:[%s210 + $0x20] sm:$0x1]
      %v1058 = vsel %vm1044, %v1028, %v1057
      %1059 = vst [vmem:[%s210 + $0x20] sm:$0x1] %v1058
      %v1060 = vld [vmem:[%s210 + $0x28] sm:$0x1]
      %v1061 = vsel %vm1044, %v1030, %v1060
      %1062 = vst [vmem:[%s210 + $0x28] sm:$0x1] %v1061
      %v1063 = vld [vmem:[%s210 + $0x30] sm:$0x1]
      %v1064 = vsel %vm1044, %v1032, %v1063
      %1065 = vst [vmem:[%s210 + $0x30] sm:$0x1] %v1064
      %v1066 = vld [vmem:[%s210 + $0x38] sm:$0x1]
      %v1067 = vsel %vm1044, %v1034, %v1066
      %1068 = vst [vmem:[%s210 + $0x38] sm:$0x1] %v1067
      %1070 = vrot.lane.b32.xlu0 %v903, 104
      %v1071 = vpop.permute.xlu0 %1070
      %v1073 = vsel %vm1009, %v1071, 0.0
      %1074 = vadd.xlane.f32.xlu0 %v1073
      %v1075 = vpop.xlane.xlu0 %1074
      %v1076 = vadd.f32 %v1013, %v1075
      %1078 = vrot.lane.b32.xlu0 %v1014, 104
      %v1079 = vpop.permute.xlu0 %1078
      %v1081 = vsel %vm1009, %v1079, 0.0
      %1082 = vadd.xlane.f32.xlu0 %v1081
      %v1083 = vpop.xlane.xlu0 %1082
      %v1084 = vadd.f32 %v1018, %v1083
      %1085 = vrot.lane.b32.xlu0 %v945, 80
      %v1086 = vpop.permute.xlu0 %1085
      %1087 = vrot.lane.b32.xlu0 %v949, 80
      %v1088 = vpop.permute.xlu0 %1087
      %1089 = vrot.lane.b32.xlu0 %v953, 80
      %v1090 = vpop.permute.xlu0 %1089
      %1091 = vrot.lane.b32.xlu0 %v957, 80
      %v1092 = vpop.permute.xlu0 %1091
      %1093 = vrot.lane.b32.xlu0 %v961, 80
      %v1094 = vpop.permute.xlu0 %1093
      %1095 = vrot.lane.b32.xlu0 %v965, 80
      %v1096 = vpop.permute.xlu0 %1095
      %1097 = vrot.lane.b32.xlu0 %v969, 80
      %v1098 = vpop.permute.xlu0 %1097
      %1099 = vrot.lane.b32.xlu0 %v973, 80
      %v1100 = vpop.permute.xlu0 %1099
      %vm1109 = vcmask 123905
      %vm1110 = vsmask.f32 1280
      %vm1111 = vmand %vm1109, %vm1110
      %v1112 = vld [vmem:[%s210] sm:$0x2]
      %v1113 = vsel %vm1111, %v1086, %v1112
      %1114 = vst [vmem:[%s210] sm:$0x2] %v1113
      %v1115 = vld [vmem:[%s210 + $0x8] sm:$0x2]
      %v1116 = vsel %vm1111, %v1088, %v1115
      %1117 = vst [vmem:[%s210 + $0x8] sm:$0x2] %v1116
      %v1118 = vld [vmem:[%s210 + $0x10] sm:$0x2]
      %v1119 = vsel %vm1111, %v1090, %v1118
      %1120 = vst [vmem:[%s210 + $0x10] sm:$0x2] %v1119
      %v1121 = vld [vmem:[%s210 + $0x18] sm:$0x2]
      %v1122 = vsel %vm1111, %v1092, %v1121
      %1123 = vst [vmem:[%s210 + $0x18] sm:$0x2] %v1122
      %v1124 = vld [vmem:[%s210 + $0x20] sm:$0x2]
      %v1125 = vsel %vm1111, %v1094, %v1124
      %1126 = vst [vmem:[%s210 + $0x20] sm:$0x2] %v1125
      %v1127 = vld [vmem:[%s210 + $0x28] sm:$0x2]
      %v1128 = vsel %vm1111, %v1096, %v1127
      %1129 = vst [vmem:[%s210 + $0x28] sm:$0x2] %v1128
      %v1130 = vld [vmem:[%s210 + $0x30] sm:$0x2]
      %v1131 = vsel %vm1111, %v1098, %v1130
      %1132 = vst [vmem:[%s210 + $0x30] sm:$0x2] %v1131
      %v1133 = vld [vmem:[%s210 + $0x38] sm:$0x2]
      %v1134 = vsel %vm1111, %v1100, %v1133
      %1135 = vst [vmem:[%s210 + $0x38] sm:$0x2] %v1134
      %1136 = vrot.lane.b32.xlu0 %v903, 80
      %v1137 = vpop.permute.xlu0 %1136
      %v1139 = vsel %vm1009, %v1137, 0.0
      %1140 = vadd.xlane.f32.xlu0 %v1139
      %v1141 = vpop.xlane.xlu0 %1140
      %v1142 = vadd.f32 %v1076, %v1141
      %1143 = vrot.lane.b32.xlu0 %v1014, 80
      %v1144 = vpop.permute.xlu0 %1143
      %v1146 = vsel %vm1009, %v1144, 0.0
      %1147 = vadd.xlane.f32.xlu0 %v1146
      %v1148 = vpop.xlane.xlu0 %1147
      %v1149 = vadd.f32 %v1084, %v1148
      %1150 = vrot.lane.b32.xlu0 %v945, 56
      %v1151 = vpop.permute.xlu0 %1150
      %1152 = vrot.lane.b32.xlu0 %v949, 56
      %v1153 = vpop.permute.xlu0 %1152
      %1154 = vrot.lane.b32.xlu0 %v953, 56
      %v1155 = vpop.permute.xlu0 %1154
      %1156 = vrot.lane.b32.xlu0 %v957, 56
      %v1157 = vpop.permute.xlu0 %1156
      %1158 = vrot.lane.b32.xlu0 %v961, 56
      %v1159 = vpop.permute.xlu0 %1158
      %1160 = vrot.lane.b32.xlu0 %v965, 56
      %v1161 = vpop.permute.xlu0 %1160
      %1162 = vrot.lane.b32.xlu0 %v969, 56
      %v1163 = vpop.permute.xlu0 %1162
      %1164 = vrot.lane.b32.xlu0 %v973, 56
      %v1165 = vpop.permute.xlu0 %1164
      %vm1174 = vsmask.f32 7942
      %vm1175 = vmand %vm1109, %vm1174
      %v1176 = vld [vmem:[%s210] sm:$0x2]
      %v1177 = vsel %vm1175, %v1151, %v1176
      %1178 = vst [vmem:[%s210] sm:$0x2] %v1177
      %v1179 = vld [vmem:[%s210 + $0x8] sm:$0x2]
      %v1180 = vsel %vm1175, %v1153, %v1179
      %1181 = vst [vmem:[%s210 + $0x8] sm:$0x2] %v1180
      %v1182 = vld [vmem:[%s210 + $0x10] sm:$0x2]
      %v1183 = vsel %vm1175, %v1155, %v1182
      %1184 = vst [vmem:[%s210 + $0x10] sm:$0x2] %v1183
      %v1185 = vld [vmem:[%s210 + $0x18] sm:$0x2]
      %v1186 = vsel %vm1175, %v1157, %v1185
      %1187 = vst [vmem:[%s210 + $0x18] sm:$0x2] %v1186
      %v1188 = vld [vmem:[%s210 + $0x20] sm:$0x2]
      %v1189 = vsel %vm1175, %v1159, %v1188
      %1190 = vst [vmem:[%s210 + $0x20] sm:$0x2] %v1189
      %v1191 = vld [vmem:[%s210 + $0x28] sm:$0x2]
      %v1192 = vsel %vm1175, %v1161, %v1191
      %1193 = vst [vmem:[%s210 + $0x28] sm:$0x2] %v1192
      %v1194 = vld [vmem:[%s210 + $0x30] sm:$0x2]
      %v1195 = vsel %vm1175, %v1163, %v1194
      %1196 = vst [vmem:[%s210 + $0x30] sm:$0x2] %v1195
      %v1197 = vld [vmem:[%s210 + $0x38] sm:$0x2]
      %v1198 = vsel %vm1175, %v1165, %v1197
      %1199 = vst [vmem:[%s210 + $0x38] sm:$0x2] %v1198
      %1200 = vrot.lane.b32.xlu0 %v903, 56
      %v1201 = vpop.permute.xlu0 %1200
      %v1203 = vsel %vm1009, %v1201, 0.0
      %1204 = vadd.xlane.f32.xlu0 %v1203
      %v1205 = vpop.xlane.xlu0 %1204
      %v1206 = vadd.f32 %v1142, %v1205
      %1207 = vrot.lane.b32.xlu0 %v1014, 56
      %v1208 = vpop.permute.xlu0 %1207
      %v1210 = vsel %vm1009, %v1208, 0.0
      %1211 = vadd.xlane.f32.xlu0 %v1210
      %v1212 = vpop.xlane.xlu0 %1211
      %v1213 = vadd.f32 %v1149, %v1212
      %1214 = vrot.lane.b32.xlu0 %v945, 32
      %v1215 = vpop.permute.xlu0 %1214
      %1216 = vrot.lane.b32.xlu0 %v949, 32
      %v1217 = vpop.permute.xlu0 %1216
      %1218 = vrot.lane.b32.xlu0 %v953, 32
      %v1219 = vpop.permute.xlu0 %1218
      %1220 = vrot.lane.b32.xlu0 %v957, 32
      %v1221 = vpop.permute.xlu0 %1220
      %1222 = vrot.lane.b32.xlu0 %v961, 32
      %v1223 = vpop.permute.xlu0 %1222
      %1224 = vrot.lane.b32.xlu0 %v965, 32
      %v1225 = vpop.permute.xlu0 %1224
      %1226 = vrot.lane.b32.xlu0 %v969, 32
      %v1227 = vpop.permute.xlu0 %1226
      %1228 = vrot.lane.b32.xlu0 %v973, 32
      %v1229 = vpop.permute.xlu0 %1228
      %vm1238 = vcmask 124930
      %vm1239 = vsmask.f32 2304
      %vm1240 = vmand %vm1238, %vm1239
      %v1241 = vld [vmem:[%s210] sm:$0x4]
      %v1242 = vsel %vm1240, %v1215, %v1241
      %1243 = vst [vmem:[%s210] sm:$0x4] %v1242
      %v1244 = vld [vmem:[%s210 + $0x8] sm:$0x4]
      %v1245 = vsel %vm1240, %v1217, %v1244
      %1246 = vst [vmem:[%s210 + $0x8] sm:$0x4] %v1245
      %v1247 = vld [vmem:[%s210 + $0x10] sm:$0x4]
      %v1248 = vsel %vm1240, %v1219, %v1247
      %1249 = vst [vmem:[%s210 + $0x10] sm:$0x4] %v1248
      %v1250 = vld [vmem:[%s210 + $0x18] sm:$0x4]
      %v1251 = vsel %vm1240, %v1221, %v1250
      %1252 = vst [vmem:[%s210 + $0x18] sm:$0x4] %v1251
      %v1253 = vld [vmem:[%s210 + $0x20] sm:$0x4]
      %v1254 = vsel %vm1240, %v1223, %v1253
      %1255 = vst [vmem:[%s210 + $0x20] sm:$0x4] %v1254
      %v1256 = vld [vmem:[%s210 + $0x28] sm:$0x4]
      %v1257 = vsel %vm1240, %v1225, %v1256
      %1258 = vst [vmem:[%s210 + $0x28] sm:$0x4] %v1257
      %v1259 = vld [vmem:[%s210 + $0x30] sm:$0x4]
      %v1260 = vsel %vm1240, %v1227, %v1259
      %1261 = vst [vmem:[%s210 + $0x30] sm:$0x4] %v1260
      %v1262 = vld [vmem:[%s210 + $0x38] sm:$0x4]
      %v1263 = vsel %vm1240, %v1229, %v1262
      %1264 = vst [vmem:[%s210 + $0x38] sm:$0x4] %v1263
      %1265 = vrot.lane.b32.xlu0 %v903, 32
      %v1266 = vpop.permute.xlu0 %1265
      %v1268 = vsel %vm1009, %v1266, 0.0
      %1269 = vadd.xlane.f32.xlu0 %v1268
      %v1270 = vpop.xlane.xlu0 %1269
      %v1271 = vadd.f32 %v1206, %v1270
      %1272 = vrot.lane.b32.xlu0 %v1014, 32
      %v1273 = vpop.permute.xlu0 %1272
      %v1275 = vsel %vm1009, %v1273, 0.0
      %1276 = vadd.xlane.f32.xlu0 %v1275
      %v1277 = vpop.xlane.xlu0 %1276
      %v1278 = vadd.f32 %v1213, %v1277
      %v1279 = vpack.c.bf16 %v904, %v903
      %v1281 = vrot.slane %v1279, 3
      %v1284 = vsel %vm909, %v1279, %v1281
      %v1286 = vsel %vm914, %v1279, %v1281
      %v1288 = vrot.slane %v1286, 1
      %v1289 = vsel %vm918, %v1279, %v1281
      %v1291 = vrot.slane %v1289, 2
      %v1292 = vsel %vm922, %v1279, %v1281
      %v1294 = vrot.slane %v1292, 3
      %v1295 = vunpack.i.l.s16 %v1284
      %v1296 = vunpack.i.h.s16 %v1284
      %v1297 = vunpack.i.l.s16 %v1288
      %v1298 = vunpack.i.h.s16 %v1288
      %v1299 = vunpack.i.l.s16 %v1291
      %v1300 = vunpack.i.h.s16 %v1291
      %v1301 = vunpack.i.l.s16 %v1294
      %v1302 = vunpack.i.h.s16 %v1294
      %v1303 = vpack.i.b16 %v1295, %v1295
      %v1304 = vpack.i.b16 %v1296, %v1296
      %v1305 = vpack.i.b16 %v1297, %v1297
      %v1306 = vpack.i.b16 %v1298, %v1298
      %v1307 = vpack.i.b16 %v1299, %v1299
      %v1308 = vpack.i.b16 %v1300, %v1300
      %v1309 = vpack.i.b16 %v1301, %v1301
      %v1310 = vpack.i.b16 %v1302, %v1302
      %v1312 = vunpack.c.l.s4 286326784
      %v1313 = vunpack.c.0.s8 %v1312
      %v1314 = vperm.slane %v1303, %v1313
      %v1316 = vunpack.c.l.s4 286326784
      %v1317 = vunpack.c.0.s8 %v1316
      %v1318 = vperm.slane %v1304, %v1317
      %v1320 = vunpack.c.l.s4 286326784
      %v1321 = vunpack.c.0.s8 %v1320
      %v1322 = vperm.slane %v1305, %v1321
      %v1324 = vunpack.c.l.s4 286326784
      %v1325 = vunpack.c.0.s8 %v1324
      %v1326 = vperm.slane %v1306, %v1325
      %v1328 = vunpack.c.l.s4 286326784
      %v1329 = vunpack.c.0.s8 %v1328
      %v1330 = vperm.slane %v1307, %v1329
      %v1332 = vunpack.c.l.s4 286326784
      %v1333 = vunpack.c.0.s8 %v1332
      %v1334 = vperm.slane %v1308, %v1333
      %v1336 = vunpack.c.l.s4 286326784
      %v1337 = vunpack.c.0.s8 %v1336
      %v1338 = vperm.slane %v1309, %v1337
      %v1340 = vunpack.c.l.s4 286326784
      %v1341 = vunpack.c.0.s8 %v1340
      %v1342 = vperm.slane %v1310, %v1341
      %1343 = vrot.lane.b32.xlu0 %v1314, 8
      %v1344 = vpop.permute.xlu0 %1343
      %1345 = vrot.lane.b32.xlu0 %v1318, 8
      %v1346 = vpop.permute.xlu0 %1345
      %1347 = vrot.lane.b32.xlu0 %v1322, 8
      %v1348 = vpop.permute.xlu0 %1347
      %1349 = vrot.lane.b32.xlu0 %v1326, 8
      %v1350 = vpop.permute.xlu0 %1349
      %1351 = vrot.lane.b32.xlu0 %v1330, 8
      %v1352 = vpop.permute.xlu0 %1351
      %1353 = vrot.lane.b32.xlu0 %v1334, 8
      %v1354 = vpop.permute.xlu0 %1353
      %1355 = vrot.lane.b32.xlu0 %v1338, 8
      %v1356 = vpop.permute.xlu0 %1355
      %1357 = vrot.lane.b32.xlu0 %v1342, 8
      %v1358 = vpop.permute.xlu0 %1357
      %v1359 = vrot.slane %v1344, 4
      %v1360 = vrot.slane %v1346, 4
      %v1361 = vrot.slane %v1348, 4
      %v1362 = vrot.slane %v1350, 4
      %v1363 = vrot.slane %v1352, 4
      %v1364 = vrot.slane %v1354, 4
      %v1365 = vrot.slane %v1356, 4
      %v1366 = vrot.slane %v1358, 4
      %vm1367 = vcmask 64512
      %v1368 = vsel %vm1367, %v1344, %v1359
      %v1369 = vsel %vm1367, %v1346, %v1360
      %v1370 = vsel %vm1367, %v1348, %v1361
      %v1371 = vsel %vm1367, %v1350, %v1362
      %v1372 = vsel %vm1367, %v1352, %v1363
      %v1373 = vsel %vm1367, %v1354, %v1364
      %v1374 = vsel %vm1367, %v1356, %v1365
      %v1375 = vsel %vm1367, %v1358, %v1366
      %vm1384 = vsmask.f32 7946
      %vm1385 = vmand %vm1238, %vm1384
      %v1386 = vld [vmem:[%s210] sm:$0x4]
      %v1387 = vsel %vm1385, %v1368, %v1386
      %1388 = vst [vmem:[%s210] sm:$0x4] %v1387
      %v1389 = vld [vmem:[%s210 + $0x8] sm:$0x4]
      %v1390 = vsel %vm1385, %v1369, %v1389
      %1391 = vst [vmem:[%s210 + $0x8] sm:$0x4] %v1390
      %v1392 = vld [vmem:[%s210 + $0x10] sm:$0x4]
      %v1393 = vsel %vm1385, %v1370, %v1392
      %1394 = vst [vmem:[%s210 + $0x10] sm:$0x4] %v1393
      %v1395 = vld [vmem:[%s210 + $0x18] sm:$0x4]
      %v1396 = vsel %vm1385, %v1371, %v1395
      %1397 = vst [vmem:[%s210 + $0x18] sm:$0x4] %v1396
      %v1398 = vld [vmem:[%s210 + $0x20] sm:$0x4]
      %v1399 = vsel %vm1385, %v1372, %v1398
      %1400 = vst [vmem:[%s210 + $0x20] sm:$0x4] %v1399
      %v1401 = vld [vmem:[%s210 + $0x28] sm:$0x4]
      %v1402 = vsel %vm1385, %v1373, %v1401
      %1403 = vst [vmem:[%s210 + $0x28] sm:$0x4] %v1402
      %v1404 = vld [vmem:[%s210 + $0x30] sm:$0x4]
      %v1405 = vsel %vm1385, %v1374, %v1404
      %1406 = vst [vmem:[%s210 + $0x30] sm:$0x4] %v1405
      %v1407 = vld [vmem:[%s210 + $0x38] sm:$0x4]
      %v1408 = vsel %vm1385, %v1375, %v1407
      %1409 = vst [vmem:[%s210 + $0x38] sm:$0x4] %v1408
      %1411 = vrot.lane.b32.xlu0 %v903, 8
      %v1412 = vpop.permute.xlu0 %1411
      %1413 = vrot.lane.b32.xlu0 %v904, 8
      %v1414 = vpop.permute.xlu0 %1413
      %vm1415 = vcmask 64512
      %v1416 = vsel %vm1415, %v1412, %v1414
      %v1418 = vsel %vm1009, %v1416, 0.0
      %1419 = vadd.xlane.f32.xlu0 %v1418
      %v1420 = vpop.xlane.xlu0 %1419
      %v1421 = vadd.f32 %v1271, %v1420
      %v1422 = vmul.f32 %v904, %v904
      %1424 = vrot.lane.b32.xlu0 %v1014, 8
      %v1425 = vpop.permute.xlu0 %1424
      %1426 = vrot.lane.b32.xlu0 %v1422, 8
      %v1427 = vpop.permute.xlu0 %1426
      %v1428 = vsel %vm1415, %v1425, %v1427
      %v1430 = vsel %vm1009, %v1428, 0.0
      %1431 = vadd.xlane.f32.xlu0 %v1430
      %v1432 = vpop.xlane.xlu0 %1431
      %v1433 = vadd.f32 %v1278, %v1432
      %v1434 = vpack.c.bf16 %v904, %v904
      %v1436 = vrot.slane %v1434, 3
      %v1439 = vsel %vm909, %v1434, %v1436
      %v1441 = vsel %vm914, %v1434, %v1436
      %v1443 = vrot.slane %v1441, 1
      %v1444 = vsel %vm918, %v1434, %v1436
      %v1446 = vrot.slane %v1444, 2
      %v1447 = vsel %vm922, %v1434, %v1436
      %v1449 = vrot.slane %v1447, 3
      %v1450 = vunpack.i.l.s16 %v1439
      %v1451 = vunpack.i.h.s16 %v1439
      %v1452 = vunpack.i.l.s16 %v1443
      %v1453 = vunpack.i.h.s16 %v1443
      %v1454 = vunpack.i.l.s16 %v1446
      %v1455 = vunpack.i.h.s16 %v1446
      %v1456 = vunpack.i.l.s16 %v1449
      %v1457 = vunpack.i.h.s16 %v1449
      %v1458 = vpack.i.b16 %v1450, %v1450
      %v1459 = vpack.i.b16 %v1451, %v1451
      %v1460 = vpack.i.b16 %v1452, %v1452
      %v1461 = vpack.i.b16 %v1453, %v1453
      %v1462 = vpack.i.b16 %v1454, %v1454
      %v1463 = vpack.i.b16 %v1455, %v1455
      %v1464 = vpack.i.b16 %v1456, %v1456
      %v1465 = vpack.i.b16 %v1457, %v1457
      %v1467 = vunpack.c.l.s4 286326784
      %v1468 = vunpack.c.0.s8 %v1467
      %v1469 = vperm.slane %v1458, %v1468
      %v1471 = vunpack.c.l.s4 286326784
      %v1472 = vunpack.c.0.s8 %v1471
      %v1473 = vperm.slane %v1459, %v1472
      %v1475 = vunpack.c.l.s4 286326784
      %v1476 = vunpack.c.0.s8 %v1475
      %v1477 = vperm.slane %v1460, %v1476
      %v1479 = vunpack.c.l.s4 286326784
      %v1480 = vunpack.c.0.s8 %v1479
      %v1481 = vperm.slane %v1461, %v1480
      %v1483 = vunpack.c.l.s4 286326784
      %v1484 = vunpack.c.0.s8 %v1483
      %v1485 = vperm.slane %v1462, %v1484
      %v1487 = vunpack.c.l.s4 286326784
      %v1488 = vunpack.c.0.s8 %v1487
      %v1489 = vperm.slane %v1463, %v1488
      %v1491 = vunpack.c.l.s4 286326784
      %v1492 = vunpack.c.0.s8 %v1491
      %v1493 = vperm.slane %v1464, %v1492
      %v1495 = vunpack.c.l.s4 286326784
      %v1496 = vunpack.c.0.s8 %v1495
      %v1497 = vperm.slane %v1465, %v1496
      %1498 = vrot.lane.b32.xlu0 %v1469, 112
      %v1499 = vpop.permute.xlu0 %1498
      %1500 = vrot.lane.b32.xlu0 %v1473, 112
      %v1501 = vpop.permute.xlu0 %1500
      %1502 = vrot.lane.b32.xlu0 %v1477, 112
      %v1503 = vpop.permute.xlu0 %1502
      %1504 = vrot.lane.b32.xlu0 %v1481, 112
      %v1505 = vpop.permute.xlu0 %1504
      %1506 = vrot.lane.b32.xlu0 %v1485, 112
      %v1507 = vpop.permute.xlu0 %1506
      %1508 = vrot.lane.b32.xlu0 %v1489, 112
      %v1509 = vpop.permute.xlu0 %1508
      %1510 = vrot.lane.b32.xlu0 %v1493, 112
      %v1511 = vpop.permute.xlu0 %1510
      %1512 = vrot.lane.b32.xlu0 %v1497, 112
      %v1513 = vpop.permute.xlu0 %1512
      %vm1522 = vcmask 125955
      %vm1523 = vsmask.f32 3328
      %vm1524 = vmand %vm1522, %vm1523
      %v1525 = vld [vmem:[%s210] sm:$0x8]
      %v1526 = vsel %vm1524, %v1499, %v1525
      %1527 = vst [vmem:[%s210] sm:$0x8] %v1526
      %v1528 = vld [vmem:[%s210 + $0x8] sm:$0x8]
      %v1529 = vsel %vm1524, %v1501, %v1528
      %1530 = vst [vmem:[%s210 + $0x8] sm:$0x8] %v1529
      %v1531 = vld [vmem:[%s210 + $0x10] sm:$0x8]
      %v1532 = vsel %vm1524, %v1503, %v1531
      %1533 = vst [vmem:[%s210 + $0x10] sm:$0x8] %v1532
      %v1534 = vld [vmem:[%s210 + $0x18] sm:$0x8]
      %v1535 = vsel %vm1524, %v1505, %v1534
      %1536 = vst [vmem:[%s210 + $0x18] sm:$0x8] %v1535
      %v1537 = vld [vmem:[%s210 + $0x20] sm:$0x8]
      %v1538 = vsel %vm1524, %v1507, %v1537
      %1539 = vst [vmem:[%s210 + $0x20] sm:$0x8] %v1538
      %v1540 = vld [vmem:[%s210 + $0x28] sm:$0x8]
      %v1541 = vsel %vm1524, %v1509, %v1540
      %1542 = vst [vmem:[%s210 + $0x28] sm:$0x8] %v1541
      %v1543 = vld [vmem:[%s210 + $0x30] sm:$0x8]
      %v1544 = vsel %vm1524, %v1511, %v1543
      %1545 = vst [vmem:[%s210 + $0x30] sm:$0x8] %v1544
      %v1546 = vld [vmem:[%s210 + $0x38] sm:$0x8]
      %v1547 = vsel %vm1524, %v1513, %v1546
      %1548 = vst [vmem:[%s210 + $0x38] sm:$0x8] %v1547
      %1549 = vrot.lane.b32.xlu0 %v904, 112
      %v1550 = vpop.permute.xlu0 %1549
      %v1552 = vsel %vm1009, %v1550, 0.0
      %1553 = vadd.xlane.f32.xlu0 %v1552
      %v1554 = vpop.xlane.xlu0 %1553
      %v1555 = vadd.f32 %v1421, %v1554
      %1556 = vrot.lane.b32.xlu0 %v1422, 112
      %v1557 = vpop.permute.xlu0 %1556
      %v1559 = vsel %vm1009, %v1557, 0.0
      %1560 = vadd.xlane.f32.xlu0 %v1559
      %v1561 = vpop.xlane.xlu0 %1560
      %v1562 = vadd.f32 %v1433, %v1561
      %1563 = vrot.lane.b32.xlu0 %v1469, 88
      %v1564 = vpop.permute.xlu0 %1563
      %1565 = vrot.lane.b32.xlu0 %v1473, 88
      %v1566 = vpop.permute.xlu0 %1565
      %1567 = vrot.lane.b32.xlu0 %v1477, 88
      %v1568 = vpop.permute.xlu0 %1567
      %1569 = vrot.lane.b32.xlu0 %v1481, 88
      %v1570 = vpop.permute.xlu0 %1569
      %1571 = vrot.lane.b32.xlu0 %v1485, 88
      %v1572 = vpop.permute.xlu0 %1571
      %1573 = vrot.lane.b32.xlu0 %v1489, 88
      %v1574 = vpop.permute.xlu0 %1573
      %1575 = vrot.lane.b32.xlu0 %v1493, 88
      %v1576 = vpop.permute.xlu0 %1575
      %1577 = vrot.lane.b32.xlu0 %v1497, 88
      %v1578 = vpop.permute.xlu0 %1577
      %vm1587 = vsmask.f32 7950
      %vm1588 = vmand %vm1522, %vm1587
      %v1589 = vld [vmem:[%s210] sm:$0x8]
      %v1590 = vsel %vm1588, %v1564, %v1589
      %1591 = vst [vmem:[%s210] sm:$0x8] %v1590
      %v1592 = vld [vmem:[%s210 + $0x8] sm:$0x8]
      %v1593 = vsel %vm1588, %v1566, %v1592
      %1594 = vst [vmem:[%s210 + $0x8] sm:$0x8] %v1593
      %v1595 = vld [vmem:[%s210 + $0x10] sm:$0x8]
      %v1596 = vsel %vm1588, %v1568, %v1595
      %1597 = vst [vmem:[%s210 + $0x10] sm:$0x8] %v1596
      %v1598 = vld [vmem:[%s210 + $0x18] sm:$0x8]
      %v1599 = vsel %vm1588, %v1570, %v1598
      %1600 = vst [vmem:[%s210 + $0x18] sm:$0x8] %v1599
      %v1601 = vld [vmem:[%s210 + $0x20] sm:$0x8]
      %v1602 = vsel %vm1588, %v1572, %v1601
      %1603 = vst [vmem:[%s210 + $0x20] sm:$0x8] %v1602
      %v1604 = vld [vmem:[%s210 + $0x28] sm:$0x8]
      %v1605 = vsel %vm1588, %v1574, %v1604
      %1606 = vst [vmem:[%s210 + $0x28] sm:$0x8] %v1605
      %v1607 = vld [vmem:[%s210 + $0x30] sm:$0x8]
      %v1608 = vsel %vm1588, %v1576, %v1607
      %1609 = vst [vmem:[%s210 + $0x30] sm:$0x8] %v1608
      %v1610 = vld [vmem:[%s210 + $0x38] sm:$0x8]
      %v1611 = vsel %vm1588, %v1578, %v1610
      %1612 = vst [vmem:[%s210 + $0x38] sm:$0x8] %v1611
      %1613 = vrot.lane.b32.xlu0 %v904, 88
      %v1614 = vpop.permute.xlu0 %1613
      %v1616 = vsel %vm1009, %v1614, 0.0
      %1617 = vadd.xlane.f32.xlu0 %v1616
      %v1618 = vpop.xlane.xlu0 %1617
      %v1619 = vadd.f32 %v1555, %v1618
      %1620 = vrot.lane.b32.xlu0 %v1422, 88
      %v1621 = vpop.permute.xlu0 %1620
      %v1623 = vsel %vm1009, %v1621, 0.0
      %1624 = vadd.xlane.f32.xlu0 %v1623
      %v1625 = vpop.xlane.xlu0 %1624
      %v1626 = vadd.f32 %v1562, %v1625
      %1627 = vrot.lane.b32.xlu0 %v1469, 64
      %v1628 = vpop.permute.xlu0 %1627
      %1629 = vrot.lane.b32.xlu0 %v1473, 64
      %v1630 = vpop.permute.xlu0 %1629
      %1631 = vrot.lane.b32.xlu0 %v1477, 64
      %v1632 = vpop.permute.xlu0 %1631
      %1633 = vrot.lane.b32.xlu0 %v1481, 64
      %v1634 = vpop.permute.xlu0 %1633
      %1635 = vrot.lane.b32.xlu0 %v1485, 64
      %v1636 = vpop.permute.xlu0 %1635
      %1637 = vrot.lane.b32.xlu0 %v1489, 64
      %v1638 = vpop.permute.xlu0 %1637
      %1639 = vrot.lane.b32.xlu0 %v1493, 64
      %v1640 = vpop.permute.xlu0 %1639
      %1641 = vrot.lane.b32.xlu0 %v1497, 64
      %v1642 = vpop.permute.xlu0 %1641
      %v1651 = vld [vmem:[%s210 + $0x4] sm:$0x1]
      %v1652 = vsel %vm984, %v1628, %v1651
      %1653 = vst [vmem:[%s210 + $0x4] sm:$0x1] %v1652
      %v1654 = vld [vmem:[%s210 + $0xc] sm:$0x1]
      %v1655 = vsel %vm984, %v1630, %v1654
      %1656 = vst [vmem:[%s210 + $0xc] sm:$0x1] %v1655
      %v1657 = vld [vmem:[%s210 + $0x14] sm:$0x1]
      %v1658 = vsel %vm984, %v1632, %v1657
      %1659 = vst [vmem:[%s210 + $0x14] sm:$0x1] %v1658
      %v1660 = vld [vmem:[%s210 + $0x1c] sm:$0x1]
      %v1661 = vsel %vm984, %v1634, %v1660
      %1662 = vst [vmem:[%s210 + $0x1c] sm:$0x1] %v1661
      %v1663 = vld [vmem:[%s210 + $0x24] sm:$0x1]
      %v1664 = vsel %vm984, %v1636, %v1663
      %1665 = vst [vmem:[%s210 + $0x24] sm:$0x1] %v1664
      %v1666 = vld [vmem:[%s210 + $0x2c] sm:$0x1]
      %v1667 = vsel %vm984, %v1638, %v1666
      %1668 = vst [vmem:[%s210 + $0x2c] sm:$0x1] %v1667
      %v1669 = vld [vmem:[%s210 + $0x34] sm:$0x1]
      %v1670 = vsel %vm984, %v1640, %v1669
      %1671 = vst [vmem:[%s210 + $0x34] sm:$0x1] %v1670
      %v1672 = vld [vmem:[%s210 + $0x3c] sm:$0x1]
      %v1673 = vsel %vm984, %v1642, %v1672
      %1674 = vst [vmem:[%s210 + $0x3c] sm:$0x1] %v1673
      %1675 = vrot.lane.b32.xlu0 %v904, 64
      %v1676 = vpop.permute.xlu0 %1675
      %v1678 = vsel %vm1009, %v1676, 0.0
      %1679 = vadd.xlane.f32.xlu0 %v1678
      %v1680 = vpop.xlane.xlu0 %1679
      %v1681 = vadd.f32 %v1619, %v1680
      %1682 = vrot.lane.b32.xlu0 %v1422, 64
      %v1683 = vpop.permute.xlu0 %1682
      %v1685 = vsel %vm1009, %v1683, 0.0
      %1686 = vadd.xlane.f32.xlu0 %v1685
      %v1687 = vpop.xlane.xlu0 %1686
      %v1688 = vadd.f32 %v1626, %v1687
      %1689 = vrot.lane.b32.xlu0 %v1469, 40
      %v1690 = vpop.permute.xlu0 %1689
      %1691 = vrot.lane.b32.xlu0 %v1473, 40
      %v1692 = vpop.permute.xlu0 %1691
      %1693 = vrot.lane.b32.xlu0 %v1477, 40
      %v1694 = vpop.permute.xlu0 %1693
      %1695 = vrot.lane.b32.xlu0 %v1481, 40
      %v1696 = vpop.permute.xlu0 %1695
      %1697 = vrot.lane.b32.xlu0 %v1485, 40
      %v1698 = vpop.permute.xlu0 %1697
      %1699 = vrot.lane.b32.xlu0 %v1489, 40
      %v1700 = vpop.permute.xlu0 %1699
      %1701 = vrot.lane.b32.xlu0 %v1493, 40
      %v1702 = vpop.permute.xlu0 %1701
      %1703 = vrot.lane.b32.xlu0 %v1497, 40
      %v1704 = vpop.permute.xlu0 %1703
      %v1713 = vld [vmem:[%s210 + $0x4] sm:$0x1]
      %v1714 = vsel %vm1044, %v1690, %v1713
      %1715 = vst [vmem:[%s210 + $0x4] sm:$0x1] %v1714
      %v1716 = vld [vmem:[%s210 + $0xc] sm:$0x1]
      %v1717 = vsel %vm1044, %v1692, %v1716
      %1718 = vst [vmem:[%s210 + $0xc] sm:$0x1] %v1717
      %v1719 = vld [vmem:[%s210 + $0x14] sm:$0x1]
      %v1720 = vsel %vm1044, %v1694, %v1719
      %1721 = vst [vmem:[%s210 + $0x14] sm:$0x1] %v1720
      %v1722 = vld [vmem:[%s210 + $0x1c] sm:$0x1]
      %v1723 = vsel %vm1044, %v1696, %v1722
      %1724 = vst [vmem:[%s210 + $0x1c] sm:$0x1] %v1723
      %v1725 = vld [vmem:[%s210 + $0x24] sm:$0x1]
      %v1726 = vsel %vm1044, %v1698, %v1725
      %1727 = vst [vmem:[%s210 + $0x24] sm:$0x1] %v1726
      %v1728 = vld [vmem:[%s210 + $0x2c] sm:$0x1]
      %v1729 = vsel %vm1044, %v1700, %v1728
      %1730 = vst [vmem:[%s210 + $0x2c] sm:$0x1] %v1729
      %v1731 = vld [vmem:[%s210 + $0x34] sm:$0x1]
      %v1732 = vsel %vm1044, %v1702, %v1731
      %1733 = vst [vmem:[%s210 + $0x34] sm:$0x1] %v1732
      %v1734 = vld [vmem:[%s210 + $0x3c] sm:$0x1]
      %v1735 = vsel %vm1044, %v1704, %v1734
      %1736 = vst [vmem:[%s210 + $0x3c] sm:$0x1] %v1735
      %1737 = vrot.lane.b32.xlu0 %v904, 40
      %v1738 = vpop.permute.xlu0 %1737
      %v1740 = vsel %vm1009, %v1738, 0.0
      %1741 = vadd.xlane.f32.xlu0 %v1740
      %v1742 = vpop.xlane.xlu0 %1741
      %v1743 = vadd.f32 %v1681, %v1742
      %1744 = vrot.lane.b32.xlu0 %v1422, 40
      %v1745 = vpop.permute.xlu0 %1744
      %v1747 = vsel %vm1009, %v1745, 0.0
      %1748 = vadd.xlane.f32.xlu0 %v1747
      %v1749 = vpop.xlane.xlu0 %1748
      %v1750 = vadd.f32 %v1688, %v1749
      %1751 = vrot.lane.b32.xlu0 %v1469, 16
      %v1752 = vpop.permute.xlu0 %1751
      %1753 = vrot.lane.b32.xlu0 %v1473, 16
      %v1754 = vpop.permute.xlu0 %1753
      %1755 = vrot.lane.b32.xlu0 %v1477, 16
      %v1756 = vpop.permute.xlu0 %1755
      %1757 = vrot.lane.b32.xlu0 %v1481, 16
      %v1758 = vpop.permute.xlu0 %1757
      %1759 = vrot.lane.b32.xlu0 %v1485, 16
      %v1760 = vpop.permute.xlu0 %1759
      %1761 = vrot.lane.b32.xlu0 %v1489, 16
      %v1762 = vpop.permute.xlu0 %1761
      %1763 = vrot.lane.b32.xlu0 %v1493, 16
      %v1764 = vpop.permute.xlu0 %1763
      %1765 = vrot.lane.b32.xlu0 %v1497, 16
      %v1766 = vpop.permute.xlu0 %1765
      %v1775 = vld [vmem:[%s210 + $0x4] sm:$0x2]
      %v1776 = vsel %vm1111, %v1752, %v1775
      %1777 = vst [vmem:[%s210 + $0x4] sm:$0x2] %v1776
      %v1778 = vld [vmem:[%s210 + $0xc] sm:$0x2]
      %v1779 = vsel %vm1111, %v1754, %v1778
      %1780 = vst [vmem:[%s210 + $0xc] sm:$0x2] %v1779
      %v1781 = vld [vmem:[%s210 + $0x14] sm:$0x2]
      %v1782 = vsel %vm1111, %v1756, %v1781
      %1783 = vst [vmem:[%s210 + $0x14] sm:$0x2] %v1782
      %v1784 = vld [vmem:[%s210 + $0x1c] sm:$0x2]
      %v1785 = vsel %vm1111, %v1758, %v1784
      %1786 = vst [vmem:[%s210 + $0x1c] sm:$0x2] %v1785
      %v1787 = vld [vmem:[%s210 + $0x24] sm:$0x2]
      %v1788 = vsel %vm1111, %v1760, %v1787
      %1789 = vst [vmem:[%s210 + $0x24] sm:$0x2] %v1788
      %v1790 = vld [vmem:[%s210 + $0x2c] sm:$0x2]
      %v1791 = vsel %vm1111, %v1762, %v1790
      %1792 = vst [vmem:[%s210 + $0x2c] sm:$0x2] %v1791
      %v1793 = vld [vmem:[%s210 + $0x34] sm:$0x2]
      %v1794 = vsel %vm1111, %v1764, %v1793
      %1795 = vst [vmem:[%s210 + $0x34] sm:$0x2] %v1794
      %v1796 = vld [vmem:[%s210 + $0x3c] sm:$0x2]
      %v1797 = vsel %vm1111, %v1766, %v1796
      %1798 = vst [vmem:[%s210 + $0x3c] sm:$0x2] %v1797
      %1799 = vrot.lane.b32.xlu0 %v904, 16
      %v1800 = vpop.permute.xlu0 %1799
      %v1802 = vsel %vm1009, %v1800, 0.0
      %1803 = vadd.xlane.f32.xlu0 %v1802
      %v1804 = vpop.xlane.xlu0 %1803
      %v1805 = vadd.f32 %v1743, %v1804
      %1806 = vrot.lane.b32.xlu0 %v1422, 16
      %v1807 = vpop.permute.xlu0 %1806
      %v1809 = vsel %vm1009, %v1807, 0.0
      %1810 = vadd.xlane.f32.xlu0 %v1809
      %v1811 = vpop.xlane.xlu0 %1810
      %v1812 = vadd.f32 %v1750, %v1811
      %v1813 = vpack.c.bf16 %v905, %v905
      %v1815 = vrot.slane %v1813, 3
      %v1818 = vsel %vm909, %v1813, %v1815
      %v1820 = vsel %vm914, %v1813, %v1815
      %v1822 = vrot.slane %v1820, 1
      %v1823 = vsel %vm918, %v1813, %v1815
      %v1825 = vrot.slane %v1823, 2
      %v1826 = vsel %vm922, %v1813, %v1815
      %v1828 = vrot.slane %v1826, 3
      %v1829 = vunpack.i.l.s16 %v1818
      %v1830 = vunpack.i.h.s16 %v1818
      %v1831 = vunpack.i.l.s16 %v1822
      %v1832 = vunpack.i.h.s16 %v1822
      %v1833 = vunpack.i.l.s16 %v1825
      %v1834 = vunpack.i.h.s16 %v1825
      %v1835 = vunpack.i.l.s16 %v1828
      %v1836 = vunpack.i.h.s16 %v1828
      %v1837 = vpack.i.b16 %v1829, %v1829
      %v1838 = vpack.i.b16 %v1830, %v1830
      %v1839 = vpack.i.b16 %v1831, %v1831
      %v1840 = vpack.i.b16 %v1832, %v1832
      %v1841 = vpack.i.b16 %v1833, %v1833
      %v1842 = vpack.i.b16 %v1834, %v1834
      %v1843 = vpack.i.b16 %v1835, %v1835
      %v1844 = vpack.i.b16 %v1836, %v1836
      %v1846 = vunpack.c.l.s4 286326784
      %v1847 = vunpack.c.0.s8 %v1846
      %v1848 = vperm.slane %v1837, %v1847
      %v1850 = vunpack.c.l.s4 286326784
      %v1851 = vunpack.c.0.s8 %v1850
      %v1852 = vperm.slane %v1838, %v1851
      %v1854 = vunpack.c.l.s4 286326784
      %v1855 = vunpack.c.0.s8 %v1854
      %v1856 = vperm.slane %v1839, %v1855
      %v1858 = vunpack.c.l.s4 286326784
      %v1859 = vunpack.c.0.s8 %v1858
      %v1860 = vperm.slane %v1840, %v1859
      %v1862 = vunpack.c.l.s4 286326784
      %v1863 = vunpack.c.0.s8 %v1862
      %v1864 = vperm.slane %v1841, %v1863
      %v1866 = vunpack.c.l.s4 286326784
      %v1867 = vunpack.c.0.s8 %v1866
      %v1868 = vperm.slane %v1842, %v1867
      %v1870 = vunpack.c.l.s4 286326784
      %v1871 = vunpack.c.0.s8 %v1870
      %v1872 = vperm.slane %v1843, %v1871
      %v1874 = vunpack.c.l.s4 286326784
      %v1875 = vunpack.c.0.s8 %v1874
      %v1876 = vperm.slane %v1844, %v1875
      %1877 = vrot.lane.b32.xlu0 %v1848, 120
      %v1878 = vpop.permute.xlu0 %1877
      %1879 = vrot.lane.b32.xlu0 %v1852, 120
      %v1880 = vpop.permute.xlu0 %1879
      %1881 = vrot.lane.b32.xlu0 %v1856, 120
      %v1882 = vpop.permute.xlu0 %1881
      %1883 = vrot.lane.b32.xlu0 %v1860, 120
      %v1884 = vpop.permute.xlu0 %1883
      %1885 = vrot.lane.b32.xlu0 %v1864, 120
      %v1886 = vpop.permute.xlu0 %1885
      %1887 = vrot.lane.b32.xlu0 %v1868, 120
      %v1888 = vpop.permute.xlu0 %1887
      %1889 = vrot.lane.b32.xlu0 %v1872, 120
      %v1890 = vpop.permute.xlu0 %1889
      %1891 = vrot.lane.b32.xlu0 %v1876, 120
      %v1892 = vpop.permute.xlu0 %1891
      %v1901 = vld [vmem:[%s210 + $0x4] sm:$0x2]
      %v1902 = vsel %vm1175, %v1878, %v1901
      %1903 = vst [vmem:[%s210 + $0x4] sm:$0x2] %v1902
      %v1904 = vld [vmem:[%s210 + $0xc] sm:$0x2]
      %v1905 = vsel %vm1175, %v1880, %v1904
      %1906 = vst [vmem:[%s210 + $0xc] sm:$0x2] %v1905
      %v1907 = vld [vmem:[%s210 + $0x14] sm:$0x2]
      %v1908 = vsel %vm1175, %v1882, %v1907
      %1909 = vst [vmem:[%s210 + $0x14] sm:$0x2] %v1908
      %v1910 = vld [vmem:[%s210 + $0x1c] sm:$0x2]
      %v1911 = vsel %vm1175, %v1884, %v1910
      %1912 = vst [vmem:[%s210 + $0x1c] sm:$0x2] %v1911
      %v1913 = vld [vmem:[%s210 + $0x24] sm:$0x2]
      %v1914 = vsel %vm1175, %v1886, %v1913
      %1915 = vst [vmem:[%s210 + $0x24] sm:$0x2] %v1914
      %v1916 = vld [vmem:[%s210 + $0x2c] sm:$0x2]
      %v1917 = vsel %vm1175, %v1888, %v1916
      %1918 = vst [vmem:[%s210 + $0x2c] sm:$0x2] %v1917
      %v1919 = vld [vmem:[%s210 + $0x34] sm:$0x2]
      %v1920 = vsel %vm1175, %v1890, %v1919
      %1921 = vst [vmem:[%s210 + $0x34] sm:$0x2] %v1920
      %v1922 = vld [vmem:[%s210 + $0x3c] sm:$0x2]
      %v1923 = vsel %vm1175, %v1892, %v1922
      %1924 = vst [vmem:[%s210 + $0x3c] sm:$0x2] %v1923
      %1926 = vrot.lane.b32.xlu0 %v905, 120
      %v1927 = vpop.permute.xlu0 %1926
      %v1929 = vsel %vm1009, %v1927, 0.0
      %1930 = vadd.xlane.f32.xlu0 %v1929
      %v1931 = vpop.xlane.xlu0 %1930
      %v1932 = vadd.f32 %v1805, %v1931
      %v1933 = vmul.f32 %v905, %v905
      %1935 = vrot.lane.b32.xlu0 %v1933, 120
      %v1936 = vpop.permute.xlu0 %1935
      %v1938 = vsel %vm1009, %v1936, 0.0
      %1939 = vadd.xlane.f32.xlu0 %v1938
      %v1940 = vpop.xlane.xlu0 %1939
      %v1941 = vadd.f32 %v1812, %v1940
      %1942 = vrot.lane.b32.xlu0 %v1848, 96
      %v1943 = vpop.permute.xlu0 %1942
      %1944 = vrot.lane.b32.xlu0 %v1852, 96
      %v1945 = vpop.permute.xlu0 %1944
      %1946 = vrot.lane.b32.xlu0 %v1856, 96
      %v1947 = vpop.permute.xlu0 %1946
      %1948 = vrot.lane.b32.xlu0 %v1860, 96
      %v1949 = vpop.permute.xlu0 %1948
      %1950 = vrot.lane.b32.xlu0 %v1864, 96
      %v1951 = vpop.permute.xlu0 %1950
      %1952 = vrot.lane.b32.xlu0 %v1868, 96
      %v1953 = vpop.permute.xlu0 %1952
      %1954 = vrot.lane.b32.xlu0 %v1872, 96
      %v1955 = vpop.permute.xlu0 %1954
      %1956 = vrot.lane.b32.xlu0 %v1876, 96
      %v1957 = vpop.permute.xlu0 %1956
      %v1966 = vld [vmem:[%s210 + $0x4] sm:$0x4]
      %v1967 = vsel %vm1240, %v1943, %v1966
      %1968 = vst [vmem:[%s210 + $0x4] sm:$0x4] %v1967
      %v1969 = vld [vmem:[%s210 + $0xc] sm:$0x4]
      %v1970 = vsel %vm1240, %v1945, %v1969
      %1971 = vst [vmem:[%s210 + $0xc] sm:$0x4] %v1970
      %v1972 = vld [vmem:[%s210 + $0x14] sm:$0x4]
      %v1973 = vsel %vm1240, %v1947, %v1972
      %1974 = vst [vmem:[%s210 + $0x14] sm:$0x4] %v1973
      %v1975 = vld [vmem:[%s210 + $0x1c] sm:$0x4]
      %v1976 = vsel %vm1240, %v1949, %v1975
      %1977 = vst [vmem:[%s210 + $0x1c] sm:$0x4] %v1976
      %v1978 = vld [vmem:[%s210 + $0x24] sm:$0x4]
      %v1979 = vsel %vm1240, %v1951, %v1978
      %1980 = vst [vmem:[%s210 + $0x24] sm:$0x4] %v1979
      %v1981 = vld [vmem:[%s210 + $0x2c] sm:$0x4]
      %v1982 = vsel %vm1240, %v1953, %v1981
      %1983 = vst [vmem:[%s210 + $0x2c] sm:$0x4] %v1982
      %v1984 = vld [vmem:[%s210 + $0x34] sm:$0x4]
      %v1985 = vsel %vm1240, %v1955, %v1984
      %1986 = vst [vmem:[%s210 + $0x34] sm:$0x4] %v1985
      %v1987 = vld [vmem:[%s210 + $0x3c] sm:$0x4]
      %v1988 = vsel %vm1240, %v1957, %v1987
      %1989 = vst [vmem:[%s210 + $0x3c] sm:$0x4] %v1988
      %1990 = vrot.lane.b32.xlu0 %v905, 96
      %v1991 = vpop.permute.xlu0 %1990
      %v1993 = vsel %vm1009, %v1991, 0.0
      %1994 = vadd.xlane.f32.xlu0 %v1993
      %v1995 = vpop.xlane.xlu0 %1994
      %v1996 = vadd.f32 %v1932, %v1995
      %1997 = vrot.lane.b32.xlu0 %v1933, 96
      %v1998 = vpop.permute.xlu0 %1997
      %v2000 = vsel %vm1009, %v1998, 0.0
      %2001 = vadd.xlane.f32.xlu0 %v2000
      %v2002 = vpop.xlane.xlu0 %2001
      %v2003 = vadd.f32 %v1941, %v2002
      %2004 = vrot.lane.b32.xlu0 %v1848, 72
      %v2005 = vpop.permute.xlu0 %2004
      %2006 = vrot.lane.b32.xlu0 %v1852, 72
      %v2007 = vpop.permute.xlu0 %2006
      %2008 = vrot.lane.b32.xlu0 %v1856, 72
      %v2009 = vpop.permute.xlu0 %2008
      %2010 = vrot.lane.b32.xlu0 %v1860, 72
      %v2011 = vpop.permute.xlu0 %2010
      %2012 = vrot.lane.b32.xlu0 %v1864, 72
      %v2013 = vpop.permute.xlu0 %2012
      %2014 = vrot.lane.b32.xlu0 %v1868, 72
      %v2015 = vpop.permute.xlu0 %2014
      %2016 = vrot.lane.b32.xlu0 %v1872, 72
      %v2017 = vpop.permute.xlu0 %2016
      %2018 = vrot.lane.b32.xlu0 %v1876, 72
      %v2019 = vpop.permute.xlu0 %2018
      %v2028 = vld [vmem:[%s210 + $0x4] sm:$0x4]
      %v2029 = vsel %vm1385, %v2005, %v2028
      %2030 = vst [vmem:[%s210 + $0x4] sm:$0x4] %v2029
      %v2031 = vld [vmem:[%s210 + $0xc] sm:$0x4]
      %v2032 = vsel %vm1385, %v2007, %v2031
      %2033 = vst [vmem:[%s210 + $0xc] sm:$0x4] %v2032
      %v2034 = vld [vmem:[%s210 + $0x14] sm:$0x4]
      %v2035 = vsel %vm1385, %v2009, %v2034
      %2036 = vst [vmem:[%s210 + $0x14] sm:$0x4] %v2035
      %v2037 = vld [vmem:[%s210 + $0x1c] sm:$0x4]
      %v2038 = vsel %vm1385, %v2011, %v2037
      %2039 = vst [vmem:[%s210 + $0x1c] sm:$0x4] %v2038
      %v2040 = vld [vmem:[%s210 + $0x24] sm:$0x4]
      %v2041 = vsel %vm1385, %v2013, %v2040
      %2042 = vst [vmem:[%s210 + $0x24] sm:$0x4] %v2041
      %v2043 = vld [vmem:[%s210 + $0x2c] sm:$0x4]
      %v2044 = vsel %vm1385, %v2015, %v2043
      %2045 = vst [vmem:[%s210 + $0x2c] sm:$0x4] %v2044
      %v2046 = vld [vmem:[%s210 + $0x34] sm:$0x4]
      %v2047 = vsel %vm1385, %v2017, %v2046
      %2048 = vst [vmem:[%s210 + $0x34] sm:$0x4] %v2047
      %v2049 = vld [vmem:[%s210 + $0x3c] sm:$0x4]
      %v2050 = vsel %vm1385, %v2019, %v2049
      %2051 = vst [vmem:[%s210 + $0x3c] sm:$0x4] %v2050
      %2052 = vrot.lane.b32.xlu0 %v905, 72
      %v2053 = vpop.permute.xlu0 %2052
      %v2055 = vsel %vm1009, %v2053, 0.0
      %2056 = vadd.xlane.f32.xlu0 %v2055
      %v2057 = vpop.xlane.xlu0 %2056
      %v2058 = vadd.f32 %v1996, %v2057
      %2059 = vrot.lane.b32.xlu0 %v1933, 72
      %v2060 = vpop.permute.xlu0 %2059
      %v2062 = vsel %vm1009, %v2060, 0.0
      %2063 = vadd.xlane.f32.xlu0 %v2062
      %v2064 = vpop.xlane.xlu0 %2063
      %v2065 = vadd.f32 %v2003, %v2064
      %2066 = vrot.lane.b32.xlu0 %v1848, 48
      %v2067 = vpop.permute.xlu0 %2066
      %2068 = vrot.lane.b32.xlu0 %v1852, 48
      %v2069 = vpop.permute.xlu0 %2068
      %2070 = vrot.lane.b32.xlu0 %v1856, 48
      %v2071 = vpop.permute.xlu0 %2070
      %2072 = vrot.lane.b32.xlu0 %v1860, 48
      %v2073 = vpop.permute.xlu0 %2072
      %2074 = vrot.lane.b32.xlu0 %v1864, 48
      %v2075 = vpop.permute.xlu0 %2074
      %2076 = vrot.lane.b32.xlu0 %v1868, 48
      %v2077 = vpop.permute.xlu0 %2076
      %2078 = vrot.lane.b32.xlu0 %v1872, 48
      %v2079 = vpop.permute.xlu0 %2078
      %2080 = vrot.lane.b32.xlu0 %v1876, 48
      %v2081 = vpop.permute.xlu0 %2080
      %v2090 = vld [vmem:[%s210 + $0x4] sm:$0x8]
      %v2091 = vsel %vm1524, %v2067, %v2090
      %2092 = vst [vmem:[%s210 + $0x4] sm:$0x8] %v2091
      %v2093 = vld [vmem:[%s210 + $0xc] sm:$0x8]
      %v2094 = vsel %vm1524, %v2069, %v2093
      %2095 = vst [vmem:[%s210 + $0xc] sm:$0x8] %v2094
      %v2096 = vld [vmem:[%s210 + $0x14] sm:$0x8]
      %v2097 = vsel %vm1524, %v2071, %v2096
      %2098 = vst [vmem:[%s210 + $0x14] sm:$0x8] %v2097
      %v2099 = vld [vmem:[%s210 + $0x1c] sm:$0x8]
      %v2100 = vsel %vm1524, %v2073, %v2099
      %2101 = vst [vmem:[%s210 + $0x1c] sm:$0x8] %v2100
      %v2102 = vld [vmem:[%s210 + $0x24] sm:$0x8]
      %v2103 = vsel %vm1524, %v2075, %v2102
      %2104 = vst [vmem:[%s210 + $0x24] sm:$0x8] %v2103
      %v2105 = vld [vmem:[%s210 + $0x2c] sm:$0x8]
      %v2106 = vsel %vm1524, %v2077, %v2105
      %2107 = vst [vmem:[%s210 + $0x2c] sm:$0x8] %v2106
      %v2108 = vld [vmem:[%s210 + $0x34] sm:$0x8]
      %v2109 = vsel %vm1524, %v2079, %v2108
      %2110 = vst [vmem:[%s210 + $0x34] sm:$0x8] %v2109
      %v2111 = vld [vmem:[%s210 + $0x3c] sm:$0x8]
      %v2112 = vsel %vm1524, %v2081, %v2111
      %2113 = vst [vmem:[%s210 + $0x3c] sm:$0x8] %v2112
      %2114 = vrot.lane.b32.xlu0 %v905, 48
      %v2115 = vpop.permute.xlu0 %2114
      %v2117 = vsel %vm1009, %v2115, 0.0
      %2118 = vadd.xlane.f32.xlu0 %v2117
      %v2119 = vpop.xlane.xlu0 %2118
      %v2120 = vadd.f32 %v2058, %v2119
      %2121 = vrot.lane.b32.xlu0 %v1933, 48
      %v2122 = vpop.permute.xlu0 %2121
      %v2124 = vsel %vm1009, %v2122, 0.0
      %2125 = vadd.xlane.f32.xlu0 %v2124
      %v2126 = vpop.xlane.xlu0 %2125
      %v2127 = vadd.f32 %v2065, %v2126
      %2128 = vrot.lane.b32.xlu0 %v1848, 24
      %v2129 = vpop.permute.xlu0 %2128
      %2130 = vrot.lane.b32.xlu0 %v1852, 24
      %v2131 = vpop.permute.xlu0 %2130
      %2132 = vrot.lane.b32.xlu0 %v1856, 24
      %v2133 = vpop.permute.xlu0 %2132
      %2134 = vrot.lane.b32.xlu0 %v1860, 24
      %v2135 = vpop.permute.xlu0 %2134
      %2136 = vrot.lane.b32.xlu0 %v1864, 24
      %v2137 = vpop.permute.xlu0 %2136
      %2138 = vrot.lane.b32.xlu0 %v1868, 24
      %v2139 = vpop.permute.xlu0 %2138
      %2140 = vrot.lane.b32.xlu0 %v1872, 24
      %v2141 = vpop.permute.xlu0 %2140
      %2142 = vrot.lane.b32.xlu0 %v1876, 24
      %v2143 = vpop.permute.xlu0 %2142
      %v2152 = vld [vmem:[%s210 + $0x4] sm:$0x8]
      %v2153 = vsel %vm1588, %v2129, %v2152
      %2154 = vst [vmem:[%s210 + $0x4] sm:$0x8] %v2153
      %v2155 = vld [vmem:[%s210 + $0xc] sm:$0x8]
      %v2156 = vsel %vm1588, %v2131, %v2155
      %2157 = vst [vmem:[%s210 + $0xc] sm:$0x8] %v2156
      %v2158 = vld [vmem:[%s210 + $0x14] sm:$0x8]
      %v2159 = vsel %vm1588, %v2133, %v2158
      %2160 = vst [vmem:[%s210 + $0x14] sm:$0x8] %v2159
      %v2161 = vld [vmem:[%s210 + $0x1c] sm:$0x8]
      %v2162 = vsel %vm1588, %v2135, %v2161
      %2163 = vst [vmem:[%s210 + $0x1c] sm:$0x8] %v2162
      %v2164 = vld [vmem:[%s210 + $0x24] sm:$0x8]
      %v2165 = vsel %vm1588, %v2137, %v2164
      %2166 = vst [vmem:[%s210 + $0x24] sm:$0x8] %v2165
      %v2167 = vld [vmem:[%s210 + $0x2c] sm:$0x8]
      %v2168 = vsel %vm1588, %v2139, %v2167
      %2169 = vst [vmem:[%s210 + $0x2c] sm:$0x8] %v2168
      %v2170 = vld [vmem:[%s210 + $0x34] sm:$0x8]
      %v2171 = vsel %vm1588, %v2141, %v2170
      %2172 = vst [vmem:[%s210 + $0x34] sm:$0x8] %v2171
      %v2173 = vld [vmem:[%s210 + $0x3c] sm:$0x8]
      %v2174 = vsel %vm1588, %v2143, %v2173
      %2175 = vst [vmem:[%s210 + $0x3c] sm:$0x8] %v2174
      %2176 = vrot.lane.b32.xlu0 %v905, 24
      %v2177 = vpop.permute.xlu0 %2176
      %v2179 = vsel %vm1009, %v2177, 0.0
      %2180 = vadd.xlane.f32.xlu0 %v2179
      %v2181 = vpop.xlane.xlu0 %2180
      %v2182 = vadd.f32 %v2120, %v2181
      %2183 = vrot.lane.b32.xlu0 %v1933, 24
      %v2184 = vpop.permute.xlu0 %2183
      %v2186 = vsel %vm1009, %v2184, 0.0
      %2187 = vadd.xlane.f32.xlu0 %v2186
      %v2188 = vpop.xlane.xlu0 %2187
      %v2189 = vadd.f32 %v2127, %v2188
      %vm2190 = vcmask 7168
      %2191 = vst.msk [vmem:[%s214] sm:$0xff] %vm2190, %v2182
      %2192 = vst.msk [vmem:[%s218] sm:$0xff] %vm2190, %v2189
      %p2193 = scmp.lt.s32.totalorder %s16, 1
      %s2194 = scalar_select %p2193, %s16, 1
      %s2195 = smul.addr %s2194, 16
      %s2196 = smul.addr %s2195, 4
      %s2197 = scalar_lea.vmem %s2, %s2196
      %p2198 = scmp.lt.s32.totalorder %s16, 1
      %s2199 = scalar_select %p2198, %s16, 1
      %s2200 = smul.addr %s2199, 8
      %s2201 = scalar_lea.vmem %s3, %s2200
      %p2202 = scmp.lt.s32.totalorder %s16, 1
      %s2203 = scalar_select %p2202, %s16, 1
      %s2204 = smul.addr %s2203, 8
      %s2205 = scalar_lea.vmem %s4, %s2204
      // Predicated region
      $region29: #{cnn_block_forward.2} parent=27 // pred_check
        %p2206 = pneg %p81
      $region30: #{cnn_block_forward.2} parent=27 // pred_check_branch
        %2208 = sbr.rel (%p2206) target = $region32
      $region31: #{cnn_block_forward.2} parent=27 // pred_region
        _
      $region32: #{cnn_block_forward.2} parent=27 // pred_fallthru
        _
      // Predicated region
      $region33: #{cnn_block_forward.2} parent=27 // pred_check
        %p2209 = pneg %p107
      $region34: #{cnn_block_forward.2} parent=27 // pred_check_branch
        %2211 = sbr.rel (%p2209) target = $region36
      $region35: #{cnn_block_forward.2} parent=27 // pred_region
        _
      $region36: #{cnn_block_forward.2} parent=27 // pred_fallthru
        _
      // Predicated region
      $region37: #{cnn_block_forward.2} parent=27 // pred_check
        %p2212 = pneg %p133
      $region38: #{cnn_block_forward.2} parent=27 // pred_check_branch
        %2214 = sbr.rel (%p2212) target = $region40
      $region39: #{cnn_block_forward.2} parent=27 // pred_region
        _
      $region40: #{cnn_block_forward.2} parent=27 // pred_fallthru
        _
    $region28: #{cnn_block_forward.2} parent=5 // pred_fallthru
      _
    %p2215 = scmp.le.s32.totalorder 2, %s11
    // Predicated region
    $region41: #{cnn_block_forward.2} parent=5 // pred_check
      %p2216 = pneg %p2215
    $region42: #{cnn_block_forward.2} parent=5 // pred_check_branch
      %2218 = sbr.rel (%p2216) target = $region44
    $region43: #{cnn_block_forward.2} parent=5 // pred_region
      %s2219 = ssub.s32 %s11, 2
      // Predicated region
      $region45: #{cnn_block_forward.2} parent=43 // pred_check
        %p2220 = pneg %p87
      $region46: #{cnn_block_forward.2} parent=43 // pred_check_branch
        %2222 = sbr.rel (%p2220) target = $region48
      $region47: #{cnn_block_forward.2} parent=43 // pred_region
        %p2223 = scmp.lt.s32.totalorder %s17, 1
        %s2224 = scalar_select %p2223, %s17, 1
        %s2225 = smul.addr %s2224, 16
        %s2226 = smul.addr %s2225, 4
        %s2227 = scalar_lea.vmem %s2, %s2226
      $region48: #{cnn_block_forward.2} parent=43 // pred_fallthru
        _
      // Predicated region
      $region49: #{cnn_block_forward.2} parent=43 // pred_check
        %p2228 = pneg %p113
      $region50: #{cnn_block_forward.2} parent=43 // pred_check_branch
        %2230 = sbr.rel (%p2228) target = $region52
      $region51: #{cnn_block_forward.2} parent=43 // pred_region
        %p2231 = scmp.lt.s32.totalorder %s17, 1
        %s2232 = scalar_select %p2231, %s17, 1
        %s2233 = smul.addr %s2232, 8
        %s2234 = scalar_lea.vmem %s3, %s2233
      $region52: #{cnn_block_forward.2} parent=43 // pred_fallthru
        _
      // Predicated region
      $region53: #{cnn_block_forward.2} parent=43 // pred_check
        %p2235 = pneg %p139
      $region54: #{cnn_block_forward.2} parent=43 // pred_check_branch
        %2237 = sbr.rel (%p2235) target = $region56
      $region55: #{cnn_block_forward.2} parent=43 // pred_region
        %p2238 = scmp.lt.s32.totalorder %s17, 1
        %s2239 = scalar_select %p2238, %s17, 1
        %s2240 = smul.addr %s2239, 8
        %s2241 = scalar_lea.vmem %s4, %s2240
      $region56: #{cnn_block_forward.2} parent=43 // pred_fallthru
        _
    $region44: #{cnn_block_forward.2} parent=5 // pred_fallthru
      _
  $region6: #{cnn_block_forward.2} parent=0 // loop_footer
    %s15 = sadd.s32 1, %s11
  $region7: #{cnn_block_forward.2} parent=0 // loop_footer_branch
    %10 = sbr.rel target = $region3
  $region8: #{cnn_block_forward.2} parent=0 // loop_exit
    _

</llo_original>
